<compile_context>
chip_gen: v5e
topology: v5e:2x2
jax: 0.10.0
libtpu: 0.0.40
codegen_flags: <defaults>
</compile_context>

<pallas_src>
import functools

import jax
import jax.numpy as jnp
from jax.experimental import pallas as pl
from jax.experimental.pallas import tpu as pltpu


# ----------------------------- Pallas kernel --------------------------------
def _td_kernel(x_ref, w_ref, b_ref, o_ref, *, K, Hc, Wc):
    # x_ref: (tbd, K, Hc, K*Wc, K*Ci)  bf16  contiguous activation slab
    # w_ref: (K*K, K*Ci, Co)           bf16  full BN-folded weight (resident)
    # b_ref: (1, Co)                   f32   BN-folded conv bias
    # o_ref: (tbd*Hc*Wc, Co)           f32   output row tile (= accumulator)
    rows, Co = o_ref.shape
    KC = x_ref.shape[-1]

    # Initialise with the bias so the epilogue is ReLU only.
    o_ref[...] = jnp.broadcast_to(b_ref[...], (rows, Co))

    for kd in range(K):
        for kh in range(K):
            # (tbd, Hc, Wc, KC) slice of the resident slab for this offset;
            # the collapse to (rows, KC) is VMEM-side relayout only (audited,
            # see header) and each activation element is read once per step.
            lhs = x_ref[:, kd, :, pl.ds(kh * Wc, Wc), :].reshape(rows, KC)
            o_ref[...] += jnp.dot(lhs, w_ref[kd * K + kh],
                                  preferred_element_type=jnp.float32)

    o_ref[...] = jnp.maximum(o_ref[...], 0.0)


def td_conv_pallas(x_r, w_r, bias, *, K, Hc, Wc, tbd, vmem_limit_bytes):
    """x_r: (B*Dc, K, Hc, K*Wc, K*Ci); w_r: (K*K, K*Ci, Co); bias: (1, Co)."""
    BD = x_r.shape[0]
    n_off, KC, Co = w_r.shape
    assert n_off == K * K
    assert BD % tbd == 0
    rows = tbd * Hc * Wc
    assert rows % 8 == 0, "row tile must be a multiple of 8 sublanes"
    n_tiles = BD // tbd

    flops = 2 * BD * Hc * Wc * (K * K) * KC * Co
    bytes_accessed = (x_r.size * x_r.dtype.itemsize
                      + w_r.size * w_r.dtype.itemsize
                      + bias.size * 4
                      + BD * Hc * Wc * Co * 4)

    kernel = functools.partial(_td_kernel, K=K, Hc=Hc, Wc=Wc)
    return pl.pallas_call(
        kernel,
        out_shape=jax.ShapeDtypeStruct((BD * Hc * Wc, Co), jnp.float32),
        grid_spec=pltpu.PrefetchScalarGridSpec(
            num_scalar_prefetch=0,
            grid=(n_tiles,),                       # single flattened parallel axis
            in_specs=[
                # one fully contiguous activation slab per grid step
                pl.BlockSpec((tbd, K, Hc, K * Wc, KC),
                             lambda i: (i, 0, 0, 0, 0)),
                # full folded weight: constant index -> DMA'd once, VMEM-resident
                pl.BlockSpec((n_off, KC, Co), lambda i: (0, 0, 0)),
                # folded bias
                pl.BlockSpec((1, Co), lambda i: (0, 0)),
            ],
            out_specs=pl.BlockSpec((rows, Co), lambda i: (i, 0)),
        ),
        compiler_params=pltpu.CompilerParams(
            dimension_semantics=("parallel",),
            vmem_limit_bytes=vmem_limit_bytes,
        ),
        cost_estimate=pl.CostEstimate(flops=flops, transcendentals=0,
                                      bytes_accessed=bytes_accessed),
    )(x_r, w_r, bias)


# ------------------------------ host glue -----------------------------------
def _vmem_config():
    """(vmem_limit_bytes, per-tile VMEM budget) for the local TPU generation."""
    kind = ""
    try:
        kind = jax.devices()[0].device_kind.lower()
    except Exception:
        pass
    if ("v5" in kind) or ("v6" in kind):          # 128 MiB physical VMEM
        return 100 * 1024 * 1024, 88 * 1024 * 1024
    # v7x (64 MiB physical VMEM) or unknown generation: stay conservative.
    return 48 * 1024 * 1024, 40 * 1024 * 1024


def _pick_tile(n_slices, slice_rows, act_bytes, out_bytes, w_bytes, budget):
    """Largest divisor of n_slices (coarse-D*batch slices per tile) that keeps
    the double-buffered VMEM estimate within `budget`, preferring >= 2 grid
    steps so both v7x TensorCores are fed."""
    candidates = []
    for t in range(1, n_slices + 1):
        if n_slices % t:
            continue
        if (t * slice_rows) % 8:
            continue
        need = 2 * t * (act_bytes + out_bytes) + 2 * w_bytes + (2 << 20)
        candidates.append((t, need))
    if not candidates:
        raise ValueError("coarse grid too small: tbd*Hc*Wc cannot be made a "
                         "multiple of 8 sublanes; pad the voxel grid")
    in_budget = [t for t, need in candidates if need <= budget]
    if in_budget:
        t = max(in_budget)
        if n_slices // t < 2:                      # keep both TCs busy if possible
            smaller = [s for s in in_budget if n_slices // s >= 2]
            if smaller:
                t = max(smaller)
        return t
    # Nothing fits the budget: smallest legal tile; caller bumps the limit.
    return min(t for t, _ in candidates)


def td_layer(x, params, compute_dtype=jnp.bfloat16, eps=1e-5):
    """Dense TDLayer forward: ReLU(BN(Conv3d(k=4, s=4, bias=True)(x)))."""
    B, D, H, W, Ci = x.shape
    w = params["w"]                         # (K, K, K, Ci, Co) = [kd, kh, kw, ci, co]
    K = w.shape[0]
    Co = w.shape[-1]
    assert D % K == 0 and H % K == 0 and W % K == 0
    Dc, Hc, Wc = D // K, H // K, W // K

    # Fold inference-mode BatchNorm: scale into the weights, rest into the bias.
    s = params["gamma"] * jax.lax.rsqrt(params["var"] + eps)
    bias = ((params["b"] - params["mean"]) * s + params["beta"])
    bias = bias.reshape(1, Co).astype(jnp.float32)
    w_r = (w * s).astype(compute_dtype).reshape(K * K, K * Ci, Co)

    # Metadata-only reshape (no transpose): (b,dc,kd,hc,kh,wc,kw,ci) ->
    # (b*dc, kd, hc, kh*wc, kw*ci).  Each row tile is a single contiguous slab.
    x_r = x.astype(compute_dtype).reshape(B * Dc, K, Hc, K * Wc, K * Ci)

    vmem_limit, budget = _vmem_config()
    slice_rows = Hc * Wc                                   # output rows per (b,dc)
    act_bytes = (K * K) * slice_rows * (K * Ci) * x_r.dtype.itemsize
    out_bytes = slice_rows * Co * 4
    w_bytes = w_r.size * w_r.dtype.itemsize
    tbd = _pick_tile(B * Dc, slice_rows, act_bytes, out_bytes, w_bytes, budget)
    need = 2 * tbd * (act_bytes + out_bytes) + 2 * w_bytes + (2 << 20)
    if need > vmem_limit:
        vmem_limit = min(need + (4 << 20), 112 * 1024 * 1024)

    out2d = td_conv_pallas(x_r, w_r, bias, K=K, Hc=Hc, Wc=Wc, tbd=tbd,
                           vmem_limit_bytes=vmem_limit)    # (B*Dc*Hc*Wc, Co)
    return out2d.reshape(B, Dc, Hc, Wc, Co)


def td_layer_reference(x, params, compute_dtype=jnp.float32, eps=1e-5):
    """Pure-JAX reference: strided conv + bias -> (unfolded) BatchNorm -> ReLU."""
    B, D, H, W, Ci = x.shape
    w = params["w"]
    K = w.shape[0]
    Dc, Hc, Wc = D // K, H // K, W // K
    patches = x.astype(compute_dtype).reshape(B, Dc, K, Hc, K, Wc, K, Ci)
    y = jnp.einsum("bdihjwkc,ijkco->bdhwo", patches, w.astype(compute_dtype),
                   preferred_element_type=jnp.float32)
    y = y + params["b"]
    y = (y - params["mean"]) * (params["gamma"] * jax.lax.rsqrt(params["var"] + eps))
    y = y + params["beta"]
    return jnp.maximum(y, 0.0)


# --------------------------------- main --------------------------------------
if __name__ == "__main__":
    key = jax.random.PRNGKey(0)

    # TDLayer(input_dim=64, out_dim=128): Minkowski conv k=4, s=4, bias + BN + ReLU
    Ci, Co, K = 64, 128, 4
    B, D, H, W = 2, 16, 16, 16            # fine voxel grid; coarse grid is 4x4x4

    k_x, k_w, k_b = jax.random.split(key, 3)
    x = jax.random.normal(k_x, (B, D, H, W, Ci), jnp.float32)

    ar = jnp.arange(Co, dtype=jnp.float32)
    params = {
        "w": jax.random.normal(k_w, (K, K, K, Ci, Co), jnp.float32) * 0.03,
        "b": jax.random.normal(k_b, (Co,), jnp.float32) * 0.1,
        "gamma": 1.0 + 0.2 * jnp.cos(ar),
        "beta": 0.05 * jnp.sin(ar),
        "mean": 0.02 * jnp.cos(2.0 * ar),
        "var": 1.0 + 0.1 * jnp.sin(3.0 * ar) ** 2,
    }

    fwd = jax.jit(functools.partial(td_layer, compute_dtype=jnp.bfloat16))
    out = jax.block_until_ready(fwd(x, params))

    # Reference uses the same bf16-rounded inputs/weights but *unfolded* BN, so
    # it independently checks the BN-fold; remaining diff is bf16 rounding of
    # the fold + accumulation order.
    ref = td_layer_reference(x, params, compute_dtype=jnp.bfloat16)
    assert out.shape == (B, D // K, H // K, W // K, Co)
    assert jnp.allclose(out, ref, atol=5e-2, rtol=5e-2), (
        "mismatch vs reference, max abs err = "
        f"{float(jnp.max(jnp.abs(out - ref)))}")

    print("KERNEL_OK")
</pallas_src>

<mosaic_0001>
module attributes {stable_mosaic.version = 11 : i64} {
  func.func @_td_kernel(%arg0: i32, %arg1: memref<4x4x4x16x256xbf16, #tpu.memory_space<vmem>>, %arg2: memref<16x256x128xbf16, #tpu.memory_space<vmem>>, %arg3: memref<1x128xf32, #tpu.memory_space<vmem>>, %arg4: memref<64x128xf32, #tpu.memory_space<vmem>>) attributes {dimension_semantics = [#tpu.dimension_semantics<parallel>], iteration_bounds = array<i64: 2>, scalar_prefetch = 0 : i64, scratch_operands = 0 : i64, tpu.core_type = #tpu.core_type<tc>, window_params = [{transform_indices = @transform_0, window_bounds = array<i64: 4, 4, 4, 16, 256>}, {pipeline_mode = #tpu.pipeline_mode<synchronous>, transform_indices = @transform_1, window_bounds = array<i64: 16, 256, 128>}, {pipeline_mode = #tpu.pipeline_mode<synchronous>, transform_indices = @transform_2, window_bounds = array<i64: 1, 128>}, {transform_indices = @transform_3, window_bounds = array<i64: 64, 128>}]} {
    %c0 = arith.constant 0 : index
    %c0_0 = arith.constant 0 : index
    %0 = vector.load %arg3[%c0, %c0_0] : memref<1x128xf32, #tpu.memory_space<vmem>>, vector<1x128xf32>
    %1 = vector.shape_cast %0 : vector<1x128xf32> to vector<1x128xf32>
    %2 = vector.broadcast %1 : vector<1x128xf32> to vector<64x128xf32>
    %c0_1 = arith.constant 0 : index
    %c0_2 = arith.constant 0 : index
    %3 = vector.load %arg4[%c0_1, %c0_2] : memref<64x128xf32, #tpu.memory_space<vmem>>, vector<64x128xf32>
    tpu.vector_store %arg4[%c0_1, %c0_2], %2 {strides = array<i32>} : memref<64x128xf32, #tpu.memory_space<vmem>>, vector<64x128xf32>,
    %c0_3 = arith.constant 0 : index
    %c0_4 = arith.constant 0 : index
    %c0_5 = arith.constant 0 : index
    %c0_6 = arith.constant 0 : index
    %c0_7 = arith.constant 0 : index
    %4 = vector.load %arg1[%c0_3, %c0_4, %c0_5, %c0_6, %c0_7] : memref<4x4x4x16x256xbf16, #tpu.memory_space<vmem>>, vector<4x1x4x4x256xbf16>
    %5 = vector.shape_cast %4 : vector<4x1x4x4x256xbf16> to vector<4x4x4x256xbf16>
    %6 = vector.shape_cast %5 : vector<4x4x4x256xbf16> to vector<64x256xbf16>
    %c0_8 = arith.constant 0 : index
    %c0_9 = arith.constant 0 : index
    %7 = vector.load %arg4[%c0_8, %c0_9] : memref<64x128xf32, #tpu.memory_space<vmem>>, vector<64x128xf32>
    %c0_10 = arith.constant 0 : index
    %c0_11 = arith.constant 0 : index
    %c0_12 = arith.constant 0 : index
    %8 = vector.load %arg2[%c0_10, %c0_11, %c0_12] : memref<16x256x128xbf16, #tpu.memory_space<vmem>>, vector<1x256x128xbf16>
    %9 = vector.shape_cast %8 : vector<1x256x128xbf16> to vector<256x128xbf16>
    %cst = arith.constant dense<0.000000e+00> : vector<64x128xf32>
    %10 = tpu.matmul %6, %9, %cst {dimension_numbers = #tpu.dot_dimension_numbers<[1], [0], [0], [1], [0, 0, 1, 1], [], []>} : vector<64x256xbf16>, vector<256x128xbf16>, vector<64x128xf32> -> vector<64x128xf32>
    %11 = arith.addf %7, %10 : vector<64x128xf32>
    %c0_13 = arith.constant 0 : index
    %c0_14 = arith.constant 0 : index
    %12 = vector.load %arg4[%c0_13, %c0_14] : memref<64x128xf32, #tpu.memory_space<vmem>>, vector<64x128xf32>
    tpu.vector_store %arg4[%c0_13, %c0_14], %11 {strides = array<i32>} : memref<64x128xf32, #tpu.memory_space<vmem>>, vector<64x128xf32>,
    %c0_15 = arith.constant 0 : index
    %c0_16 = arith.constant 0 : index
    %c0_17 = arith.constant 0 : index
    %c4 = arith.constant 4 : index
    %c0_18 = arith.constant 0 : index
    %13 = vector.load %arg1[%c0_15, %c0_16, %c0_17, %c4, %c0_18] : memref<4x4x4x16x256xbf16, #tpu.memory_space<vmem>>, vector<4x1x4x4x256xbf16>
    %14 = vector.shape_cast %13 : vector<4x1x4x4x256xbf16> to vector<4x4x4x256xbf16>
    %15 = vector.shape_cast %14 : vector<4x4x4x256xbf16> to vector<64x256xbf16>
    %c0_19 = arith.constant 0 : index
    %c0_20 = arith.constant 0 : index
    %16 = vector.load %arg4[%c0_19, %c0_20] : memref<64x128xf32, #tpu.memory_space<vmem>>, vector<64x128xf32>
    %c1 = arith.constant 1 : index
    %c0_21 = arith.constant 0 : index
    %c0_22 = arith.constant 0 : index
    %17 = vector.load %arg2[%c1, %c0_21, %c0_22] : memref<16x256x128xbf16, #tpu.memory_space<vmem>>, vector<1x256x128xbf16>
    %18 = vector.shape_cast %17 : vector<1x256x128xbf16> to vector<256x128xbf16>
    %cst_23 = arith.constant dense<0.000000e+00> : vector<64x128xf32>
    %19 = tpu.matmul %15, %18, %cst_23 {dimension_numbers = #tpu.dot_dimension_numbers<[1], [0], [0], [1], [0, 0, 1, 1], [], []>} : vector<64x256xbf16>, vector<256x128xbf16>, vector<64x128xf32> -> vector<64x128xf32>
    %20 = arith.addf %16, %19 : vector<64x128xf32>
    %c0_24 = arith.constant 0 : index
    %c0_25 = arith.constant 0 : index
    %21 = vector.load %arg4[%c0_24, %c0_25] : memref<64x128xf32, #tpu.memory_space<vmem>>, vector<64x128xf32>
    tpu.vector_store %arg4[%c0_24, %c0_25], %20 {strides = array<i32>} : memref<64x128xf32, #tpu.memory_space<vmem>>, vector<64x128xf32>,
    %c0_26 = arith.constant 0 : index
    %c0_27 = arith.constant 0 : index
    %c0_28 = arith.constant 0 : index
    %c8 = arith.constant 8 : index
    %c0_29 = arith.constant 0 : index
    %22 = vector.load %arg1[%c0_26, %c0_27, %c0_28, %c8, %c0_29] : memref<4x4x4x16x256xbf16, #tpu.memory_space<vmem>>, vector<4x1x4x4x256xbf16>
    %23 = vector.shape_cast %22 : vector<4x1x4x4x256xbf16> to vector<4x4x4x256xbf16>
    %24 = vector.shape_cast %23 : vector<4x4x4x256xbf16> to vector<64x256xbf16>
    %c0_30 = arith.constant 0 : index
    %c0_31 = arith.constant 0 : index
    %25 = vector.load %arg4[%c0_30, %c0_31] : memref<64x128xf32, #tpu.memory_space<vmem>>, vector<64x128xf32>
    %c2 = arith.constant 2 : index
    %c0_32 = arith.constant 0 : index
    %c0_33 = arith.constant 0 : index
    %26 = vector.load %arg2[%c2, %c0_32, %c0_33] : memref<16x256x128xbf16, #tpu.memory_space<vmem>>, vector<1x256x128xbf16>
    %27 = vector.shape_cast %26 : vector<1x256x128xbf16> to vector<256x128xbf16>
    %cst_34 = arith.constant dense<0.000000e+00> : vector<64x128xf32>
    %28 = tpu.matmul %24, %27, %cst_34 {dimension_numbers = #tpu.dot_dimension_numbers<[1], [0], [0], [1], [0, 0, 1, 1], [], []>} : vector<64x256xbf16>, vector<256x128xbf16>, vector<64x128xf32> -> vector<64x128xf32>
    %29 = arith.addf %25, %28 : vector<64x128xf32>
    %c0_35 = arith.constant 0 : index
    %c0_36 = arith.constant 0 : index
    %30 = vector.load %arg4[%c0_35, %c0_36] : memref<64x128xf32, #tpu.memory_space<vmem>>, vector<64x128xf32>
    tpu.vector_store %arg4[%c0_35, %c0_36], %29 {strides = array<i32>} : memref<64x128xf32, #tpu.memory_space<vmem>>, vector<64x128xf32>,
    %c0_37 = arith.constant 0 : index
    %c0_38 = arith.constant 0 : index
    %c0_39 = arith.constant 0 : index
    %c12 = arith.constant 12 : index
    %c0_40 = arith.constant 0 : index
    %31 = vector.load %arg1[%c0_37, %c0_38, %c0_39, %c12, %c0_40] : memref<4x4x4x16x256xbf16, #tpu.memory_space<vmem>>, vector<4x1x4x4x256xbf16>
    %32 = vector.shape_cast %31 : vector<4x1x4x4x256xbf16> to vector<4x4x4x256xbf16>
    %33 = vector.shape_cast %32 : vector<4x4x4x256xbf16> to vector<64x256xbf16>
    %c0_41 = arith.constant 0 : index
    %c0_42 = arith.constant 0 : index
    %34 = vector.load %arg4[%c0_41, %c0_42] : memref<64x128xf32, #tpu.memory_space<vmem>>, vector<64x128xf32>
    %c3 = arith.constant 3 : index
    %c0_43 = arith.constant 0 : index
    %c0_44 = arith.constant 0 : index
    %35 = vector.load %arg2[%c3, %c0_43, %c0_44] : memref<16x256x128xbf16, #tpu.memory_space<vmem>>, vector<1x256x128xbf16>
    %36 = vector.shape_cast %35 : vector<1x256x128xbf16> to vector<256x128xbf16>
    %cst_45 = arith.constant dense<0.000000e+00> : vector<64x128xf32>
    %37 = tpu.matmul %33, %36, %cst_45 {dimension_numbers = #tpu.dot_dimension_numbers<[1], [0], [0], [1], [0, 0, 1, 1], [], []>} : vector<64x256xbf16>, vector<256x128xbf16>, vector<64x128xf32> -> vector<64x128xf32>
    %38 = arith.addf %34, %37 : vector<64x128xf32>
    %c0_46 = arith.constant 0 : index
    %c0_47 = arith.constant 0 : index
    %39 = vector.load %arg4[%c0_46, %c0_47] : memref<64x128xf32, #tpu.memory_space<vmem>>, vector<64x128xf32>
    tpu.vector_store %arg4[%c0_46, %c0_47], %38 {strides = array<i32>} : memref<64x128xf32, #tpu.memory_space<vmem>>, vector<64x128xf32>,
    %c0_48 = arith.constant 0 : index
    %c1_49 = arith.constant 1 : index
    %c0_50 = arith.constant 0 : index
    %c0_51 = arith.constant 0 : index
    %c0_52 = arith.constant 0 : index
    %40 = vector.load %arg1[%c0_48, %c1_49, %c0_50, %c0_51, %c0_52] : memref<4x4x4x16x256xbf16, #tpu.memory_space<vmem>>, vector<4x1x4x4x256xbf16>
    %41 = vector.shape_cast %40 : vector<4x1x4x4x256xbf16> to vector<4x4x4x256xbf16>
    %42 = vector.shape_cast %41 : vector<4x4x4x256xbf16> to vector<64x256xbf16>
    %c0_53 = arith.constant 0 : index
    %c0_54 = arith.constant 0 : index
    %43 = vector.load %arg4[%c0_53, %c0_54] : memref<64x128xf32, #tpu.memory_space<vmem>>, vector<64x128xf32>
    %c4_55 = arith.constant 4 : index
    %c0_56 = arith.constant 0 : index
    %c0_57 = arith.constant 0 : index
    %44 = vector.load %arg2[%c4_55, %c0_56, %c0_57] : memref<16x256x128xbf16, #tpu.memory_space<vmem>>, vector<1x256x128xbf16>
    %45 = vector.shape_cast %44 : vector<1x256x128xbf16> to vector<256x128xbf16>
    %cst_58 = arith.constant dense<0.000000e+00> : vector<64x128xf32>
    %46 = tpu.matmul %42, %45, %cst_58 {dimension_numbers = #tpu.dot_dimension_numbers<[1], [0], [0], [1], [0, 0, 1, 1], [], []>} : vector<64x256xbf16>, vector<256x128xbf16>, vector<64x128xf32> -> vector<64x128xf32>
    %47 = arith.addf %43, %46 : vector<64x128xf32>
    %c0_59 = arith.constant 0 : index
    %c0_60 = arith.constant 0 : index
    %48 = vector.load %arg4[%c0_59, %c0_60] : memref<64x128xf32, #tpu.memory_space<vmem>>, vector<64x128xf32>
    tpu.vector_store %arg4[%c0_59, %c0_60], %47 {strides = array<i32>} : memref<64x128xf32, #tpu.memory_space<vmem>>, vector<64x128xf32>,
    %c0_61 = arith.constant 0 : index
    %c1_62 = arith.constant 1 : index
    %c0_63 = arith.constant 0 : index
    %c4_64 = arith.constant 4 : index
    %c0_65 = arith.constant 0 : index
    %49 = vector.load %arg1[%c0_61, %c1_62, %c0_63, %c4_64, %c0_65] : memref<4x4x4x16x256xbf16, #tpu.memory_space<vmem>>, vector<4x1x4x4x256xbf16>
    %50 = vector.shape_cast %49 : vector<4x1x4x4x256xbf16> to vector<4x4x4x256xbf16>
    %51 = vector.shape_cast %50 : vector<4x4x4x256xbf16> to vector<64x256xbf16>
    %c0_66 = arith.constant 0 : index
    %c0_67 = arith.constant 0 : index
    %52 = vector.load %arg4[%c0_66, %c0_67] : memref<64x128xf32, #tpu.memory_space<vmem>>, vector<64x128xf32>
    %c5 = arith.constant 5 : index
    %c0_68 = arith.constant 0 : index
    %c0_69 = arith.constant 0 : index
    %53 = vector.load %arg2[%c5, %c0_68, %c0_69] : memref<16x256x128xbf16, #tpu.memory_space<vmem>>, vector<1x256x128xbf16>
    %54 = vector.shape_cast %53 : vector<1x256x128xbf16> to vector<256x128xbf16>
    %cst_70 = arith.constant dense<0.000000e+00> : vector<64x128xf32>
    %55 = tpu.matmul %51, %54, %cst_70 {dimension_numbers = #tpu.dot_dimension_numbers<[1], [0], [0], [1], [0, 0, 1, 1], [], []>} : vector<64x256xbf16>, vector<256x128xbf16>, vector<64x128xf32> -> vector<64x128xf32>
    %56 = arith.addf %52, %55 : vector<64x128xf32>
    %c0_71 = arith.constant 0 : index
    %c0_72 = arith.constant 0 : index
    %57 = vector.load %arg4[%c0_71, %c0_72] : memref<64x128xf32, #tpu.memory_space<vmem>>, vector<64x128xf32>
    tpu.vector_store %arg4[%c0_71, %c0_72], %56 {strides = array<i32>} : memref<64x128xf32, #tpu.memory_space<vmem>>, vector<64x128xf32>,
    %c0_73 = arith.constant 0 : index
    %c1_74 = arith.constant 1 : index
    %c0_75 = arith.constant 0 : index
    %c8_76 = arith.constant 8 : index
    %c0_77 = arith.constant 0 : index
    %58 = vector.load %arg1[%c0_73, %c1_74, %c0_75, %c8_76, %c0_77] : memref<4x4x4x16x256xbf16, #tpu.memory_space<vmem>>, vector<4x1x4x4x256xbf16>
    %59 = vector.shape_cast %58 : vector<4x1x4x4x256xbf16> to vector<4x4x4x256xbf16>
    %60 = vector.shape_cast %59 : vector<4x4x4x256xbf16> to vector<64x256xbf16>
    %c0_78 = arith.constant 0 : index
    %c0_79 = arith.constant 0 : index
    %61 = vector.load %arg4[%c0_78, %c0_79] : memref<64x128xf32, #tpu.memory_space<vmem>>, vector<64x128xf32>
    %c6 = arith.constant 6 : index
    %c0_80 = arith.constant 0 : index
    %c0_81 = arith.constant 0 : index
    %62 = vector.load %arg2[%c6, %c0_80, %c0_81] : memref<16x256x128xbf16, #tpu.memory_space<vmem>>, vector<1x256x128xbf16>
    %63 = vector.shape_cast %62 : vector<1x256x128xbf16> to vector<256x128xbf16>
    %cst_82 = arith.constant dense<0.000000e+00> : vector<64x128xf32>
    %64 = tpu.matmul %60, %63, %cst_82 {dimension_numbers = #tpu.dot_dimension_numbers<[1], [0], [0], [1], [0, 0, 1, 1], [], []>} : vector<64x256xbf16>, vector<256x128xbf16>, vector<64x128xf32> -> vector<64x128xf32>
    %65 = arith.addf %61, %64 : vector<64x128xf32>
    %c0_83 = arith.constant 0 : index
    %c0_84 = arith.constant 0 : index
    %66 = vector.load %arg4[%c0_83, %c0_84] : memref<64x128xf32, #tpu.memory_space<vmem>>, vector<64x128xf32>
    tpu.vector_store %arg4[%c0_83, %c0_84], %65 {strides = array<i32>} : memref<64x128xf32, #tpu.memory_space<vmem>>, vector<64x128xf32>,
    %c0_85 = arith.constant 0 : index
    %c1_86 = arith.constant 1 : index
    %c0_87 = arith.constant 0 : index
    %c12_88 = arith.constant 12 : index
    %c0_89 = arith.constant 0 : index
    %67 = vector.load %arg1[%c0_85, %c1_86, %c0_87, %c12_88, %c0_89] : memref<4x4x4x16x256xbf16, #tpu.memory_space<vmem>>, vector<4x1x4x4x256xbf16>
    %68 = vector.shape_cast %67 : vector<4x1x4x4x256xbf16> to vector<4x4x4x256xbf16>
    %69 = vector.shape_cast %68 : vector<4x4x4x256xbf16> to vector<64x256xbf16>
    %c0_90 = arith.constant 0 : index
    %c0_91 = arith.constant 0 : index
    %70 = vector.load %arg4[%c0_90, %c0_91] : memref<64x128xf32, #tpu.memory_space<vmem>>, vector<64x128xf32>
    %c7 = arith.constant 7 : index
    %c0_92 = arith.constant 0 : index
    %c0_93 = arith.constant 0 : index
    %71 = vector.load %arg2[%c7, %c0_92, %c0_93] : memref<16x256x128xbf16, #tpu.memory_space<vmem>>, vector<1x256x128xbf16>
    %72 = vector.shape_cast %71 : vector<1x256x128xbf16> to vector<256x128xbf16>
    %cst_94 = arith.constant dense<0.000000e+00> : vector<64x128xf32>
    %73 = tpu.matmul %69, %72, %cst_94 {dimension_numbers = #tpu.dot_dimension_numbers<[1], [0], [0], [1], [0, 0, 1, 1], [], []>} : vector<64x256xbf16>, vector<256x128xbf16>, vector<64x128xf32> -> vector<64x128xf32>
    %74 = arith.addf %70, %73 : vector<64x128xf32>
    %c0_95 = arith.constant 0 : index
    %c0_96 = arith.constant 0 : index
    %75 = vector.load %arg4[%c0_95, %c0_96] : memref<64x128xf32, #tpu.memory_space<vmem>>, vector<64x128xf32>
    tpu.vector_store %arg4[%c0_95, %c0_96], %74 {strides = array<i32>} : memref<64x128xf32, #tpu.memory_space<vmem>>, vector<64x128xf32>,
    %c0_97 = arith.constant 0 : index
    %c2_98 = arith.constant 2 : index
    %c0_99 = arith.constant 0 : index
    %c0_100 = arith.constant 0 : index
    %c0_101 = arith.constant 0 : index
    %76 = vector.load %arg1[%c0_97, %c2_98, %c0_99, %c0_100, %c0_101] : memref<4x4x4x16x256xbf16, #tpu.memory_space<vmem>>, vector<4x1x4x4x256xbf16>
    %77 = vector.shape_cast %76 : vector<4x1x4x4x256xbf16> to vector<4x4x4x256xbf16>
    %78 = vector.shape_cast %77 : vector<4x4x4x256xbf16> to vector<64x256xbf16>
    %c0_102 = arith.constant 0 : index
    %c0_103 = arith.constant 0 : index
    %79 = vector.load %arg4[%c0_102, %c0_103] : memref<64x128xf32, #tpu.memory_space<vmem>>, vector<64x128xf32>
    %c8_104 = arith.constant 8 : index
    %c0_105 = arith.constant 0 : index
    %c0_106 = arith.constant 0 : index
    %80 = vector.load %arg2[%c8_104, %c0_105, %c0_106] : memref<16x256x128xbf16, #tpu.memory_space<vmem>>, vector<1x256x128xbf16>
    %81 = vector.shape_cast %80 : vector<1x256x128xbf16> to vector<256x128xbf16>
    %cst_107 = arith.constant dense<0.000000e+00> : vector<64x128xf32>
    %82 = tpu.matmul %78, %81, %cst_107 {dimension_numbers = #tpu.dot_dimension_numbers<[1], [0], [0], [1], [0, 0, 1, 1], [], []>} : vector<64x256xbf16>, vector<256x128xbf16>, vector<64x128xf32> -> vector<64x128xf32>
    %83 = arith.addf %79, %82 : vector<64x128xf32>
    %c0_108 = arith.constant 0 : index
    %c0_109 = arith.constant 0 : index
    %84 = vector.load %arg4[%c0_108, %c0_109] : memref<64x128xf32, #tpu.memory_space<vmem>>, vector<64x128xf32>
    tpu.vector_store %arg4[%c0_108, %c0_109], %83 {strides = array<i32>} : memref<64x128xf32, #tpu.memory_space<vmem>>, vector<64x128xf32>,
    %c0_110 = arith.constant 0 : index
    %c2_111 = arith.constant 2 : index
    %c0_112 = arith.constant 0 : index
    %c4_113 = arith.constant 4 : index
    %c0_114 = arith.constant 0 : index
    %85 = vector.load %arg1[%c0_110, %c2_111, %c0_112, %c4_113, %c0_114] : memref<4x4x4x16x256xbf16, #tpu.memory_space<vmem>>, vector<4x1x4x4x256xbf16>
    %86 = vector.shape_cast %85 : vector<4x1x4x4x256xbf16> to vector<4x4x4x256xbf16>
    %87 = vector.shape_cast %86 : vector<4x4x4x256xbf16> to vector<64x256xbf16>
    %c0_115 = arith.constant 0 : index
    %c0_116 = arith.constant 0 : index
    %88 = vector.load %arg4[%c0_115, %c0_116] : memref<64x128xf32, #tpu.memory_space<vmem>>, vector<64x128xf32>
    %c9 = arith.constant 9 : index
    %c0_117 = arith.constant 0 : index
    %c0_118 = arith.constant 0 : index
    %89 = vector.load %arg2[%c9, %c0_117, %c0_118] : memref<16x256x128xbf16, #tpu.memory_space<vmem>>, vector<1x256x128xbf16>
    %90 = vector.shape_cast %89 : vector<1x256x128xbf16> to vector<256x128xbf16>
    %cst_119 = arith.constant dense<0.000000e+00> : vector<64x128xf32>
    %91 = tpu.matmul %87, %90, %cst_119 {dimension_numbers = #tpu.dot_dimension_numbers<[1], [0], [0], [1], [0, 0, 1, 1], [], []>} : vector<64x256xbf16>, vector<256x128xbf16>, vector<64x128xf32> -> vector<64x128xf32>
    %92 = arith.addf %88, %91 : vector<64x128xf32>
    %c0_120 = arith.constant 0 : index
    %c0_121 = arith.constant 0 : index
    %93 = vector.load %arg4[%c0_120, %c0_121] : memref<64x128xf32, #tpu.memory_space<vmem>>, vector<64x128xf32>
    tpu.vector_store %arg4[%c0_120, %c0_121], %92 {strides = array<i32>} : memref<64x128xf32, #tpu.memory_space<vmem>>, vector<64x128xf32>,
    %c0_122 = arith.constant 0 : index
    %c2_123 = arith.constant 2 : index
    %c0_124 = arith.constant 0 : index
    %c8_125 = arith.constant 8 : index
    %c0_126 = arith.constant 0 : index
    %94 = vector.load %arg1[%c0_122, %c2_123, %c0_124, %c8_125, %c0_126] : memref<4x4x4x16x256xbf16, #tpu.memory_space<vmem>>, vector<4x1x4x4x256xbf16>
    %95 = vector.shape_cast %94 : vector<4x1x4x4x256xbf16> to vector<4x4x4x256xbf16>
    %96 = vector.shape_cast %95 : vector<4x4x4x256xbf16> to vector<64x256xbf16>
    %c0_127 = arith.constant 0 : index
    %c0_128 = arith.constant 0 : index
    %97 = vector.load %arg4[%c0_127, %c0_128] : memref<64x128xf32, #tpu.memory_space<vmem>>, vector<64x128xf32>
    %c10 = arith.constant 10 : index
    %c0_129 = arith.constant 0 : index
    %c0_130 = arith.constant 0 : index
    %98 = vector.load %arg2[%c10, %c0_129, %c0_130] : memref<16x256x128xbf16, #tpu.memory_space<vmem>>, vector<1x256x128xbf16>
    %99 = vector.shape_cast %98 : vector<1x256x128xbf16> to vector<256x128xbf16>
    %cst_131 = arith.constant dense<0.000000e+00> : vector<64x128xf32>
    %100 = tpu.matmul %96, %99, %cst_131 {dimension_numbers = #tpu.dot_dimension_numbers<[1], [0], [0], [1], [0, 0, 1, 1], [], []>} : vector<64x256xbf16>, vector<256x128xbf16>, vector<64x128xf32> -> vector<64x128xf32>
    %101 = arith.addf %97, %100 : vector<64x128xf32>
    %c0_132 = arith.constant 0 : index
    %c0_133 = arith.constant 0 : index
    %102 = vector.load %arg4[%c0_132, %c0_133] : memref<64x128xf32, #tpu.memory_space<vmem>>, vector<64x128xf32>
    tpu.vector_store %arg4[%c0_132, %c0_133], %101 {strides = array<i32>} : memref<64x128xf32, #tpu.memory_space<vmem>>, vector<64x128xf32>,
    %c0_134 = arith.constant 0 : index
    %c2_135 = arith.constant 2 : index
    %c0_136 = arith.constant 0 : index
    %c12_137 = arith.constant 12 : index
    %c0_138 = arith.constant 0 : index
    %103 = vector.load %arg1[%c0_134, %c2_135, %c0_136, %c12_137, %c0_138] : memref<4x4x4x16x256xbf16, #tpu.memory_space<vmem>>, vector<4x1x4x4x256xbf16>
    %104 = vector.shape_cast %103 : vector<4x1x4x4x256xbf16> to vector<4x4x4x256xbf16>
    %105 = vector.shape_cast %104 : vector<4x4x4x256xbf16> to vector<64x256xbf16>
    %c0_139 = arith.constant 0 : index
    %c0_140 = arith.constant 0 : index
    %106 = vector.load %arg4[%c0_139, %c0_140] : memref<64x128xf32, #tpu.memory_space<vmem>>, vector<64x128xf32>
    %c11 = arith.constant 11 : index
    %c0_141 = arith.constant 0 : index
    %c0_142 = arith.constant 0 : index
    %107 = vector.load %arg2[%c11, %c0_141, %c0_142] : memref<16x256x128xbf16, #tpu.memory_space<vmem>>, vector<1x256x128xbf16>
    %108 = vector.shape_cast %107 : vector<1x256x128xbf16> to vector<256x128xbf16>
    %cst_143 = arith.constant dense<0.000000e+00> : vector<64x128xf32>
    %109 = tpu.matmul %105, %108, %cst_143 {dimension_numbers = #tpu.dot_dimension_numbers<[1], [0], [0], [1], [0, 0, 1, 1], [], []>} : vector<64x256xbf16>, vector<256x128xbf16>, vector<64x128xf32> -> vector<64x128xf32>
    %110 = arith.addf %106, %109 : vector<64x128xf32>
    %c0_144 = arith.constant 0 : index
    %c0_145 = arith.constant 0 : index
    %111 = vector.load %arg4[%c0_144, %c0_145] : memref<64x128xf32, #tpu.memory_space<vmem>>, vector<64x128xf32>
    tpu.vector_store %arg4[%c0_144, %c0_145], %110 {strides = array<i32>} : memref<64x128xf32, #tpu.memory_space<vmem>>, vector<64x128xf32>,
    %c0_146 = arith.constant 0 : index
    %c3_147 = arith.constant 3 : index
    %c0_148 = arith.constant 0 : index
    %c0_149 = arith.constant 0 : index
    %c0_150 = arith.constant 0 : index
    %112 = vector.load %arg1[%c0_146, %c3_147, %c0_148, %c0_149, %c0_150] : memref<4x4x4x16x256xbf16, #tpu.memory_space<vmem>>, vector<4x1x4x4x256xbf16>
    %113 = vector.shape_cast %112 : vector<4x1x4x4x256xbf16> to vector<4x4x4x256xbf16>
    %114 = vector.shape_cast %113 : vector<4x4x4x256xbf16> to vector<64x256xbf16>
    %c0_151 = arith.constant 0 : index
    %c0_152 = arith.constant 0 : index
    %115 = vector.load %arg4[%c0_151, %c0_152] : memref<64x128xf32, #tpu.memory_space<vmem>>, vector<64x128xf32>
    %c12_153 = arith.constant 12 : index
    %c0_154 = arith.constant 0 : index
    %c0_155 = arith.constant 0 : index
    %116 = vector.load %arg2[%c12_153, %c0_154, %c0_155] : memref<16x256x128xbf16, #tpu.memory_space<vmem>>, vector<1x256x128xbf16>
    %117 = vector.shape_cast %116 : vector<1x256x128xbf16> to vector<256x128xbf16>
    %cst_156 = arith.constant dense<0.000000e+00> : vector<64x128xf32>
    %118 = tpu.matmul %114, %117, %cst_156 {dimension_numbers = #tpu.dot_dimension_numbers<[1], [0], [0], [1], [0, 0, 1, 1], [], []>} : vector<64x256xbf16>, vector<256x128xbf16>, vector<64x128xf32> -> vector<64x128xf32>
    %119 = arith.addf %115, %118 : vector<64x128xf32>
    %c0_157 = arith.constant 0 : index
    %c0_158 = arith.constant 0 : index
    %120 = vector.load %arg4[%c0_157, %c0_158] : memref<64x128xf32, #tpu.memory_space<vmem>>, vector<64x128xf32>
    tpu.vector_store %arg4[%c0_157, %c0_158], %119 {strides = array<i32>} : memref<64x128xf32, #tpu.memory_space<vmem>>, vector<64x128xf32>,
    %c0_159 = arith.constant 0 : index
    %c3_160 = arith.constant 3 : index
    %c0_161 = arith.constant 0 : index
    %c4_162 = arith.constant 4 : index
    %c0_163 = arith.constant 0 : index
    %121 = vector.load %arg1[%c0_159, %c3_160, %c0_161, %c4_162, %c0_163] : memref<4x4x4x16x256xbf16, #tpu.memory_space<vmem>>, vector<4x1x4x4x256xbf16>
    %122 = vector.shape_cast %121 : vector<4x1x4x4x256xbf16> to vector<4x4x4x256xbf16>
    %123 = vector.shape_cast %122 : vector<4x4x4x256xbf16> to vector<64x256xbf16>
    %c0_164 = arith.constant 0 : index
    %c0_165 = arith.constant 0 : index
    %124 = vector.load %arg4[%c0_164, %c0_165] : memref<64x128xf32, #tpu.memory_space<vmem>>, vector<64x128xf32>
    %c13 = arith.constant 13 : index
    %c0_166 = arith.constant 0 : index
    %c0_167 = arith.constant 0 : index
    %125 = vector.load %arg2[%c13, %c0_166, %c0_167] : memref<16x256x128xbf16, #tpu.memory_space<vmem>>, vector<1x256x128xbf16>
    %126 = vector.shape_cast %125 : vector<1x256x128xbf16> to vector<256x128xbf16>
    %cst_168 = arith.constant dense<0.000000e+00> : vector<64x128xf32>
    %127 = tpu.matmul %123, %126, %cst_168 {dimension_numbers = #tpu.dot_dimension_numbers<[1], [0], [0], [1], [0, 0, 1, 1], [], []>} : vector<64x256xbf16>, vector<256x128xbf16>, vector<64x128xf32> -> vector<64x128xf32>
    %128 = arith.addf %124, %127 : vector<64x128xf32>
    %c0_169 = arith.constant 0 : index
    %c0_170 = arith.constant 0 : index
    %129 = vector.load %arg4[%c0_169, %c0_170] : memref<64x128xf32, #tpu.memory_space<vmem>>, vector<64x128xf32>
    tpu.vector_store %arg4[%c0_169, %c0_170], %128 {strides = array<i32>} : memref<64x128xf32, #tpu.memory_space<vmem>>, vector<64x128xf32>,
    %c0_171 = arith.constant 0 : index
    %c3_172 = arith.constant 3 : index
    %c0_173 = arith.constant 0 : index
    %c8_174 = arith.constant 8 : index
    %c0_175 = arith.constant 0 : index
    %130 = vector.load %arg1[%c0_171, %c3_172, %c0_173, %c8_174, %c0_175] : memref<4x4x4x16x256xbf16, #tpu.memory_space<vmem>>, vector<4x1x4x4x256xbf16>
    %131 = vector.shape_cast %130 : vector<4x1x4x4x256xbf16> to vector<4x4x4x256xbf16>
    %132 = vector.shape_cast %131 : vector<4x4x4x256xbf16> to vector<64x256xbf16>
    %c0_176 = arith.constant 0 : index
    %c0_177 = arith.constant 0 : index
    %133 = vector.load %arg4[%c0_176, %c0_177] : memref<64x128xf32, #tpu.memory_space<vmem>>, vector<64x128xf32>
    %c14 = arith.constant 14 : index
    %c0_178 = arith.constant 0 : index
    %c0_179 = arith.constant 0 : index
    %134 = vector.load %arg2[%c14, %c0_178, %c0_179] : memref<16x256x128xbf16, #tpu.memory_space<vmem>>, vector<1x256x128xbf16>
    %135 = vector.shape_cast %134 : vector<1x256x128xbf16> to vector<256x128xbf16>
    %cst_180 = arith.constant dense<0.000000e+00> : vector<64x128xf32>
    %136 = tpu.matmul %132, %135, %cst_180 {dimension_numbers = #tpu.dot_dimension_numbers<[1], [0], [0], [1], [0, 0, 1, 1], [], []>} : vector<64x256xbf16>, vector<256x128xbf16>, vector<64x128xf32> -> vector<64x128xf32>
    %137 = arith.addf %133, %136 : vector<64x128xf32>
    %c0_181 = arith.constant 0 : index
    %c0_182 = arith.constant 0 : index
    %138 = vector.load %arg4[%c0_181, %c0_182] : memref<64x128xf32, #tpu.memory_space<vmem>>, vector<64x128xf32>
    tpu.vector_store %arg4[%c0_181, %c0_182], %137 {strides = array<i32>} : memref<64x128xf32, #tpu.memory_space<vmem>>, vector<64x128xf32>,
    %c0_183 = arith.constant 0 : index
    %c3_184 = arith.constant 3 : index
    %c0_185 = arith.constant 0 : index
    %c12_186 = arith.constant 12 : index
    %c0_187 = arith.constant 0 : index
    %139 = vector.load %arg1[%c0_183, %c3_184, %c0_185, %c12_186, %c0_187] : memref<4x4x4x16x256xbf16, #tpu.memory_space<vmem>>, vector<4x1x4x4x256xbf16>
    %140 = vector.shape_cast %139 : vector<4x1x4x4x256xbf16> to vector<4x4x4x256xbf16>
    %141 = vector.shape_cast %140 : vector<4x4x4x256xbf16> to vector<64x256xbf16>
    %c0_188 = arith.constant 0 : index
    %c0_189 = arith.constant 0 : index
    %142 = vector.load %arg4[%c0_188, %c0_189] : memref<64x128xf32, #tpu.memory_space<vmem>>, vector<64x128xf32>
    %c15 = arith.constant 15 : index
    %c0_190 = arith.constant 0 : index
    %c0_191 = arith.constant 0 : index
    %143 = vector.load %arg2[%c15, %c0_190, %c0_191] : memref<16x256x128xbf16, #tpu.memory_space<vmem>>, vector<1x256x128xbf16>
    %144 = vector.shape_cast %143 : vector<1x256x128xbf16> to vector<256x128xbf16>
    %cst_192 = arith.constant dense<0.000000e+00> : vector<64x128xf32>
    %145 = tpu.matmul %141, %144, %cst_192 {dimension_numbers = #tpu.dot_dimension_numbers<[1], [0], [0], [1], [0, 0, 1, 1], [], []>} : vector<64x256xbf16>, vector<256x128xbf16>, vector<64x128xf32> -> vector<64x128xf32>
    %146 = arith.addf %142, %145 : vector<64x128xf32>
    %c0_193 = arith.constant 0 : index
    %c0_194 = arith.constant 0 : index
    %147 = vector.load %arg4[%c0_193, %c0_194] : memref<64x128xf32, #tpu.memory_space<vmem>>, vector<64x128xf32>
    tpu.vector_store %arg4[%c0_193, %c0_194], %146 {strides = array<i32>} : memref<64x128xf32, #tpu.memory_space<vmem>>, vector<64x128xf32>,
    %c0_195 = arith.constant 0 : index
    %c0_196 = arith.constant 0 : index
    %148 = vector.load %arg4[%c0_195, %c0_196] : memref<64x128xf32, #tpu.memory_space<vmem>>, vector<64x128xf32>
    %cst_197 = arith.constant 0.000000e+00 : f32
    %149 = vector.broadcast %cst_197 : f32 to vector<64x128xf32>
    %150 = arith.maximumf %148, %149 : vector<64x128xf32>
    %c0_198 = arith.constant 0 : index
    %c0_199 = arith.constant 0 : index
    %151 = vector.load %arg4[%c0_198, %c0_199] : memref<64x128xf32, #tpu.memory_space<vmem>>, vector<64x128xf32>
    tpu.vector_store %arg4[%c0_198, %c0_199], %150 {strides = array<i32>} : memref<64x128xf32, #tpu.memory_space<vmem>>, vector<64x128xf32>,
    return
  }
  func.func @transform_0(%arg0: i32) -> (i32, i32, i32, i32, i32) {
    %c0_i32 = arith.constant 0 : i32
    %c0_i32_0 = arith.constant 0 : i32
    %c0_i32_1 = arith.constant 0 : i32
    %c0_i32_2 = arith.constant 0 : i32
    %c0_i32_3 = arith.constant 0 : i32
    return %arg0, %c0_i32, %c0_i32_0, %c0_i32_1, %c0_i32_2 : i32, i32, i32, i32, i32
  }
  func.func @transform_1(%arg0: i32) -> (i32, i32, i32) {
    %c0_i32 = arith.constant 0 : i32
    %c0_i32_0 = arith.constant 0 : i32
    %c0_i32_1 = arith.constant 0 : i32
    %c0_i32_2 = arith.constant 0 : i32
    return %c0_i32, %c0_i32_0, %c0_i32_1 : i32, i32, i32
  }
  func.func @transform_2(%arg0: i32) -> (i32, i32) {
    %c0_i32 = arith.constant 0 : i32
    %c0_i32_0 = arith.constant 0 : i32
    %c0_i32_1 = arith.constant 0 : i32
    return %c0_i32, %c0_i32_0 : i32, i32
  }
  func.func @transform_3(%arg0: i32) -> (i32, i32) {
    %c0_i32 = arith.constant 0 : i32
    %c0_i32_0 = arith.constant 0 : i32
    return %arg0, %c0_i32 : i32, i32
  }
}

</mosaic_0001>

<llo_original>
// kernel: td_layer.1
$region0: #{td_layer.1}
  #allocation0 [shape = 'u32[]', space=smem, size = 0x4, offset = 0x4, fixed_abs, tag = 'smem constant byte address 0x4 - core index']
  #allocation1 [shape = 'u32[72,128]{1,0:T(1,128)}', space=vmem, size = 0x9000, scoped, tag = 'internal scratch']
  %s0 = inlined_call_operand.vmem [shape: bf16[8,4,4,16,256], index: 0, kind: input, shape index: {}]
  %s1 = inlined_call_operand.vmem [shape: bf16[16,256,128], index: 1, kind: input, shape index: {}]
  %s2 = inlined_call_operand.vmem [shape: f32[1,128], index: 2, kind: input, shape index: {}]
  %s3 = inlined_call_operand.hbm [shape: f32[128,128], index: 3, kind: output, shape index: {}]
  %s4 = sld [smem:[#allocation0]]
  $region45: #{td_layer.1} parent=0
    _
  %s6 = ssub.s32 1, %s4
  %s7 = scalar_select 0, %s6, %s4
  $region1: #{td_layer.1} parent=0
    #allocation2 [shape = 'u8[65536]{0}', space=vmem, size = 0x10000, scoped, tag = 'output window, operand 0']
    #allocation3 [shape = 's32[2]{0}', space=sflag, size = 0x8, scoped, tag = 'scoped memory for td_layer.1']
    %8 = vsyncpa [#allocation3], 0
    %s9 = scalar_lea.sflag [#allocation3], 1
    %10 = vsyncpa %s9, 0
    loop: start=0, step=1, limit=4
    $region2: #{td_layer.1} parent=1 // loop_pre_header
      _
    $region3: #{td_layer.1} parent=1 // loop_header
      %s12 = sphi 0, %s16
      %p13 = scmp.ge.s32.totalorder %s12, 4
      %s22 = sphi 0, %s24
      %s25 = sphi 0, %s22
      %s26 = sphi 0, %s25
      %s42 = sphi 0, %s26
      %s46 = sphi 0, %s46
      %s48 = sphi 0, %s46
      %s49 = sphi 0, %s48
      %s63 = sphi 0, %s49
      %s67 = sphi 0, %s67
      %s69 = sphi 0, %s67
      %s70 = sphi 0, %s69
      %s84 = sphi 0, %s70
      %s90 = sphi 0, %s92
      %s93 = sphi 0, %s90
      %s94 = sphi 0, %s93
      %s110 = sphi 0, %s94
    $region4: #{td_layer.1} parent=1 // loop_header_branch
      %15 = sbr.rel (%p13) target = $region8
    $region5: #{td_layer.1} parent=1 // loop_body
      %s17 = ssub.s32 %s12, 1
      %s18 = ssub.s32 %s12, 2
      %s19 = sadd.s32 %s12, 1
      %s20 = ssub.s32 %s12, %s19
      %p21 = scmp.eq.s32.totalorder %s20, 0
      %s23 = sadd.s32 %s22, 1
      %s24 = scalar_select %p21, %s22, %s23
      %p27 = pneg %p21
      %p28 = scmp.eq.s32.totalorder %s12, 1
      %p29 = por %p27, %p28
      %p30 = scmp.ne.s32.totalorder %s22, %s25
      %p31 = scmp.eq.s32.totalorder %s12, 0
      %p32 = por %p30, %p31
      %p33 = scmp.ne.s32.totalorder %s22, %s25
      %p34 = scmp.eq.s32.totalorder %s17, 1
      %p35 = por %p33, %p34
      %p36 = scmp.ne.s32.totalorder %s25, %s26
      %p37 = scmp.eq.s32.totalorder %s17, 0
      %p38 = por %p36, %p37
      %p39 = scmp.ne.s32.totalorder %s25, %s26
      %p40 = scmp.eq.s32.totalorder %s18, 1
      %p41 = por %p39, %p40
      %p43 = scmp.ne.s32.totalorder %s26, %s42
      %p44 = scmp.eq.s32.totalorder %s18, 0
      %p45 = por %p43, %p44
      %s47 = sadd.s32 %s46, 1
      %p50 = scmp.eq.s32.totalorder %s12, 1
      %p51 = scmp.ne.s32.totalorder %s46, %s48
      %p52 = scmp.eq.s32.totalorder %s12, 0
      %p53 = por %p51, %p52
      %p54 = scmp.ne.s32.totalorder %s46, %s48
      %p55 = scmp.eq.s32.totalorder %s17, 1
      %p56 = por %p54, %p55
      %p57 = scmp.ne.s32.totalorder %s48, %s49
      %p58 = scmp.eq.s32.totalorder %s17, 0
      %p59 = por %p57, %p58
      %p60 = scmp.ne.s32.totalorder %s48, %s49
      %p61 = scmp.eq.s32.totalorder %s18, 1
      %p62 = por %p60, %p61
      %p64 = scmp.ne.s32.totalorder %s49, %s63
      %p65 = scmp.eq.s32.totalorder %s18, 0
      %p66 = por %p64, %p65
      %s68 = sadd.s32 %s67, 1
      %p71 = scmp.eq.s32.totalorder %s12, 1
      %p72 = scmp.ne.s32.totalorder %s67, %s69
      %p73 = scmp.eq.s32.totalorder %s12, 0
      %p74 = por %p72, %p73
      %p75 = scmp.ne.s32.totalorder %s67, %s69
      %p76 = scmp.eq.s32.totalorder %s17, 1
      %p77 = por %p75, %p76
      %p78 = scmp.ne.s32.totalorder %s69, %s70
      %p79 = scmp.eq.s32.totalorder %s17, 0
      %p80 = por %p78, %p79
      %p81 = scmp.ne.s32.totalorder %s69, %s70
      %p82 = scmp.eq.s32.totalorder %s18, 1
      %p83 = por %p81, %p82
      %p85 = scmp.ne.s32.totalorder %s70, %s84
      %p86 = scmp.eq.s32.totalorder %s18, 0
      %p87 = por %p85, %p86
      %s88 = ssub.s32 %s12, %s19
      %p89 = scmp.eq.s32.totalorder %s88, 0
      %s91 = sadd.s32 %s90, 1
      %s92 = scalar_select %p89, %s90, %s91
      %p95 = pneg %p89
      %p96 = scmp.eq.s32.totalorder %s12, 1
      %p97 = por %p95, %p96
      %p98 = scmp.ne.s32.totalorder %s90, %s93
      %p99 = scmp.eq.s32.totalorder %s12, 0
      %p100 = por %p98, %p99
      %p101 = scmp.ne.s32.totalorder %s90, %s93
      %p102 = scmp.eq.s32.totalorder %s17, 1
      %p103 = por %p101, %p102
      %p104 = scmp.ne.s32.totalorder %s93, %s94
      %p105 = scmp.eq.s32.totalorder %s17, 0
      %p106 = por %p104, %p105
      %p107 = scmp.ne.s32.totalorder %s93, %s94
      %p108 = scmp.eq.s32.totalorder %s18, 1
      %p109 = por %p107, %p108
      %p111 = scmp.ne.s32.totalorder %s94, %s110
      %p112 = scmp.eq.s32.totalorder %s18, 0
      %p113 = por %p111, %p112
      %p114 = scmp.le.s32.totalorder 1, %s12
      %p115 = scmp.lt.s32.totalorder %s12, 3
      %p116 = pnand %p114, %p115
      %p117 = pneg %p116
      // Predicated region
      $region9: #{td_layer.1} parent=5 // pred_check
        _
      $region10: #{td_layer.1} parent=5 // pred_check_branch
        %119 = sbr.rel (%p116) target = $region12
      $region11: #{td_layer.1} parent=5 // pred_region
        %s120 = ssub.s32 %s12, 1
        // Predicated region
        $region13: #{td_layer.1} parent=11 // pred_check
          %p121 = pneg %p59
        $region14: #{td_layer.1} parent=11 // pred_check_branch
          %123 = sbr.rel (%p121) target = $region16
        $region15: #{td_layer.1} parent=11 // pred_region
          _
        $region16: #{td_layer.1} parent=11 // pred_fallthru
          _
        // Predicated region
        $region17: #{td_layer.1} parent=11 // pred_check
          %p124 = pneg %p80
        $region18: #{td_layer.1} parent=11 // pred_check_branch
          %126 = sbr.rel (%p124) target = $region20
        $region19: #{td_layer.1} parent=11 // pred_region
          _
        $region20: #{td_layer.1} parent=11 // pred_fallthru
          _
      $region12: #{td_layer.1} parent=5 // pred_fallthru
        _
      %p127 = scmp.lt.s32.totalorder %s12, 2
      // Predicated region
      $region21: #{td_layer.1} parent=5 // pred_check
        %p128 = pneg %p127
      $region22: #{td_layer.1} parent=5 // pred_check_branch
        %130 = sbr.rel (%p128) target = $region24
      $region23: #{td_layer.1} parent=5 // pred_region
        // Predicated region
        $region25: #{td_layer.1} parent=23 // pred_check
          %p131 = pneg %p32
        $region26: #{td_layer.1} parent=23 // pred_check_branch
          %133 = sbr.rel (%p131) target = $region28
        $region27: #{td_layer.1} parent=23 // pred_region
          %s134 = smul.u32 4, %s12
          %p135 = scmp.lt.s32.totalorder %s134, 7
          %s136 = scalar_select %p135, %s134, 7
          %s137 = smul.addr %s136, 64
          %s138 = smul.addr %s137, 4
          %s139 = scalar_lea.vmem %s0, %s138
          %s140 = smul.u32 4, %s12
        $region28: #{td_layer.1} parent=23 // pred_fallthru
          _
      $region24: #{td_layer.1} parent=5 // pred_fallthru
        _
      %p141 = scmp.le.s32.totalorder 1, %s12
      %p142 = scmp.lt.s32.totalorder %s12, 3
      %p143 = pnand %p141, %p142
      %p144 = pneg %p143
      // Predicated region
      $region29: #{td_layer.1} parent=5 // pred_check
        _
      $region30: #{td_layer.1} parent=5 // pred_check_branch
        %146 = sbr.rel (%p143) target = $region32
      $region31: #{td_layer.1} parent=5 // pred_region
        %s147 = ssub.s32 %s12, 1
        %s148 = smul.u32 4, %s17
        %p149 = scmp.lt.s32.totalorder %s148, 7
        %s150 = scalar_select %p149, %s148, 7
        %s151 = smul.addr %s150, 64
        %s152 = smul.addr %s151, 4
        %s153 = scalar_lea.vmem %s0, %s152
        %p154 = pneg %p38
        %p155 = pneg %p35
        %p156 = pneg %p59
        %p157 = pneg %p56
        %p158 = pneg %p80
        %p159 = pneg %p77
        %p160 = pneg %p106
        %p161 = pneg %p103
        %s162 = sand.u32 %s93, 1
        %s163 = scalar_lea.sflag [#allocation3], %s162
        %s164 = sand.u32 %s93, 1
        %s165 = smul.addr %s164, 64
        %s166 = scalar_lea.vmem [#allocation2], %s165
        %s167 = smul.u32 4, %s17
        %p168 = scmp.lt.s32.totalorder %s167, 7
        %s169 = scalar_select %p168, %s167, 7
        %s170 = smul.addr %s169, 64
        %s171 = smul.addr %s170, 4
        %s172 = scalar_lea.vmem %s0, %s171
        %s173 = smul.u32 4, %s17
        %s174 = smul.u32 8, %s17
        %v175 = vld [vmem:[%s2] sm:$0x1]
        %v177 = vperm.slane %v175, 0
        %179 = vst [vmem:[%s166] sm:$0xff] %v177
        %180 = vst [vmem:[%s166 + $0x8] sm:$0xff] %v177
        %181 = vst [vmem:[%s166 + $0x10] sm:$0xff] %v177
        %182 = vst [vmem:[%s166 + $0x18] sm:$0xff] %v177
        %183 = vst [vmem:[%s166 + $0x20] sm:$0xff] %v177
        %184 = vst [vmem:[%s166 + $0x28] sm:$0xff] %v177
        %185 = vst [vmem:[%s166 + $0x30] sm:$0xff] %v177
        %186 = vst [vmem:[%s166 + $0x38] sm:$0xff] %v177
        %v187 = vld [vmem:[%s172] sm:$0x33]
        %v188 = vld [vmem:[%s172 + $0x10] sm:$0x33]
        %v189 = vld [vmem:[%s172 + $0x20] sm:$0x33]
        %v190 = vld [vmem:[%s172 + $0x30] sm:$0x33]
        %v191 = vld [vmem:[%s172 + $0x100] sm:$0x33]
        %v192 = vld [vmem:[%s172 + $0x110] sm:$0x33]
        %v193 = vld [vmem:[%s172 + $0x120] sm:$0x33]
        %v194 = vld [vmem:[%s172 + $0x130] sm:$0x33]
        %v195 = vld [vmem:[%s172 + $0x200] sm:$0x33]
        %v196 = vld [vmem:[%s172 + $0x210] sm:$0x33]
        %v197 = vld [vmem:[%s172 + $0x220] sm:$0x33]
        %v198 = vld [vmem:[%s172 + $0x230] sm:$0x33]
        %v199 = vld [vmem:[%s172 + $0x300] sm:$0x33]
        %v200 = vld [vmem:[%s172 + $0x310] sm:$0x33]
        %v201 = vld [vmem:[%s172 + $0x320] sm:$0x33]
        %v202 = vld [vmem:[%s172 + $0x330] sm:$0x33]
        %v219 = vrot.slane %v187, 2
        %v220 = vrot.slane %v188, 2
        %v221 = vrot.slane %v189, 2
        %v222 = vrot.slane %v190, 2
        %v223 = vrot.slane %v191, 2
        %v224 = vrot.slane %v192, 2
        %v225 = vrot.slane %v193, 2
        %v226 = vrot.slane %v194, 2
        %v227 = vrot.slane %v195, 2
        %v228 = vrot.slane %v196, 2
        %v229 = vrot.slane %v197, 2
        %v230 = vrot.slane %v198, 2
        %v231 = vrot.slane %v199, 2
        %v232 = vrot.slane %v200, 2
        %v233 = vrot.slane %v201, 2
        %v234 = vrot.slane %v202, 2
        %vm235 = vcmask 1041408
        %v238 = vsel %vm235, %v187, %v219
        %v241 = vsel %vm235, %v188, %v220
        %v244 = vsel %vm235, %v189, %v221
        %v247 = vsel %vm235, %v190, %v222
        %v250 = vsel %vm235, %v191, %v223
        %v253 = vsel %vm235, %v192, %v224
        %v256 = vsel %vm235, %v193, %v225
        %v259 = vsel %vm235, %v194, %v226
        %v262 = vsel %vm235, %v195, %v227
        %v265 = vsel %vm235, %v196, %v228
        %v268 = vsel %vm235, %v197, %v229
        %v271 = vsel %vm235, %v198, %v230
        %v274 = vsel %vm235, %v199, %v231
        %v277 = vsel %vm235, %v200, %v232
        %v280 = vsel %vm235, %v201, %v233
        %v283 = vsel %vm235, %v202, %v234
        %v284 = vld [vmem:[%s166] sm:$0xff]
        %v285 = vld [vmem:[%s166 + $0x8] sm:$0xff]
        %v286 = vld [vmem:[%s166 + $0x10] sm:$0xff]
        %v287 = vld [vmem:[%s166 + $0x18] sm:$0xff]
        %v288 = vld [vmem:[%s166 + $0x20] sm:$0xff]
        %v289 = vld [vmem:[%s166 + $0x28] sm:$0xff]
        %v290 = vld [vmem:[%s166 + $0x30] sm:$0xff]
        %v291 = vld [vmem:[%s166 + $0x38] sm:$0xff]
        %v292 = vld [vmem:[%s1] sm:$0xf]
        %v293 = vld [vmem:[%s1 + $0x4] sm:$0xf]
        %v294 = vld [vmem:[%s1 + $0x8] sm:$0xf]
        %v295 = vld [vmem:[%s1 + $0xc] sm:$0xf]
        %v296 = vld [vmem:[%s1 + $0x10] sm:$0xf]
        %v297 = vld [vmem:[%s1 + $0x14] sm:$0xf]
        %v298 = vld [vmem:[%s1 + $0x18] sm:$0xf]
        %v299 = vld [vmem:[%s1 + $0x1c] sm:$0xf]
        %v300 = vld [vmem:[%s1 + $0x20] sm:$0xf]
        %v301 = vld [vmem:[%s1 + $0x24] sm:$0xf]
        %v302 = vld [vmem:[%s1 + $0x28] sm:$0xf]
        %v303 = vld [vmem:[%s1 + $0x2c] sm:$0xf]
        %v304 = vld [vmem:[%s1 + $0x30] sm:$0xf]
        %v305 = vld [vmem:[%s1 + $0x34] sm:$0xf]
        %v306 = vld [vmem:[%s1 + $0x38] sm:$0xf]
        %v307 = vld [vmem:[%s1 + $0x3c] sm:$0xf]
        %v308 = vld [vmem:[%s1 + $0x40] sm:$0xf]
        %v309 = vld [vmem:[%s1 + $0x44] sm:$0xf]
        %v310 = vld [vmem:[%s1 + $0x48] sm:$0xf]
        %v311 = vld [vmem:[%s1 + $0x4c] sm:$0xf]
        %v312 = vld [vmem:[%s1 + $0x50] sm:$0xf]
        %v313 = vld [vmem:[%s1 + $0x54] sm:$0xf]
        %v314 = vld [vmem:[%s1 + $0x58] sm:$0xf]
        %v315 = vld [vmem:[%s1 + $0x5c] sm:$0xf]
        %v316 = vld [vmem:[%s1 + $0x60] sm:$0xf]
        %v317 = vld [vmem:[%s1 + $0x64] sm:$0xf]
        %v318 = vld [vmem:[%s1 + $0x68] sm:$0xf]
        %v319 = vld [vmem:[%s1 + $0x6c] sm:$0xf]
        %v320 = vld [vmem:[%s1 + $0x70] sm:$0xf]
        %v321 = vld [vmem:[%s1 + $0x74] sm:$0xf]
        %v322 = vld [vmem:[%s1 + $0x78] sm:$0xf]
        %v323 = vld [vmem:[%s1 + $0x7c] sm:$0xf]
        %324 = vst [vmem:[#allocation1] ss:$4 sm:$0xff] %v238
        %s325 = scalar_lea.vmem [#allocation1], 1
        %326 = vst [vmem:[%s325] ss:$4 sm:$0xff] %v241
        %s327 = scalar_lea.vmem [#allocation1], 2
        %328 = vst [vmem:[%s327] ss:$4 sm:$0xff] %v244
        %s329 = scalar_lea.vmem [#allocation1], 3
        %330 = vst [vmem:[%s329] ss:$4 sm:$0xff] %v247
        %s331 = scalar_lea.vmem [#allocation1], 32
        %332 = vst [vmem:[%s331] ss:$4 sm:$0xff] %v250
        %s333 = scalar_lea.vmem [#allocation1], 33
        %334 = vst [vmem:[%s333] ss:$4 sm:$0xff] %v253
        %s335 = scalar_lea.vmem [#allocation1], 34
        %336 = vst [vmem:[%s335] ss:$4 sm:$0xff] %v256
        %s337 = scalar_lea.vmem [#allocation1], 35
        %338 = vst [vmem:[%s337] ss:$4 sm:$0xff] %v259
        %v339 = vld.sshfl [vmem:[#allocation1] sm:$0xff pattern:$0x73625140]
        %v340 = vld.sshfl [vmem:[#allocation1 + $0x8] sm:$0xff pattern:$0x73625140]
        %v341 = vld.sshfl [vmem:[#allocation1 + $0x20] sm:$0xff pattern:$0x73625140]
        %v342 = vld.sshfl [vmem:[#allocation1 + $0x28] sm:$0xff pattern:$0x73625140]
        %343 = vst [vmem:[#allocation1] ss:$4 sm:$0xff] %v262
        %344 = vst [vmem:[%s325] ss:$4 sm:$0xff] %v265
        %345 = vst [vmem:[%s327] ss:$4 sm:$0xff] %v268
        %346 = vst [vmem:[%s329] ss:$4 sm:$0xff] %v271
        %347 = vst [vmem:[%s331] ss:$4 sm:$0xff] %v274
        %348 = vst [vmem:[%s333] ss:$4 sm:$0xff] %v277
        %349 = vst [vmem:[%s335] ss:$4 sm:$0xff] %v280
        %350 = vst [vmem:[%s337] ss:$4 sm:$0xff] %v283
        %v351 = vld.sshfl [vmem:[#allocation1] sm:$0xff pattern:$0x73625140]
        %v352 = vld.sshfl [vmem:[#allocation1 + $0x8] sm:$0xff pattern:$0x73625140]
        %v353 = vld.sshfl [vmem:[#allocation1 + $0x20] sm:$0xff pattern:$0x73625140]
        %v354 = vld.sshfl [vmem:[#allocation1 + $0x28] sm:$0xff pattern:$0x73625140]
        %v395 = vunpack.c.l.b16 %v292
        %v396 = vunpack.c.l.b16 %v293
        %v397 = vunpack.c.l.b16 %v294
        %v398 = vunpack.c.l.b16 %v295
        %v399 = vunpack.c.l.b16 %v296
        %v400 = vunpack.c.l.b16 %v297
        %v401 = vunpack.c.l.b16 %v298
        %v402 = vunpack.c.l.b16 %v299
        %v403 = vunpack.c.l.b16 %v300
        %v404 = vunpack.c.l.b16 %v301
        %v405 = vunpack.c.l.b16 %v302
        %v406 = vunpack.c.l.b16 %v303
        %v407 = vunpack.c.l.b16 %v304
        %v408 = vunpack.c.l.b16 %v305
        %v409 = vunpack.c.l.b16 %v306
        %v410 = vunpack.c.l.b16 %v307
        %v411 = vunpack.c.l.b16 %v308
        %v412 = vunpack.c.l.b16 %v309
        %v413 = vunpack.c.l.b16 %v310
        %v414 = vunpack.c.l.b16 %v311
        %v415 = vunpack.c.l.b16 %v312
        %v416 = vunpack.c.l.b16 %v313
        %v417 = vunpack.c.l.b16 %v314
        %v418 = vunpack.c.l.b16 %v315
        %v419 = vunpack.c.l.b16 %v316
        %v420 = vunpack.c.l.b16 %v317
        %v421 = vunpack.c.l.b16 %v318
        %v422 = vunpack.c.l.b16 %v319
        %v423 = vunpack.c.l.b16 %v320
        %v424 = vunpack.c.l.b16 %v321
        %v425 = vunpack.c.l.b16 %v322
        %v426 = vunpack.c.l.b16 %v323
        %v427 = vpack.c.b16 %v396, %v395
        %v428 = vpack.c.b16 %v398, %v397
        %v429 = vpack.c.b16 %v400, %v399
        %v430 = vpack.c.b16 %v402, %v401
        %v431 = vpack.c.b16 %v404, %v403
        %v432 = vpack.c.b16 %v406, %v405
        %v433 = vpack.c.b16 %v408, %v407
        %v434 = vpack.c.b16 %v410, %v409
        %v435 = vpack.c.b16 %v412, %v411
        %v436 = vpack.c.b16 %v414, %v413
        %v437 = vpack.c.b16 %v416, %v415
        %v438 = vpack.c.b16 %v418, %v417
        %v439 = vpack.c.b16 %v420, %v419
        %v440 = vpack.c.b16 %v422, %v421
        %v441 = vpack.c.b16 %v424, %v423
        %v442 = vpack.c.b16 %v426, %v425
        %459 = vmatpush.bf16.msra.mxu0 %v434
        %460 = vmatpush.bf16.msra.mxu0 %v433
        %461 = vmatpush.bf16.msra.mxu0 %v432
        %462 = vmatpush.bf16.msra.mxu0 %v431
        %463 = vmatpush.bf16.msra.mxu0 %v430
        %464 = vmatpush.bf16.msra.mxu0 %v429
        %465 = vmatpush.bf16.msra.mxu0 %v428
        %466 = vmatpush.bf16.msra.mxu0 %v427
        %467 = vmatmul.bf16.gmra.mxu0 %v339
        %v468 = vpop.f32.mrf.mxu0
        %v469 = vadd.f32 0.0, %v468
        %v470 = vpop.f32.mrf.mxu0
        %v471 = vadd.f32 0.0, %v470
        %472 = vmatmul.bf16.gmra.mxu0 %v341
        %v473 = vpop.f32.mrf.mxu0
        %v474 = vadd.f32 0.0, %v473
        %v475 = vpop.f32.mrf.mxu0
        %v476 = vadd.f32 0.0, %v475
        %477 = vmatmul.bf16.gmra.mxu0 %v351
        %v478 = vpop.f32.mrf.mxu0
        %v479 = vadd.f32 0.0, %v478
        %v480 = vpop.f32.mrf.mxu0
        %v481 = vadd.f32 0.0, %v480
        %482 = vmatmul.bf16.gmra.mxu0 %v353
        %v483 = vpop.f32.mrf.mxu0
        %v484 = vadd.f32 0.0, %v483
        %v485 = vpop.f32.mrf.mxu0
        %v486 = vadd.f32 0.0, %v485
        %487 = vdwg.mxu0
        %488 = vmatpush.bf16.msra.mxu0 %v442
        %489 = vmatpush.bf16.msra.mxu0 %v441
        %490 = vmatpush.bf16.msra.mxu0 %v440
        %491 = vmatpush.bf16.msra.mxu0 %v439
        %492 = vmatpush.bf16.msra.mxu0 %v438
        %493 = vmatpush.bf16.msra.mxu0 %v437
        %494 = vmatpush.bf16.msra.mxu0 %v436
        %495 = vmatpush.bf16.msra.mxu0 %v435
        %496 = vmatmul.bf16.gmra.mxu0 %v340
        %v497 = vpop.f32.mrf.mxu0
        %v498 = vadd.f32 %v469, %v497
        %v499 = vpop.f32.mrf.mxu0
        %v500 = vadd.f32 %v471, %v499
        %501 = vmatmul.bf16.gmra.mxu0 %v342
        %v502 = vpop.f32.mrf.mxu0
        %v503 = vadd.f32 %v474, %v502
        %v504 = vpop.f32.mrf.mxu0
        %v505 = vadd.f32 %v476, %v504
        %506 = vmatmul.bf16.gmra.mxu0 %v352
        %v507 = vpop.f32.mrf.mxu0
        %v508 = vadd.f32 %v479, %v507
        %v509 = vpop.f32.mrf.mxu0
        %v510 = vadd.f32 %v481, %v509
        %511 = vmatmul.bf16.gmra.mxu0 %v354
        %v512 = vpop.f32.mrf.mxu0
        %v513 = vadd.f32 %v484, %v512
        %v514 = vpop.f32.mrf.mxu0
        %v515 = vadd.f32 %v486, %v514
        %516 = vdwg.mxu0
        %v517 = vadd.f32 %v284, %v498
        %v518 = vadd.f32 %v285, %v500
        %v519 = vadd.f32 %v286, %v503
        %v520 = vadd.f32 %v287, %v505
        %v521 = vadd.f32 %v288, %v508
        %v522 = vadd.f32 %v289, %v510
        %v523 = vadd.f32 %v290, %v513
        %v524 = vadd.f32 %v291, %v515
        %525 = vst [vmem:[%s166] sm:$0xff] %v517
        %526 = vst [vmem:[%s166 + $0x8] sm:$0xff] %v518
        %527 = vst [vmem:[%s166 + $0x10] sm:$0xff] %v519
        %528 = vst [vmem:[%s166 + $0x18] sm:$0xff] %v520
        %529 = vst [vmem:[%s166 + $0x20] sm:$0xff] %v521
        %530 = vst [vmem:[%s166 + $0x28] sm:$0xff] %v522
        %531 = vst [vmem:[%s166 + $0x30] sm:$0xff] %v523
        %532 = vst [vmem:[%s166 + $0x38] sm:$0xff] %v524
        %v533 = vld [vmem:[%s172] sm:$0xcc]
        %v534 = vld [vmem:[%s172 + $0x10] sm:$0xcc]
        %v535 = vld [vmem:[%s172 + $0x20] sm:$0xcc]
        %v536 = vld [vmem:[%s172 + $0x30] sm:$0xcc]
        %v537 = vld [vmem:[%s172 + $0x100] sm:$0xcc]
        %v538 = vld [vmem:[%s172 + $0x110] sm:$0xcc]
        %v539 = vld [vmem:[%s172 + $0x120] sm:$0xcc]
        %v540 = vld [vmem:[%s172 + $0x130] sm:$0xcc]
        %v541 = vld [vmem:[%s172 + $0x200] sm:$0xcc]
        %v542 = vld [vmem:[%s172 + $0x210] sm:$0xcc]
        %v543 = vld [vmem:[%s172 + $0x220] sm:$0xcc]
        %v544 = vld [vmem:[%s172 + $0x230] sm:$0xcc]
        %v545 = vld [vmem:[%s172 + $0x300] sm:$0xcc]
        %v546 = vld [vmem:[%s172 + $0x310] sm:$0xcc]
        %v547 = vld [vmem:[%s172 + $0x320] sm:$0xcc]
        %v548 = vld [vmem:[%s172 + $0x330] sm:$0xcc]
        %550 = vst.sshfl [vmem:[#allocation1] sm:$0xff pattern:$0x75643120] %v533
        %s551 = scalar_lea.vmem [#allocation1], 1
        %v552 = vld [vmem:[%s551] ss:$2 sm:$0xff]
        %554 = vst.sshfl [vmem:[#allocation1 + $0x10] sm:$0xff pattern:$0x75643120] %v534
        %s555 = scalar_lea.vmem [#allocation1], 17
        %v556 = vld [vmem:[%s555] ss:$2 sm:$0xff]
        %558 = vst.sshfl [vmem:[#allocation1 + $0x20] sm:$0xff pattern:$0x75643120] %v535
        %s559 = scalar_lea.vmem [#allocation1], 33
        %v560 = vld [vmem:[%s559] ss:$2 sm:$0xff]
        %562 = vst.sshfl [vmem:[#allocation1 + $0x30] sm:$0xff pattern:$0x75643120] %v536
        %s563 = scalar_lea.vmem [#allocation1], 49
        %v564 = vld [vmem:[%s563] ss:$2 sm:$0xff]
        %566 = vst.sshfl [vmem:[#allocation1] sm:$0xff pattern:$0x75643120] %v537
        %v567 = vld [vmem:[%s551] ss:$2 sm:$0xff]
        %569 = vst.sshfl [vmem:[#allocation1 + $0x10] sm:$0xff pattern:$0x75643120] %v538
        %v570 = vld [vmem:[%s555] ss:$2 sm:$0xff]
        %572 = vst.sshfl [vmem:[#allocation1 + $0x20] sm:$0xff pattern:$0x75643120] %v539
        %v573 = vld [vmem:[%s559] ss:$2 sm:$0xff]
        %575 = vst.sshfl [vmem:[#allocation1 + $0x30] sm:$0xff pattern:$0x75643120] %v540
        %v576 = vld [vmem:[%s563] ss:$2 sm:$0xff]
        %578 = vst.sshfl [vmem:[#allocation1] sm:$0xff pattern:$0x75643120] %v541
        %v579 = vld [vmem:[%s551] ss:$2 sm:$0xff]
        %581 = vst.sshfl [vmem:[#allocation1 + $0x10] sm:$0xff pattern:$0x75643120] %v542
        %v582 = vld [vmem:[%s555] ss:$2 sm:$0xff]
        %584 = vst.sshfl [vmem:[#allocation1 + $0x20] sm:$0xff pattern:$0x75643120] %v543
        %v585 = vld [vmem:[%s559] ss:$2 sm:$0xff]
        %587 = vst.sshfl [vmem:[#allocation1 + $0x30] sm:$0xff pattern:$0x75643120] %v544
        %v588 = vld [vmem:[%s563] ss:$2 sm:$0xff]
        %590 = vst.sshfl [vmem:[#allocation1] sm:$0xff pattern:$0x75643120] %v545
        %v591 = vld [vmem:[%s551] ss:$2 sm:$0xff]
        %593 = vst.sshfl [vmem:[#allocation1 + $0x10] sm:$0xff pattern:$0x75643120] %v546
        %v594 = vld [vmem:[%s555] ss:$2 sm:$0xff]
        %596 = vst.sshfl [vmem:[#allocation1 + $0x20] sm:$0xff pattern:$0x75643120] %v547
        %v597 = vld [vmem:[%s559] ss:$2 sm:$0xff]
        %599 = vst.sshfl [vmem:[#allocation1 + $0x30] sm:$0xff pattern:$0x75643120] %v548
        %v600 = vld [vmem:[%s563] ss:$2 sm:$0xff]
        %v601 = vld [vmem:[%s166] sm:$0xff]
        %v602 = vld [vmem:[%s166 + $0x8] sm:$0xff]
        %v603 = vld [vmem:[%s166 + $0x10] sm:$0xff]
        %v604 = vld [vmem:[%s166 + $0x18] sm:$0xff]
        %v605 = vld [vmem:[%s166 + $0x20] sm:$0xff]
        %v606 = vld [vmem:[%s166 + $0x28] sm:$0xff]
        %v607 = vld [vmem:[%s166 + $0x30] sm:$0xff]
        %v608 = vld [vmem:[%s166 + $0x38] sm:$0xff]
        %s609 = scalar_lea.vmem %s1, 128
        %v610 = vld [vmem:[%s609] sm:$0xf]
        %v611 = vld [vmem:[%s609 + $0x4] sm:$0xf]
        %v612 = vld [vmem:[%s609 + $0x8] sm:$0xf]
        %v613 = vld [vmem:[%s609 + $0xc] sm:$0xf]
        %v614 = vld [vmem:[%s609 + $0x10] sm:$0xf]
        %v615 = vld [vmem:[%s609 + $0x14] sm:$0xf]
        %v616 = vld [vmem:[%s609 + $0x18] sm:$0xf]
        %v617 = vld [vmem:[%s609 + $0x1c] sm:$0xf]
        %v618 = vld [vmem:[%s609 + $0x20] sm:$0xf]
        %v619 = vld [vmem:[%s609 + $0x24] sm:$0xf]
        %v620 = vld [vmem:[%s609 + $0x28] sm:$0xf]
        %v621 = vld [vmem:[%s609 + $0x2c] sm:$0xf]
        %v622 = vld [vmem:[%s609 + $0x30] sm:$0xf]
        %v623 = vld [vmem:[%s609 + $0x34] sm:$0xf]
        %v624 = vld [vmem:[%s609 + $0x38] sm:$0xf]
        %v625 = vld [vmem:[%s609 + $0x3c] sm:$0xf]
        %v626 = vld [vmem:[%s609 + $0x40] sm:$0xf]
        %v627 = vld [vmem:[%s609 + $0x44] sm:$0xf]
        %v628 = vld [vmem:[%s609 + $0x48] sm:$0xf]
        %v629 = vld [vmem:[%s609 + $0x4c] sm:$0xf]
        %v630 = vld [vmem:[%s609 + $0x50] sm:$0xf]
        %v631 = vld [vmem:[%s609 + $0x54] sm:$0xf]
        %v632 = vld [vmem:[%s609 + $0x58] sm:$0xf]
        %v633 = vld [vmem:[%s609 + $0x5c] sm:$0xf]
        %v634 = vld [vmem:[%s609 + $0x60] sm:$0xf]
        %v635 = vld [vmem:[%s609 + $0x64] sm:$0xf]
        %v636 = vld [vmem:[%s609 + $0x68] sm:$0xf]
        %v637 = vld [vmem:[%s609 + $0x6c] sm:$0xf]
        %v638 = vld [vmem:[%s609 + $0x70] sm:$0xf]
        %v639 = vld [vmem:[%s609 + $0x74] sm:$0xf]
        %v640 = vld [vmem:[%s609 + $0x78] sm:$0xf]
        %v641 = vld [vmem:[%s609 + $0x7c] sm:$0xf]
        %642 = vst [vmem:[#allocation1] ss:$4 sm:$0xff] %v552
        %s643 = scalar_lea.vmem [#allocation1], 1
        %644 = vst [vmem:[%s643] ss:$4 sm:$0xff] %v556
        %s645 = scalar_lea.vmem [#allocation1], 2
        %646 = vst [vmem:[%s645] ss:$4 sm:$0xff] %v560
        %s647 = scalar_lea.vmem [#allocation1], 3
        %648 = vst [vmem:[%s647] ss:$4 sm:$0xff] %v564
        %s649 = scalar_lea.vmem [#allocation1], 32
        %650 = vst [vmem:[%s649] ss:$4 sm:$0xff] %v567
        %s651 = scalar_lea.vmem [#allocation1], 33
        %652 = vst [vmem:[%s651] ss:$4 sm:$0xff] %v570
        %s653 = scalar_lea.vmem [#allocation1], 34
        %654 = vst [vmem:[%s653] ss:$4 sm:$0xff] %v573
        %s655 = scalar_lea.vmem [#allocation1], 35
        %656 = vst [vmem:[%s655] ss:$4 sm:$0xff] %v576
        %v657 = vld.sshfl [vmem:[#allocation1] sm:$0xff pattern:$0x73625140]
        %v658 = vld.sshfl [vmem:[#allocation1 + $0x8] sm:$0xff pattern:$0x73625140]
        %v659 = vld.sshfl [vmem:[#allocation1 + $0x20] sm:$0xff pattern:$0x73625140]
        %v660 = vld.sshfl [vmem:[#allocation1 + $0x28] sm:$0xff pattern:$0x73625140]
        %661 = vst [vmem:[#allocation1] ss:$4 sm:$0xff] %v579
        %662 = vst [vmem:[%s643] ss:$4 sm:$0xff] %v582
        %663 = vst [vmem:[%s645] ss:$4 sm:$0xff] %v585
        %664 = vst [vmem:[%s647] ss:$4 sm:$0xff] %v588
        %665 = vst [vmem:[%s649] ss:$4 sm:$0xff] %v591
        %666 = vst [vmem:[%s651] ss:$4 sm:$0xff] %v594
        %667 = vst [vmem:[%s653] ss:$4 sm:$0xff] %v597
        %668 = vst [vmem:[%s655] ss:$4 sm:$0xff] %v600
        %v669 = vld.sshfl [vmem:[#allocation1] sm:$0xff pattern:$0x73625140]
        %v670 = vld.sshfl [vmem:[#allocation1 + $0x8] sm:$0xff pattern:$0x73625140]
        %v671 = vld.sshfl [vmem:[#allocation1 + $0x20] sm:$0xff pattern:$0x73625140]
        %v672 = vld.sshfl [vmem:[#allocation1 + $0x28] sm:$0xff pattern:$0x73625140]
        %v713 = vunpack.c.l.b16 %v610
        %v714 = vunpack.c.l.b16 %v611
        %v715 = vunpack.c.l.b16 %v612
        %v716 = vunpack.c.l.b16 %v613
        %v717 = vunpack.c.l.b16 %v614
        %v718 = vunpack.c.l.b16 %v615
        %v719 = vunpack.c.l.b16 %v616
        %v720 = vunpack.c.l.b16 %v617
        %v721 = vunpack.c.l.b16 %v618
        %v722 = vunpack.c.l.b16 %v619
        %v723 = vunpack.c.l.b16 %v620
        %v724 = vunpack.c.l.b16 %v621
        %v725 = vunpack.c.l.b16 %v622
        %v726 = vunpack.c.l.b16 %v623
        %v727 = vunpack.c.l.b16 %v624
        %v728 = vunpack.c.l.b16 %v625
        %v729 = vunpack.c.l.b16 %v626
        %v730 = vunpack.c.l.b16 %v627
        %v731 = vunpack.c.l.b16 %v628
        %v732 = vunpack.c.l.b16 %v629
        %v733 = vunpack.c.l.b16 %v630
        %v734 = vunpack.c.l.b16 %v631
        %v735 = vunpack.c.l.b16 %v632
        %v736 = vunpack.c.l.b16 %v633
        %v737 = vunpack.c.l.b16 %v634
        %v738 = vunpack.c.l.b16 %v635
        %v739 = vunpack.c.l.b16 %v636
        %v740 = vunpack.c.l.b16 %v637
        %v741 = vunpack.c.l.b16 %v638
        %v742 = vunpack.c.l.b16 %v639
        %v743 = vunpack.c.l.b16 %v640
        %v744 = vunpack.c.l.b16 %v641
        %v745 = vpack.c.b16 %v714, %v713
        %v746 = vpack.c.b16 %v716, %v715
        %v747 = vpack.c.b16 %v718, %v717
        %v748 = vpack.c.b16 %v720, %v719
        %v749 = vpack.c.b16 %v722, %v721
        %v750 = vpack.c.b16 %v724, %v723
        %v751 = vpack.c.b16 %v726, %v725
        %v752 = vpack.c.b16 %v728, %v727
        %v753 = vpack.c.b16 %v730, %v729
        %v754 = vpack.c.b16 %v732, %v731
        %v755 = vpack.c.b16 %v734, %v733
        %v756 = vpack.c.b16 %v736, %v735
        %v757 = vpack.c.b16 %v738, %v737
        %v758 = vpack.c.b16 %v740, %v739
        %v759 = vpack.c.b16 %v742, %v741
        %v760 = vpack.c.b16 %v744, %v743
        %777 = vmatpush.bf16.msra.mxu0 %v752
        %778 = vmatpush.bf16.msra.mxu0 %v751
        %779 = vmatpush.bf16.msra.mxu0 %v750
        %780 = vmatpush.bf16.msra.mxu0 %v749
        %781 = vmatpush.bf16.msra.mxu0 %v748
        %782 = vmatpush.bf16.msra.mxu0 %v747
        %783 = vmatpush.bf16.msra.mxu0 %v746
        %784 = vmatpush.bf16.msra.mxu0 %v745
        %785 = vmatmul.bf16.gmra.mxu0 %v657
        %v786 = vpop.f32.mrf.mxu0
        %v787 = vadd.f32 0.0, %v786
        %v788 = vpop.f32.mrf.mxu0
        %v789 = vadd.f32 0.0, %v788
        %790 = vmatmul.bf16.gmra.mxu0 %v659
        %v791 = vpop.f32.mrf.mxu0
        %v792 = vadd.f32 0.0, %v791
        %v793 = vpop.f32.mrf.mxu0
        %v794 = vadd.f32 0.0, %v793
        %795 = vmatmul.bf16.gmra.mxu0 %v669
        %v796 = vpop.f32.mrf.mxu0
        %v797 = vadd.f32 0.0, %v796
        %v798 = vpop.f32.mrf.mxu0
        %v799 = vadd.f32 0.0, %v798
        %800 = vmatmul.bf16.gmra.mxu0 %v671
        %v801 = vpop.f32.mrf.mxu0
        %v802 = vadd.f32 0.0, %v801
        %v803 = vpop.f32.mrf.mxu0
        %v804 = vadd.f32 0.0, %v803
        %805 = vdwg.mxu0
        %806 = vmatpush.bf16.msra.mxu0 %v760
        %807 = vmatpush.bf16.msra.mxu0 %v759
        %808 = vmatpush.bf16.msra.mxu0 %v758
        %809 = vmatpush.bf16.msra.mxu0 %v757
        %810 = vmatpush.bf16.msra.mxu0 %v756
        %811 = vmatpush.bf16.msra.mxu0 %v755
        %812 = vmatpush.bf16.msra.mxu0 %v754
        %813 = vmatpush.bf16.msra.mxu0 %v753
        %814 = vmatmul.bf16.gmra.mxu0 %v658
        %v815 = vpop.f32.mrf.mxu0
        %v816 = vadd.f32 %v787, %v815
        %v817 = vpop.f32.mrf.mxu0
        %v818 = vadd.f32 %v789, %v817
        %819 = vmatmul.bf16.gmra.mxu0 %v660
        %v820 = vpop.f32.mrf.mxu0
        %v821 = vadd.f32 %v792, %v820
        %v822 = vpop.f32.mrf.mxu0
        %v823 = vadd.f32 %v794, %v822
        %824 = vmatmul.bf16.gmra.mxu0 %v670
        %v825 = vpop.f32.mrf.mxu0
        %v826 = vadd.f32 %v797, %v825
        %v827 = vpop.f32.mrf.mxu0
        %v828 = vadd.f32 %v799, %v827
        %829 = vmatmul.bf16.gmra.mxu0 %v672
        %v830 = vpop.f32.mrf.mxu0
        %v831 = vadd.f32 %v802, %v830
        %v832 = vpop.f32.mrf.mxu0
        %v833 = vadd.f32 %v804, %v832
        %834 = vdwg.mxu0
        %v835 = vadd.f32 %v601, %v816
        %v836 = vadd.f32 %v602, %v818
        %v837 = vadd.f32 %v603, %v821
        %v838 = vadd.f32 %v604, %v823
        %v839 = vadd.f32 %v605, %v826
        %v840 = vadd.f32 %v606, %v828
        %v841 = vadd.f32 %v607, %v831
        %v842 = vadd.f32 %v608, %v833
        %843 = vst [vmem:[%s166] sm:$0xff] %v835
        %844 = vst [vmem:[%s166 + $0x8] sm:$0xff] %v836
        %845 = vst [vmem:[%s166 + $0x10] sm:$0xff] %v837
        %846 = vst [vmem:[%s166 + $0x18] sm:$0xff] %v838
        %847 = vst [vmem:[%s166 + $0x20] sm:$0xff] %v839
        %848 = vst [vmem:[%s166 + $0x28] sm:$0xff] %v840
        %849 = vst [vmem:[%s166 + $0x30] sm:$0xff] %v841
        %850 = vst [vmem:[%s166 + $0x38] sm:$0xff] %v842
        %v851 = vld [vmem:[%s172 + $0x8] sm:$0x33]
        %v852 = vld [vmem:[%s172 + $0x18] sm:$0x33]
        %v853 = vld [vmem:[%s172 + $0x28] sm:$0x33]
        %v854 = vld [vmem:[%s172 + $0x38] sm:$0x33]
        %v855 = vld [vmem:[%s172 + $0x108] sm:$0x33]
        %v856 = vld [vmem:[%s172 + $0x118] sm:$0x33]
        %v857 = vld [vmem:[%s172 + $0x128] sm:$0x33]
        %v858 = vld [vmem:[%s172 + $0x138] sm:$0x33]
        %v859 = vld [vmem:[%s172 + $0x208] sm:$0x33]
        %v860 = vld [vmem:[%s172 + $0x218] sm:$0x33]
        %v861 = vld [vmem:[%s172 + $0x228] sm:$0x33]
        %v862 = vld [vmem:[%s172 + $0x238] sm:$0x33]
        %v863 = vld [vmem:[%s172 + $0x308] sm:$0x33]
        %v864 = vld [vmem:[%s172 + $0x318] sm:$0x33]
        %v865 = vld [vmem:[%s172 + $0x328] sm:$0x33]
        %v866 = vld [vmem:[%s172 + $0x338] sm:$0x33]
        %v883 = vrot.slane %v851, 2
        %v884 = vrot.slane %v852, 2
        %v885 = vrot.slane %v853, 2
        %v886 = vrot.slane %v854, 2
        %v887 = vrot.slane %v855, 2
        %v888 = vrot.slane %v856, 2
        %v889 = vrot.slane %v857, 2
        %v890 = vrot.slane %v858, 2
        %v891 = vrot.slane %v859, 2
        %v892 = vrot.slane %v860, 2
        %v893 = vrot.slane %v861, 2
        %v894 = vrot.slane %v862, 2
        %v895 = vrot.slane %v863, 2
        %v896 = vrot.slane %v864, 2
        %v897 = vrot.slane %v865, 2
        %v898 = vrot.slane %v866, 2
        %v901 = vsel %vm235, %v851, %v883
        %v904 = vsel %vm235, %v852, %v884
        %v907 = vsel %vm235, %v853, %v885
        %v910 = vsel %vm235, %v854, %v886
        %v913 = vsel %vm235, %v855, %v887
        %v916 = vsel %vm235, %v856, %v888
        %v919 = vsel %vm235, %v857, %v889
        %v922 = vsel %vm235, %v858, %v890
        %v925 = vsel %vm235, %v859, %v891
        %v928 = vsel %vm235, %v860, %v892
        %v931 = vsel %vm235, %v861, %v893
        %v934 = vsel %vm235, %v862, %v894
        %v937 = vsel %vm235, %v863, %v895
        %v940 = vsel %vm235, %v864, %v896
        %v943 = vsel %vm235, %v865, %v897
        %v946 = vsel %vm235, %v866, %v898
        %v947 = vld [vmem:[%s166] sm:$0xff]
        %v948 = vld [vmem:[%s166 + $0x8] sm:$0xff]
        %v949 = vld [vmem:[%s166 + $0x10] sm:$0xff]
        %v950 = vld [vmem:[%s166 + $0x18] sm:$0xff]
        %v951 = vld [vmem:[%s166 + $0x20] sm:$0xff]
        %v952 = vld [vmem:[%s166 + $0x28] sm:$0xff]
        %v953 = vld [vmem:[%s166 + $0x30] sm:$0xff]
        %v954 = vld [vmem:[%s166 + $0x38] sm:$0xff]
        %s955 = scalar_lea.vmem %s1, 256
        %v956 = vld [vmem:[%s955] sm:$0xf]
        %v957 = vld [vmem:[%s955 + $0x4] sm:$0xf]
        %v958 = vld [vmem:[%s955 + $0x8] sm:$0xf]
        %v959 = vld [vmem:[%s955 + $0xc] sm:$0xf]
        %v960 = vld [vmem:[%s955 + $0x10] sm:$0xf]
        %v961 = vld [vmem:[%s955 + $0x14] sm:$0xf]
        %v962 = vld [vmem:[%s955 + $0x18] sm:$0xf]
        %v963 = vld [vmem:[%s955 + $0x1c] sm:$0xf]
        %v964 = vld [vmem:[%s955 + $0x20] sm:$0xf]
        %v965 = vld [vmem:[%s955 + $0x24] sm:$0xf]
        %v966 = vld [vmem:[%s955 + $0x28] sm:$0xf]
        %v967 = vld [vmem:[%s955 + $0x2c] sm:$0xf]
        %v968 = vld [vmem:[%s955 + $0x30] sm:$0xf]
        %v969 = vld [vmem:[%s955 + $0x34] sm:$0xf]
        %v970 = vld [vmem:[%s955 + $0x38] sm:$0xf]
        %v971 = vld [vmem:[%s955 + $0x3c] sm:$0xf]
        %v972 = vld [vmem:[%s955 + $0x40] sm:$0xf]
        %v973 = vld [vmem:[%s955 + $0x44] sm:$0xf]
        %v974 = vld [vmem:[%s955 + $0x48] sm:$0xf]
        %v975 = vld [vmem:[%s955 + $0x4c] sm:$0xf]
        %v976 = vld [vmem:[%s955 + $0x50] sm:$0xf]
        %v977 = vld [vmem:[%s955 + $0x54] sm:$0xf]
        %v978 = vld [vmem:[%s955 + $0x58] sm:$0xf]
        %v979 = vld [vmem:[%s955 + $0x5c] sm:$0xf]
        %v980 = vld [vmem:[%s955 + $0x60] sm:$0xf]
        %v981 = vld [vmem:[%s955 + $0x64] sm:$0xf]
        %v982 = vld [vmem:[%s955 + $0x68] sm:$0xf]
        %v983 = vld [vmem:[%s955 + $0x6c] sm:$0xf]
        %v984 = vld [vmem:[%s955 + $0x70] sm:$0xf]
        %v985 = vld [vmem:[%s955 + $0x74] sm:$0xf]
        %v986 = vld [vmem:[%s955 + $0x78] sm:$0xf]
        %v987 = vld [vmem:[%s955 + $0x7c] sm:$0xf]
        %988 = vst [vmem:[#allocation1] ss:$4 sm:$0xff] %v901
        %s989 = scalar_lea.vmem [#allocation1], 1
        %990 = vst [vmem:[%s989] ss:$4 sm:$0xff] %v904
        %s991 = scalar_lea.vmem [#allocation1], 2
        %992 = vst [vmem:[%s991] ss:$4 sm:$0xff] %v907
        %s993 = scalar_lea.vmem [#allocation1], 3
        %994 = vst [vmem:[%s993] ss:$4 sm:$0xff] %v910
        %s995 = scalar_lea.vmem [#allocation1], 32
        %996 = vst [vmem:[%s995] ss:$4 sm:$0xff] %v913
        %s997 = scalar_lea.vmem [#allocation1], 33
        %998 = vst [vmem:[%s997] ss:$4 sm:$0xff] %v916
        %s999 = scalar_lea.vmem [#allocation1], 34
        %1000 = vst [vmem:[%s999] ss:$4 sm:$0xff] %v919
        %s1001 = scalar_lea.vmem [#allocation1], 35
        %1002 = vst [vmem:[%s1001] ss:$4 sm:$0xff] %v922
        %v1003 = vld.sshfl [vmem:[#allocation1] sm:$0xff pattern:$0x73625140]
        %v1004 = vld.sshfl [vmem:[#allocation1 + $0x8] sm:$0xff pattern:$0x73625140]
        %v1005 = vld.sshfl [vmem:[#allocation1 + $0x20] sm:$0xff pattern:$0x73625140]
        %v1006 = vld.sshfl [vmem:[#allocation1 + $0x28] sm:$0xff pattern:$0x73625140]
        %1007 = vst [vmem:[#allocation1] ss:$4 sm:$0xff] %v925
        %1008 = vst [vmem:[%s989] ss:$4 sm:$0xff] %v928
        %1009 = vst [vmem:[%s991] ss:$4 sm:$0xff] %v931
        %1010 = vst [vmem:[%s993] ss:$4 sm:$0xff] %v934
        %1011 = vst [vmem:[%s995] ss:$4 sm:$0xff] %v937
        %1012 = vst [vmem:[%s997] ss:$4 sm:$0xff] %v940
        %1013 = vst [vmem:[%s999] ss:$4 sm:$0xff] %v943
        %1014 = vst [vmem:[%s1001] ss:$4 sm:$0xff] %v946
        %v1015 = vld.sshfl [vmem:[#allocation1] sm:$0xff pattern:$0x73625140]
        %v1016 = vld.sshfl [vmem:[#allocation1 + $0x8] sm:$0xff pattern:$0x73625140]
        %v1017 = vld.sshfl [vmem:[#allocation1 + $0x20] sm:$0xff pattern:$0x73625140]
        %v1018 = vld.sshfl [vmem:[#allocation1 + $0x28] sm:$0xff pattern:$0x73625140]
        %v1059 = vunpack.c.l.b16 %v956
        %v1060 = vunpack.c.l.b16 %v957
        %v1061 = vunpack.c.l.b16 %v958
        %v1062 = vunpack.c.l.b16 %v959
        %v1063 = vunpack.c.l.b16 %v960
        %v1064 = vunpack.c.l.b16 %v961
        %v1065 = vunpack.c.l.b16 %v962
        %v1066 = vunpack.c.l.b16 %v963
        %v1067 = vunpack.c.l.b16 %v964
        %v1068 = vunpack.c.l.b16 %v965
        %v1069 = vunpack.c.l.b16 %v966
        %v1070 = vunpack.c.l.b16 %v967
        %v1071 = vunpack.c.l.b16 %v968
        %v1072 = vunpack.c.l.b16 %v969
        %v1073 = vunpack.c.l.b16 %v970
        %v1074 = vunpack.c.l.b16 %v971
        %v1075 = vunpack.c.l.b16 %v972
        %v1076 = vunpack.c.l.b16 %v973
        %v1077 = vunpack.c.l.b16 %v974
        %v1078 = vunpack.c.l.b16 %v975
        %v1079 = vunpack.c.l.b16 %v976
        %v1080 = vunpack.c.l.b16 %v977
        %v1081 = vunpack.c.l.b16 %v978
        %v1082 = vunpack.c.l.b16 %v979
        %v1083 = vunpack.c.l.b16 %v980
        %v1084 = vunpack.c.l.b16 %v981
        %v1085 = vunpack.c.l.b16 %v982
        %v1086 = vunpack.c.l.b16 %v983
        %v1087 = vunpack.c.l.b16 %v984
        %v1088 = vunpack.c.l.b16 %v985
        %v1089 = vunpack.c.l.b16 %v986
        %v1090 = vunpack.c.l.b16 %v987
        %v1091 = vpack.c.b16 %v1060, %v1059
        %v1092 = vpack.c.b16 %v1062, %v1061
        %v1093 = vpack.c.b16 %v1064, %v1063
        %v1094 = vpack.c.b16 %v1066, %v1065
        %v1095 = vpack.c.b16 %v1068, %v1067
        %v1096 = vpack.c.b16 %v1070, %v1069
        %v1097 = vpack.c.b16 %v1072, %v1071
        %v1098 = vpack.c.b16 %v1074, %v1073
        %v1099 = vpack.c.b16 %v1076, %v1075
        %v1100 = vpack.c.b16 %v1078, %v1077
        %v1101 = vpack.c.b16 %v1080, %v1079
        %v1102 = vpack.c.b16 %v1082, %v1081
        %v1103 = vpack.c.b16 %v1084, %v1083
        %v1104 = vpack.c.b16 %v1086, %v1085
        %v1105 = vpack.c.b16 %v1088, %v1087
        %v1106 = vpack.c.b16 %v1090, %v1089
        %1123 = vmatpush.bf16.msra.mxu0 %v1098
        %1124 = vmatpush.bf16.msra.mxu0 %v1097
        %1125 = vmatpush.bf16.msra.mxu0 %v1096
        %1126 = vmatpush.bf16.msra.mxu0 %v1095
        %1127 = vmatpush.bf16.msra.mxu0 %v1094
        %1128 = vmatpush.bf16.msra.mxu0 %v1093
        %1129 = vmatpush.bf16.msra.mxu0 %v1092
        %1130 = vmatpush.bf16.msra.mxu0 %v1091
        %1131 = vmatmul.bf16.gmra.mxu0 %v1003
        %v1132 = vpop.f32.mrf.mxu0
        %v1133 = vadd.f32 0.0, %v1132
        %v1134 = vpop.f32.mrf.mxu0
        %v1135 = vadd.f32 0.0, %v1134
        %1136 = vmatmul.bf16.gmra.mxu0 %v1005
        %v1137 = vpop.f32.mrf.mxu0
        %v1138 = vadd.f32 0.0, %v1137
        %v1139 = vpop.f32.mrf.mxu0
        %v1140 = vadd.f32 0.0, %v1139
        %1141 = vmatmul.bf16.gmra.mxu0 %v1015
        %v1142 = vpop.f32.mrf.mxu0
        %v1143 = vadd.f32 0.0, %v1142
        %v1144 = vpop.f32.mrf.mxu0
        %v1145 = vadd.f32 0.0, %v1144
        %1146 = vmatmul.bf16.gmra.mxu0 %v1017
        %v1147 = vpop.f32.mrf.mxu0
        %v1148 = vadd.f32 0.0, %v1147
        %v1149 = vpop.f32.mrf.mxu0
        %v1150 = vadd.f32 0.0, %v1149
        %1151 = vdwg.mxu0
        %1152 = vmatpush.bf16.msra.mxu0 %v1106
        %1153 = vmatpush.bf16.msra.mxu0 %v1105
        %1154 = vmatpush.bf16.msra.mxu0 %v1104
        %1155 = vmatpush.bf16.msra.mxu0 %v1103
        %1156 = vmatpush.bf16.msra.mxu0 %v1102
        %1157 = vmatpush.bf16.msra.mxu0 %v1101
        %1158 = vmatpush.bf16.msra.mxu0 %v1100
        %1159 = vmatpush.bf16.msra.mxu0 %v1099
        %1160 = vmatmul.bf16.gmra.mxu0 %v1004
        %v1161 = vpop.f32.mrf.mxu0
        %v1162 = vadd.f32 %v1133, %v1161
        %v1163 = vpop.f32.mrf.mxu0
        %v1164 = vadd.f32 %v1135, %v1163
        %1165 = vmatmul.bf16.gmra.mxu0 %v1006
        %v1166 = vpop.f32.mrf.mxu0
        %v1167 = vadd.f32 %v1138, %v1166
        %v1168 = vpop.f32.mrf.mxu0
        %v1169 = vadd.f32 %v1140, %v1168
        %1170 = vmatmul.bf16.gmra.mxu0 %v1016
        %v1171 = vpop.f32.mrf.mxu0
        %v1172 = vadd.f32 %v1143, %v1171
        %v1173 = vpop.f32.mrf.mxu0
        %v1174 = vadd.f32 %v1145, %v1173
        %1175 = vmatmul.bf16.gmra.mxu0 %v1018
        %v1176 = vpop.f32.mrf.mxu0
        %v1177 = vadd.f32 %v1148, %v1176
        %v1178 = vpop.f32.mrf.mxu0
        %v1179 = vadd.f32 %v1150, %v1178
        %1180 = vdwg.mxu0
        %v1181 = vadd.f32 %v947, %v1162
        %v1182 = vadd.f32 %v948, %v1164
        %v1183 = vadd.f32 %v949, %v1167
        %v1184 = vadd.f32 %v950, %v1169
        %v1185 = vadd.f32 %v951, %v1172
        %v1186 = vadd.f32 %v952, %v1174
        %v1187 = vadd.f32 %v953, %v1177
        %v1188 = vadd.f32 %v954, %v1179
        %1189 = vst [vmem:[%s166] sm:$0xff] %v1181
        %1190 = vst [vmem:[%s166 + $0x8] sm:$0xff] %v1182
        %1191 = vst [vmem:[%s166 + $0x10] sm:$0xff] %v1183
        %1192 = vst [vmem:[%s166 + $0x18] sm:$0xff] %v1184
        %1193 = vst [vmem:[%s166 + $0x20] sm:$0xff] %v1185
        %1194 = vst [vmem:[%s166 + $0x28] sm:$0xff] %v1186
        %1195 = vst [vmem:[%s166 + $0x30] sm:$0xff] %v1187
        %1196 = vst [vmem:[%s166 + $0x38] sm:$0xff] %v1188
        %v1197 = vld [vmem:[%s172 + $0x8] sm:$0xcc]
        %v1198 = vld [vmem:[%s172 + $0x18] sm:$0xcc]
        %v1199 = vld [vmem:[%s172 + $0x28] sm:$0xcc]
        %v1200 = vld [vmem:[%s172 + $0x38] sm:$0xcc]
        %v1201 = vld [vmem:[%s172 + $0x108] sm:$0xcc]
        %v1202 = vld [vmem:[%s172 + $0x118] sm:$0xcc]
        %v1203 = vld [vmem:[%s172 + $0x128] sm:$0xcc]
        %v1204 = vld [vmem:[%s172 + $0x138] sm:$0xcc]
        %v1205 = vld [vmem:[%s172 + $0x208] sm:$0xcc]
        %v1206 = vld [vmem:[%s172 + $0x218] sm:$0xcc]
        %v1207 = vld [vmem:[%s172 + $0x228] sm:$0xcc]
        %v1208 = vld [vmem:[%s172 + $0x238] sm:$0xcc]
        %v1209 = vld [vmem:[%s172 + $0x308] sm:$0xcc]
        %v1210 = vld [vmem:[%s172 + $0x318] sm:$0xcc]
        %v1211 = vld [vmem:[%s172 + $0x328] sm:$0xcc]
        %v1212 = vld [vmem:[%s172 + $0x338] sm:$0xcc]
        %1214 = vst.sshfl [vmem:[#allocation1] sm:$0xff pattern:$0x75643120] %v1197
        %s1215 = scalar_lea.vmem [#allocation1], 1
        %v1216 = vld [vmem:[%s1215] ss:$2 sm:$0xff]
        %1218 = vst.sshfl [vmem:[#allocation1 + $0x10] sm:$0xff pattern:$0x75643120] %v1198
        %s1219 = scalar_lea.vmem [#allocation1], 17
        %v1220 = vld [vmem:[%s1219] ss:$2 sm:$0xff]
        %1222 = vst.sshfl [vmem:[#allocation1 + $0x20] sm:$0xff pattern:$0x75643120] %v1199
        %s1223 = scalar_lea.vmem [#allocation1], 33
        %v1224 = vld [vmem:[%s1223] ss:$2 sm:$0xff]
        %1226 = vst.sshfl [vmem:[#allocation1 + $0x30] sm:$0xff pattern:$0x75643120] %v1200
        %s1227 = scalar_lea.vmem [#allocation1], 49
        %v1228 = vld [vmem:[%s1227] ss:$2 sm:$0xff]
        %1230 = vst.sshfl [vmem:[#allocation1] sm:$0xff pattern:$0x75643120] %v1201
        %v1231 = vld [vmem:[%s1215] ss:$2 sm:$0xff]
        %1233 = vst.sshfl [vmem:[#allocation1 + $0x10] sm:$0xff pattern:$0x75643120] %v1202
        %v1234 = vld [vmem:[%s1219] ss:$2 sm:$0xff]
        %1236 = vst.sshfl [vmem:[#allocation1 + $0x20] sm:$0xff pattern:$0x75643120] %v1203
        %v1237 = vld [vmem:[%s1223] ss:$2 sm:$0xff]
        %1239 = vst.sshfl [vmem:[#allocation1 + $0x30] sm:$0xff pattern:$0x75643120] %v1204
        %v1240 = vld [vmem:[%s1227] ss:$2 sm:$0xff]
        %1242 = vst.sshfl [vmem:[#allocation1] sm:$0xff pattern:$0x75643120] %v1205
        %v1243 = vld [vmem:[%s1215] ss:$2 sm:$0xff]
        %1245 = vst.sshfl [vmem:[#allocation1 + $0x10] sm:$0xff pattern:$0x75643120] %v1206
        %v1246 = vld [vmem:[%s1219] ss:$2 sm:$0xff]
        %1248 = vst.sshfl [vmem:[#allocation1 + $0x20] sm:$0xff pattern:$0x75643120] %v1207
        %v1249 = vld [vmem:[%s1223] ss:$2 sm:$0xff]
        %1251 = vst.sshfl [vmem:[#allocation1 + $0x30] sm:$0xff pattern:$0x75643120] %v1208
        %v1252 = vld [vmem:[%s1227] ss:$2 sm:$0xff]
        %1254 = vst.sshfl [vmem:[#allocation1] sm:$0xff pattern:$0x75643120] %v1209
        %v1255 = vld [vmem:[%s1215] ss:$2 sm:$0xff]
        %1257 = vst.sshfl [vmem:[#allocation1 + $0x10] sm:$0xff pattern:$0x75643120] %v1210
        %v1258 = vld [vmem:[%s1219] ss:$2 sm:$0xff]
        %1260 = vst.sshfl [vmem:[#allocation1 + $0x20] sm:$0xff pattern:$0x75643120] %v1211
        %v1261 = vld [vmem:[%s1223] ss:$2 sm:$0xff]
        %1263 = vst.sshfl [vmem:[#allocation1 + $0x30] sm:$0xff pattern:$0x75643120] %v1212
        %v1264 = vld [vmem:[%s1227] ss:$2 sm:$0xff]
        %v1265 = vld [vmem:[%s166] sm:$0xff]
        %v1266 = vld [vmem:[%s166 + $0x8] sm:$0xff]
        %v1267 = vld [vmem:[%s166 + $0x10] sm:$0xff]
        %v1268 = vld [vmem:[%s166 + $0x18] sm:$0xff]
        %v1269 = vld [vmem:[%s166 + $0x20] sm:$0xff]
        %v1270 = vld [vmem:[%s166 + $0x28] sm:$0xff]
        %v1271 = vld [vmem:[%s166 + $0x30] sm:$0xff]
        %v1272 = vld [vmem:[%s166 + $0x38] sm:$0xff]
        %s1273 = scalar_lea.vmem %s1, 384
        %v1274 = vld [vmem:[%s1273] sm:$0xf]
        %v1275 = vld [vmem:[%s1273 + $0x4] sm:$0xf]
        %v1276 = vld [vmem:[%s1273 + $0x8] sm:$0xf]
        %v1277 = vld [vmem:[%s1273 + $0xc] sm:$0xf]
        %v1278 = vld [vmem:[%s1273 + $0x10] sm:$0xf]
        %v1279 = vld [vmem:[%s1273 + $0x14] sm:$0xf]
        %v1280 = vld [vmem:[%s1273 + $0x18] sm:$0xf]
        %v1281 = vld [vmem:[%s1273 + $0x1c] sm:$0xf]
        %v1282 = vld [vmem:[%s1273 + $0x20] sm:$0xf]
        %v1283 = vld [vmem:[%s1273 + $0x24] sm:$0xf]
        %v1284 = vld [vmem:[%s1273 + $0x28] sm:$0xf]
        %v1285 = vld [vmem:[%s1273 + $0x2c] sm:$0xf]
        %v1286 = vld [vmem:[%s1273 + $0x30] sm:$0xf]
        %v1287 = vld [vmem:[%s1273 + $0x34] sm:$0xf]
        %v1288 = vld [vmem:[%s1273 + $0x38] sm:$0xf]
        %v1289 = vld [vmem:[%s1273 + $0x3c] sm:$0xf]
        %v1290 = vld [vmem:[%s1273 + $0x40] sm:$0xf]
        %v1291 = vld [vmem:[%s1273 + $0x44] sm:$0xf]
        %v1292 = vld [vmem:[%s1273 + $0x48] sm:$0xf]
        %v1293 = vld [vmem:[%s1273 + $0x4c] sm:$0xf]
        %v1294 = vld [vmem:[%s1273 + $0x50] sm:$0xf]
        %v1295 = vld [vmem:[%s1273 + $0x54] sm:$0xf]
        %v1296 = vld [vmem:[%s1273 + $0x58] sm:$0xf]
        %v1297 = vld [vmem:[%s1273 + $0x5c] sm:$0xf]
        %v1298 = vld [vmem:[%s1273 + $0x60] sm:$0xf]
        %v1299 = vld [vmem:[%s1273 + $0x64] sm:$0xf]
        %v1300 = vld [vmem:[%s1273 + $0x68] sm:$0xf]
        %v1301 = vld [vmem:[%s1273 + $0x6c] sm:$0xf]
        %v1302 = vld [vmem:[%s1273 + $0x70] sm:$0xf]
        %v1303 = vld [vmem:[%s1273 + $0x74] sm:$0xf]
        %v1304 = vld [vmem:[%s1273 + $0x78] sm:$0xf]
        %v1305 = vld [vmem:[%s1273 + $0x7c] sm:$0xf]
        %1306 = vst [vmem:[#allocation1] ss:$4 sm:$0xff] %v1216
        %s1307 = scalar_lea.vmem [#allocation1], 1
        %1308 = vst [vmem:[%s1307] ss:$4 sm:$0xff] %v1220
        %s1309 = scalar_lea.vmem [#allocation1], 2
        %1310 = vst [vmem:[%s1309] ss:$4 sm:$0xff] %v1224
        %s1311 = scalar_lea.vmem [#allocation1], 3
        %1312 = vst [vmem:[%s1311] ss:$4 sm:$0xff] %v1228
        %s1313 = scalar_lea.vmem [#allocation1], 32
        %1314 = vst [vmem:[%s1313] ss:$4 sm:$0xff] %v1231
        %s1315 = scalar_lea.vmem [#allocation1], 33
        %1316 = vst [vmem:[%s1315] ss:$4 sm:$0xff] %v1234
        %s1317 = scalar_lea.vmem [#allocation1], 34
        %1318 = vst [vmem:[%s1317] ss:$4 sm:$0xff] %v1237
        %s1319 = scalar_lea.vmem [#allocation1], 35
        %1320 = vst [vmem:[%s1319] ss:$4 sm:$0xff] %v1240
        %v1321 = vld.sshfl [vmem:[#allocation1] sm:$0xff pattern:$0x73625140]
        %v1322 = vld.sshfl [vmem:[#allocation1 + $0x8] sm:$0xff pattern:$0x73625140]
        %v1323 = vld.sshfl [vmem:[#allocation1 + $0x20] sm:$0xff pattern:$0x73625140]
        %v1324 = vld.sshfl [vmem:[#allocation1 + $0x28] sm:$0xff pattern:$0x73625140]
        %1325 = vst [vmem:[#allocation1] ss:$4 sm:$0xff] %v1243
        %1326 = vst [vmem:[%s1307] ss:$4 sm:$0xff] %v1246
        %1327 = vst [vmem:[%s1309] ss:$4 sm:$0xff] %v1249
        %1328 = vst [vmem:[%s1311] ss:$4 sm:$0xff] %v1252
        %1329 = vst [vmem:[%s1313] ss:$4 sm:$0xff] %v1255
        %1330 = vst [vmem:[%s1315] ss:$4 sm:$0xff] %v1258
        %1331 = vst [vmem:[%s1317] ss:$4 sm:$0xff] %v1261
        %1332 = vst [vmem:[%s1319] ss:$4 sm:$0xff] %v1264
        %v1333 = vld.sshfl [vmem:[#allocation1] sm:$0xff pattern:$0x73625140]
        %v1334 = vld.sshfl [vmem:[#allocation1 + $0x8] sm:$0xff pattern:$0x73625140]
        %v1335 = vld.sshfl [vmem:[#allocation1 + $0x20] sm:$0xff pattern:$0x73625140]
        %v1336 = vld.sshfl [vmem:[#allocation1 + $0x28] sm:$0xff pattern:$0x73625140]
        %v1377 = vunpack.c.l.b16 %v1274
        %v1378 = vunpack.c.l.b16 %v1275
        %v1379 = vunpack.c.l.b16 %v1276
        %v1380 = vunpack.c.l.b16 %v1277
        %v1381 = vunpack.c.l.b16 %v1278
        %v1382 = vunpack.c.l.b16 %v1279
        %v1383 = vunpack.c.l.b16 %v1280
        %v1384 = vunpack.c.l.b16 %v1281
        %v1385 = vunpack.c.l.b16 %v1282
        %v1386 = vunpack.c.l.b16 %v1283
        %v1387 = vunpack.c.l.b16 %v1284
        %v1388 = vunpack.c.l.b16 %v1285
        %v1389 = vunpack.c.l.b16 %v1286
        %v1390 = vunpack.c.l.b16 %v1287
        %v1391 = vunpack.c.l.b16 %v1288
        %v1392 = vunpack.c.l.b16 %v1289
        %v1393 = vunpack.c.l.b16 %v1290
        %v1394 = vunpack.c.l.b16 %v1291
        %v1395 = vunpack.c.l.b16 %v1292
        %v1396 = vunpack.c.l.b16 %v1293
        %v1397 = vunpack.c.l.b16 %v1294
        %v1398 = vunpack.c.l.b16 %v1295
        %v1399 = vunpack.c.l.b16 %v1296
        %v1400 = vunpack.c.l.b16 %v1297
        %v1401 = vunpack.c.l.b16 %v1298
        %v1402 = vunpack.c.l.b16 %v1299
        %v1403 = vunpack.c.l.b16 %v1300
        %v1404 = vunpack.c.l.b16 %v1301
        %v1405 = vunpack.c.l.b16 %v1302
        %v1406 = vunpack.c.l.b16 %v1303
        %v1407 = vunpack.c.l.b16 %v1304
        %v1408 = vunpack.c.l.b16 %v1305
        %v1409 = vpack.c.b16 %v1378, %v1377
        %v1410 = vpack.c.b16 %v1380, %v1379
        %v1411 = vpack.c.b16 %v1382, %v1381
        %v1412 = vpack.c.b16 %v1384, %v1383
        %v1413 = vpack.c.b16 %v1386, %v1385
        %v1414 = vpack.c.b16 %v1388, %v1387
        %v1415 = vpack.c.b16 %v1390, %v1389
        %v1416 = vpack.c.b16 %v1392, %v1391
        %v1417 = vpack.c.b16 %v1394, %v1393
        %v1418 = vpack.c.b16 %v1396, %v1395
        %v1419 = vpack.c.b16 %v1398, %v1397
        %v1420 = vpack.c.b16 %v1400, %v1399
        %v1421 = vpack.c.b16 %v1402, %v1401
        %v1422 = vpack.c.b16 %v1404, %v1403
        %v1423 = vpack.c.b16 %v1406, %v1405
        %v1424 = vpack.c.b16 %v1408, %v1407
        %1441 = vmatpush.bf16.msra.mxu0 %v1416
        %1442 = vmatpush.bf16.msra.mxu0 %v1415
        %1443 = vmatpush.bf16.msra.mxu0 %v1414
        %1444 = vmatpush.bf16.msra.mxu0 %v1413
        %1445 = vmatpush.bf16.msra.mxu0 %v1412
        %1446 = vmatpush.bf16.msra.mxu0 %v1411
        %1447 = vmatpush.bf16.msra.mxu0 %v1410
        %1448 = vmatpush.bf16.msra.mxu0 %v1409
        %1449 = vmatmul.bf16.gmra.mxu0 %v1321
        %v1450 = vpop.f32.mrf.mxu0
        %v1451 = vadd.f32 0.0, %v1450
        %v1452 = vpop.f32.mrf.mxu0
        %v1453 = vadd.f32 0.0, %v1452
        %1454 = vmatmul.bf16.gmra.mxu0 %v1323
        %v1455 = vpop.f32.mrf.mxu0
        %v1456 = vadd.f32 0.0, %v1455
        %v1457 = vpop.f32.mrf.mxu0
        %v1458 = vadd.f32 0.0, %v1457
        %1459 = vmatmul.bf16.gmra.mxu0 %v1333
        %v1460 = vpop.f32.mrf.mxu0
        %v1461 = vadd.f32 0.0, %v1460
        %v1462 = vpop.f32.mrf.mxu0
        %v1463 = vadd.f32 0.0, %v1462
        %1464 = vmatmul.bf16.gmra.mxu0 %v1335
        %v1465 = vpop.f32.mrf.mxu0
        %v1466 = vadd.f32 0.0, %v1465
        %v1467 = vpop.f32.mrf.mxu0
        %v1468 = vadd.f32 0.0, %v1467
        %1469 = vdwg.mxu0
        %1470 = vmatpush.bf16.msra.mxu0 %v1424
        %1471 = vmatpush.bf16.msra.mxu0 %v1423
        %1472 = vmatpush.bf16.msra.mxu0 %v1422
        %1473 = vmatpush.bf16.msra.mxu0 %v1421
        %1474 = vmatpush.bf16.msra.mxu0 %v1420
        %1475 = vmatpush.bf16.msra.mxu0 %v1419
        %1476 = vmatpush.bf16.msra.mxu0 %v1418
        %1477 = vmatpush.bf16.msra.mxu0 %v1417
        %1478 = vmatmul.bf16.gmra.mxu0 %v1322
        %v1479 = vpop.f32.mrf.mxu0
        %v1480 = vadd.f32 %v1451, %v1479
        %v1481 = vpop.f32.mrf.mxu0
        %v1482 = vadd.f32 %v1453, %v1481
        %1483 = vmatmul.bf16.gmra.mxu0 %v1324
        %v1484 = vpop.f32.mrf.mxu0
        %v1485 = vadd.f32 %v1456, %v1484
        %v1486 = vpop.f32.mrf.mxu0
        %v1487 = vadd.f32 %v1458, %v1486
        %1488 = vmatmul.bf16.gmra.mxu0 %v1334
        %v1489 = vpop.f32.mrf.mxu0
        %v1490 = vadd.f32 %v1461, %v1489
        %v1491 = vpop.f32.mrf.mxu0
        %v1492 = vadd.f32 %v1463, %v1491
        %1493 = vmatmul.bf16.gmra.mxu0 %v1336
        %v1494 = vpop.f32.mrf.mxu0
        %v1495 = vadd.f32 %v1466, %v1494
        %v1496 = vpop.f32.mrf.mxu0
        %v1497 = vadd.f32 %v1468, %v1496
        %1498 = vdwg.mxu0
        %v1499 = vadd.f32 %v1265, %v1480
        %v1500 = vadd.f32 %v1266, %v1482
        %v1501 = vadd.f32 %v1267, %v1485
        %v1502 = vadd.f32 %v1268, %v1487
        %v1503 = vadd.f32 %v1269, %v1490
        %v1504 = vadd.f32 %v1270, %v1492
        %v1505 = vadd.f32 %v1271, %v1495
        %v1506 = vadd.f32 %v1272, %v1497
        %1507 = vst [vmem:[%s166] sm:$0xff] %v1499
        %1508 = vst [vmem:[%s166 + $0x8] sm:$0xff] %v1500
        %1509 = vst [vmem:[%s166 + $0x10] sm:$0xff] %v1501
        %1510 = vst [vmem:[%s166 + $0x18] sm:$0xff] %v1502
        %1511 = vst [vmem:[%s166 + $0x20] sm:$0xff] %v1503
        %1512 = vst [vmem:[%s166 + $0x28] sm:$0xff] %v1504
        %1513 = vst [vmem:[%s166 + $0x30] sm:$0xff] %v1505
        %1514 = vst [vmem:[%s166 + $0x38] sm:$0xff] %v1506
        %s1515 = scalar_lea.vmem %s172, 64
        %v1516 = vld [vmem:[%s1515] sm:$0x33]
        %v1517 = vld [vmem:[%s1515 + $0x10] sm:$0x33]
        %v1518 = vld [vmem:[%s1515 + $0x20] sm:$0x33]
        %v1519 = vld [vmem:[%s1515 + $0x30] sm:$0x33]
        %v1520 = vld [vmem:[%s1515 + $0x100] sm:$0x33]
        %v1521 = vld [vmem:[%s1515 + $0x110] sm:$0x33]
        %v1522 = vld [vmem:[%s1515 + $0x120] sm:$0x33]
        %v1523 = vld [vmem:[%s1515 + $0x130] sm:$0x33]
        %v1524 = vld [vmem:[%s1515 + $0x200] sm:$0x33]
        %v1525 = vld [vmem:[%s1515 + $0x210] sm:$0x33]
        %v1526 = vld [vmem:[%s1515 + $0x220] sm:$0x33]
        %v1527 = vld [vmem:[%s1515 + $0x230] sm:$0x33]
        %v1528 = vld [vmem:[%s1515 + $0x300] sm:$0x33]
        %v1529 = vld [vmem:[%s1515 + $0x310] sm:$0x33]
        %v1530 = vld [vmem:[%s1515 + $0x320] sm:$0x33]
        %v1531 = vld [vmem:[%s1515 + $0x330] sm:$0x33]
        %v1548 = vrot.slane %v1516, 2
        %v1549 = vrot.slane %v1517, 2
        %v1550 = vrot.slane %v1518, 2
        %v1551 = vrot.slane %v1519, 2
        %v1552 = vrot.slane %v1520, 2
        %v1553 = vrot.slane %v1521, 2
        %v1554 = vrot.slane %v1522, 2
        %v1555 = vrot.slane %v1523, 2
        %v1556 = vrot.slane %v1524, 2
        %v1557 = vrot.slane %v1525, 2
        %v1558 = vrot.slane %v1526, 2
        %v1559 = vrot.slane %v1527, 2
        %v1560 = vrot.slane %v1528, 2
        %v1561 = vrot.slane %v1529, 2
        %v1562 = vrot.slane %v1530, 2
        %v1563 = vrot.slane %v1531, 2
        %v1566 = vsel %vm235, %v1516, %v1548
        %v1569 = vsel %vm235, %v1517, %v1549
        %v1572 = vsel %vm235, %v1518, %v1550
        %v1575 = vsel %vm235, %v1519, %v1551
        %v1578 = vsel %vm235, %v1520, %v1552
        %v1581 = vsel %vm235, %v1521, %v1553
        %v1584 = vsel %vm235, %v1522, %v1554
        %v1587 = vsel %vm235, %v1523, %v1555
        %v1590 = vsel %vm235, %v1524, %v1556
        %v1593 = vsel %vm235, %v1525, %v1557
        %v1596 = vsel %vm235, %v1526, %v1558
        %v1599 = vsel %vm235, %v1527, %v1559
        %v1602 = vsel %vm235, %v1528, %v1560
        %v1605 = vsel %vm235, %v1529, %v1561
        %v1608 = vsel %vm235, %v1530, %v1562
        %v1611 = vsel %vm235, %v1531, %v1563
        %v1612 = vld [vmem:[%s166] sm:$0xff]
        %v1613 = vld [vmem:[%s166 + $0x8] sm:$0xff]
        %v1614 = vld [vmem:[%s166 + $0x10] sm:$0xff]
        %v1615 = vld [vmem:[%s166 + $0x18] sm:$0xff]
        %v1616 = vld [vmem:[%s166 + $0x20] sm:$0xff]
        %v1617 = vld [vmem:[%s166 + $0x28] sm:$0xff]
        %v1618 = vld [vmem:[%s166 + $0x30] sm:$0xff]
        %v1619 = vld [vmem:[%s166 + $0x38] sm:$0xff]
        %s1620 = scalar_lea.vmem %s1, 512
        %v1621 = vld [vmem:[%s1620] sm:$0xf]
        %v1622 = vld [vmem:[%s1620 + $0x4] sm:$0xf]
        %v1623 = vld [vmem:[%s1620 + $0x8] sm:$0xf]
        %v1624 = vld [vmem:[%s1620 + $0xc] sm:$0xf]
        %v1625 = vld [vmem:[%s1620 + $0x10] sm:$0xf]
        %v1626 = vld [vmem:[%s1620 + $0x14] sm:$0xf]
        %v1627 = vld [vmem:[%s1620 + $0x18] sm:$0xf]
        %v1628 = vld [vmem:[%s1620 + $0x1c] sm:$0xf]
        %v1629 = vld [vmem:[%s1620 + $0x20] sm:$0xf]
        %v1630 = vld [vmem:[%s1620 + $0x24] sm:$0xf]
        %v1631 = vld [vmem:[%s1620 + $0x28] sm:$0xf]
        %v1632 = vld [vmem:[%s1620 + $0x2c] sm:$0xf]
        %v1633 = vld [vmem:[%s1620 + $0x30] sm:$0xf]
        %v1634 = vld [vmem:[%s1620 + $0x34] sm:$0xf]
        %v1635 = vld [vmem:[%s1620 + $0x38] sm:$0xf]
        %v1636 = vld [vmem:[%s1620 + $0x3c] sm:$0xf]
        %v1637 = vld [vmem:[%s1620 + $0x40] sm:$0xf]
        %v1638 = vld [vmem:[%s1620 + $0x44] sm:$0xf]
        %v1639 = vld [vmem:[%s1620 + $0x48] sm:$0xf]
        %v1640 = vld [vmem:[%s1620 + $0x4c] sm:$0xf]
        %v1641 = vld [vmem:[%s1620 + $0x50] sm:$0xf]
        %v1642 = vld [vmem:[%s1620 + $0x54] sm:$0xf]
        %v1643 = vld [vmem:[%s1620 + $0x58] sm:$0xf]
        %v1644 = vld [vmem:[%s1620 + $0x5c] sm:$0xf]
        %v1645 = vld [vmem:[%s1620 + $0x60] sm:$0xf]
        %v1646 = vld [vmem:[%s1620 + $0x64] sm:$0xf]
        %v1647 = vld [vmem:[%s1620 + $0x68] sm:$0xf]
        %v1648 = vld [vmem:[%s1620 + $0x6c] sm:$0xf]
        %v1649 = vld [vmem:[%s1620 + $0x70] sm:$0xf]
        %v1650 = vld [vmem:[%s1620 + $0x74] sm:$0xf]
        %v1651 = vld [vmem:[%s1620 + $0x78] sm:$0xf]
        %v1652 = vld [vmem:[%s1620 + $0x7c] sm:$0xf]
        %1653 = vst [vmem:[#allocation1] ss:$4 sm:$0xff] %v1566
        %s1654 = scalar_lea.vmem [#allocation1], 1
        %1655 = vst [vmem:[%s1654] ss:$4 sm:$0xff] %v1569
        %s1656 = scalar_lea.vmem [#allocation1], 2
        %1657 = vst [vmem:[%s1656] ss:$4 sm:$0xff] %v1572
        %s1658 = scalar_lea.vmem [#allocation1], 3
        %1659 = vst [vmem:[%s1658] ss:$4 sm:$0xff] %v1575
        %s1660 = scalar_lea.vmem [#allocation1], 32
        %1661 = vst [vmem:[%s1660] ss:$4 sm:$0xff] %v1578
        %s1662 = scalar_lea.vmem [#allocation1], 33
        %1663 = vst [vmem:[%s1662] ss:$4 sm:$0xff] %v1581
        %s1664 = scalar_lea.vmem [#allocation1], 34
        %1665 = vst [vmem:[%s1664] ss:$4 sm:$0xff] %v1584
        %s1666 = scalar_lea.vmem [#allocation1], 35
        %1667 = vst [vmem:[%s1666] ss:$4 sm:$0xff] %v1587
        %v1668 = vld.sshfl [vmem:[#allocation1] sm:$0xff pattern:$0x73625140]
        %v1669 = vld.sshfl [vmem:[#allocation1 + $0x8] sm:$0xff pattern:$0x73625140]
        %v1670 = vld.sshfl [vmem:[#allocation1 + $0x20] sm:$0xff pattern:$0x73625140]
        %v1671 = vld.sshfl [vmem:[#allocation1 + $0x28] sm:$0xff pattern:$0x73625140]
        %1672 = vst [vmem:[#allocation1] ss:$4 sm:$0xff] %v1590
        %1673 = vst [vmem:[%s1654] ss:$4 sm:$0xff] %v1593
        %1674 = vst [vmem:[%s1656] ss:$4 sm:$0xff] %v1596
        %1675 = vst [vmem:[%s1658] ss:$4 sm:$0xff] %v1599
        %1676 = vst [vmem:[%s1660] ss:$4 sm:$0xff] %v1602
        %1677 = vst [vmem:[%s1662] ss:$4 sm:$0xff] %v1605
        %1678 = vst [vmem:[%s1664] ss:$4 sm:$0xff] %v1608
        %1679 = vst [vmem:[%s1666] ss:$4 sm:$0xff] %v1611
        %v1680 = vld.sshfl [vmem:[#allocation1] sm:$0xff pattern:$0x73625140]
        %v1681 = vld.sshfl [vmem:[#allocation1 + $0x8] sm:$0xff pattern:$0x73625140]
        %v1682 = vld.sshfl [vmem:[#allocation1 + $0x20] sm:$0xff pattern:$0x73625140]
        %v1683 = vld.sshfl [vmem:[#allocation1 + $0x28] sm:$0xff pattern:$0x73625140]
        %v1724 = vunpack.c.l.b16 %v1621
        %v1725 = vunpack.c.l.b16 %v1622
        %v1726 = vunpack.c.l.b16 %v1623
        %v1727 = vunpack.c.l.b16 %v1624
        %v1728 = vunpack.c.l.b16 %v1625
        %v1729 = vunpack.c.l.b16 %v1626
        %v1730 = vunpack.c.l.b16 %v1627
        %v1731 = vunpack.c.l.b16 %v1628
        %v1732 = vunpack.c.l.b16 %v1629
        %v1733 = vunpack.c.l.b16 %v1630
        %v1734 = vunpack.c.l.b16 %v1631
        %v1735 = vunpack.c.l.b16 %v1632
        %v1736 = vunpack.c.l.b16 %v1633
        %v1737 = vunpack.c.l.b16 %v1634
        %v1738 = vunpack.c.l.b16 %v1635
        %v1739 = vunpack.c.l.b16 %v1636
        %v1740 = vunpack.c.l.b16 %v1637
        %v1741 = vunpack.c.l.b16 %v1638
        %v1742 = vunpack.c.l.b16 %v1639
        %v1743 = vunpack.c.l.b16 %v1640
        %v1744 = vunpack.c.l.b16 %v1641
        %v1745 = vunpack.c.l.b16 %v1642
        %v1746 = vunpack.c.l.b16 %v1643
        %v1747 = vunpack.c.l.b16 %v1644
        %v1748 = vunpack.c.l.b16 %v1645
        %v1749 = vunpack.c.l.b16 %v1646
        %v1750 = vunpack.c.l.b16 %v1647
        %v1751 = vunpack.c.l.b16 %v1648
        %v1752 = vunpack.c.l.b16 %v1649
        %v1753 = vunpack.c.l.b16 %v1650
        %v1754 = vunpack.c.l.b16 %v1651
        %v1755 = vunpack.c.l.b16 %v1652
        %v1756 = vpack.c.b16 %v1725, %v1724
        %v1757 = vpack.c.b16 %v1727, %v1726
        %v1758 = vpack.c.b16 %v1729, %v1728
        %v1759 = vpack.c.b16 %v1731, %v1730
        %v1760 = vpack.c.b16 %v1733, %v1732
        %v1761 = vpack.c.b16 %v1735, %v1734
        %v1762 = vpack.c.b16 %v1737, %v1736
        %v1763 = vpack.c.b16 %v1739, %v1738
        %v1764 = vpack.c.b16 %v1741, %v1740
        %v1765 = vpack.c.b16 %v1743, %v1742
        %v1766 = vpack.c.b16 %v1745, %v1744
        %v1767 = vpack.c.b16 %v1747, %v1746
        %v1768 = vpack.c.b16 %v1749, %v1748
        %v1769 = vpack.c.b16 %v1751, %v1750
        %v1770 = vpack.c.b16 %v1753, %v1752
        %v1771 = vpack.c.b16 %v1755, %v1754
        %1788 = vmatpush.bf16.msra.mxu0 %v1763
        %1789 = vmatpush.bf16.msra.mxu0 %v1762
        %1790 = vmatpush.bf16.msra.mxu0 %v1761
        %1791 = vmatpush.bf16.msra.mxu0 %v1760
        %1792 = vmatpush.bf16.msra.mxu0 %v1759
        %1793 = vmatpush.bf16.msra.mxu0 %v1758
        %1794 = vmatpush.bf16.msra.mxu0 %v1757
        %1795 = vmatpush.bf16.msra.mxu0 %v1756
        %1796 = vmatmul.bf16.gmra.mxu0 %v1668
        %v1797 = vpop.f32.mrf.mxu0
        %v1798 = vadd.f32 0.0, %v1797
        %v1799 = vpop.f32.mrf.mxu0
        %v1800 = vadd.f32 0.0, %v1799
        %1801 = vmatmul.bf16.gmra.mxu0 %v1670
        %v1802 = vpop.f32.mrf.mxu0
        %v1803 = vadd.f32 0.0, %v1802
        %v1804 = vpop.f32.mrf.mxu0
        %v1805 = vadd.f32 0.0, %v1804
        %1806 = vmatmul.bf16.gmra.mxu0 %v1680
        %v1807 = vpop.f32.mrf.mxu0
        %v1808 = vadd.f32 0.0, %v1807
        %v1809 = vpop.f32.mrf.mxu0
        %v1810 = vadd.f32 0.0, %v1809
        %1811 = vmatmul.bf16.gmra.mxu0 %v1682
        %v1812 = vpop.f32.mrf.mxu0
        %v1813 = vadd.f32 0.0, %v1812
        %v1814 = vpop.f32.mrf.mxu0
        %v1815 = vadd.f32 0.0, %v1814
        %1816 = vdwg.mxu0
        %1817 = vmatpush.bf16.msra.mxu0 %v1771
        %1818 = vmatpush.bf16.msra.mxu0 %v1770
        %1819 = vmatpush.bf16.msra.mxu0 %v1769
        %1820 = vmatpush.bf16.msra.mxu0 %v1768
        %1821 = vmatpush.bf16.msra.mxu0 %v1767
        %1822 = vmatpush.bf16.msra.mxu0 %v1766
        %1823 = vmatpush.bf16.msra.mxu0 %v1765
        %1824 = vmatpush.bf16.msra.mxu0 %v1764
        %1825 = vmatmul.bf16.gmra.mxu0 %v1669
        %v1826 = vpop.f32.mrf.mxu0
        %v1827 = vadd.f32 %v1798, %v1826
        %v1828 = vpop.f32.mrf.mxu0
        %v1829 = vadd.f32 %v1800, %v1828
        %1830 = vmatmul.bf16.gmra.mxu0 %v1671
        %v1831 = vpop.f32.mrf.mxu0
        %v1832 = vadd.f32 %v1803, %v1831
        %v1833 = vpop.f32.mrf.mxu0
        %v1834 = vadd.f32 %v1805, %v1833
        %1835 = vmatmul.bf16.gmra.mxu0 %v1681
        %v1836 = vpop.f32.mrf.mxu0
        %v1837 = vadd.f32 %v1808, %v1836
        %v1838 = vpop.f32.mrf.mxu0
        %v1839 = vadd.f32 %v1810, %v1838
        %1840 = vmatmul.bf16.gmra.mxu0 %v1683
        %v1841 = vpop.f32.mrf.mxu0
        %v1842 = vadd.f32 %v1813, %v1841
        %v1843 = vpop.f32.mrf.mxu0
        %v1844 = vadd.f32 %v1815, %v1843
        %1845 = vdwg.mxu0
        %v1846 = vadd.f32 %v1612, %v1827
        %v1847 = vadd.f32 %v1613, %v1829
        %v1848 = vadd.f32 %v1614, %v1832
        %v1849 = vadd.f32 %v1615, %v1834
        %v1850 = vadd.f32 %v1616, %v1837
        %v1851 = vadd.f32 %v1617, %v1839
        %v1852 = vadd.f32 %v1618, %v1842
        %v1853 = vadd.f32 %v1619, %v1844
        %1854 = vst [vmem:[%s166] sm:$0xff] %v1846
        %1855 = vst [vmem:[%s166 + $0x8] sm:$0xff] %v1847
        %1856 = vst [vmem:[%s166 + $0x10] sm:$0xff] %v1848
        %1857 = vst [vmem:[%s166 + $0x18] sm:$0xff] %v1849
        %1858 = vst [vmem:[%s166 + $0x20] sm:$0xff] %v1850
        %1859 = vst [vmem:[%s166 + $0x28] sm:$0xff] %v1851
        %1860 = vst [vmem:[%s166 + $0x30] sm:$0xff] %v1852
        %1861 = vst [vmem:[%s166 + $0x38] sm:$0xff] %v1853
        %v1862 = vld [vmem:[%s1515] sm:$0xcc]
        %v1863 = vld [vmem:[%s1515 + $0x10] sm:$0xcc]
        %v1864 = vld [vmem:[%s1515 + $0x20] sm:$0xcc]
        %v1865 = vld [vmem:[%s1515 + $0x30] sm:$0xcc]
        %v1866 = vld [vmem:[%s1515 + $0x100] sm:$0xcc]
        %v1867 = vld [vmem:[%s1515 + $0x110] sm:$0xcc]
        %v1868 = vld [vmem:[%s1515 + $0x120] sm:$0xcc]
        %v1869 = vld [vmem:[%s1515 + $0x130] sm:$0xcc]
        %v1870 = vld [vmem:[%s1515 + $0x200] sm:$0xcc]
        %v1871 = vld [vmem:[%s1515 + $0x210] sm:$0xcc]
        %v1872 = vld [vmem:[%s1515 + $0x220] sm:$0xcc]
        %v1873 = vld [vmem:[%s1515 + $0x230] sm:$0xcc]
        %v1874 = vld [vmem:[%s1515 + $0x300] sm:$0xcc]
        %v1875 = vld [vmem:[%s1515 + $0x310] sm:$0xcc]
        %v1876 = vld [vmem:[%s1515 + $0x320] sm:$0xcc]
        %v1877 = vld [vmem:[%s1515 + $0x330] sm:$0xcc]
        %1879 = vst.sshfl [vmem:[#allocation1] sm:$0xff pattern:$0x75643120] %v1862
        %s1880 = scalar_lea.vmem [#allocation1], 1
        %v1881 = vld [vmem:[%s1880] ss:$2 sm:$0xff]
        %1883 = vst.sshfl [vmem:[#allocation1 + $0x10] sm:$0xff pattern:$0x75643120] %v1863
        %s1884 = scalar_lea.vmem [#allocation1], 17
        %v1885 = vld [vmem:[%s1884] ss:$2 sm:$0xff]
        %1887 = vst.sshfl [vmem:[#allocation1 + $0x20] sm:$0xff pattern:$0x75643120] %v1864
        %s1888 = scalar_lea.vmem [#allocation1], 33
        %v1889 = vld [vmem:[%s1888] ss:$2 sm:$0xff]
        %1891 = vst.sshfl [vmem:[#allocation1 + $0x30] sm:$0xff pattern:$0x75643120] %v1865
        %s1892 = scalar_lea.vmem [#allocation1], 49
        %v1893 = vld [vmem:[%s1892] ss:$2 sm:$0xff]
        %1895 = vst.sshfl [vmem:[#allocation1] sm:$0xff pattern:$0x75643120] %v1866
        %v1896 = vld [vmem:[%s1880] ss:$2 sm:$0xff]
        %1898 = vst.sshfl [vmem:[#allocation1 + $0x10] sm:$0xff pattern:$0x75643120] %v1867
        %v1899 = vld [vmem:[%s1884] ss:$2 sm:$0xff]
        %1901 = vst.sshfl [vmem:[#allocation1 + $0x20] sm:$0xff pattern:$0x75643120] %v1868
        %v1902 = vld [vmem:[%s1888] ss:$2 sm:$0xff]
        %1904 = vst.sshfl [vmem:[#allocation1 + $0x30] sm:$0xff pattern:$0x75643120] %v1869
        %v1905 = vld [vmem:[%s1892] ss:$2 sm:$0xff]
        %1907 = vst.sshfl [vmem:[#allocation1] sm:$0xff pattern:$0x75643120] %v1870
        %v1908 = vld [vmem:[%s1880] ss:$2 sm:$0xff]
        %1910 = vst.sshfl [vmem:[#allocation1 + $0x10] sm:$0xff pattern:$0x75643120] %v1871
        %v1911 = vld [vmem:[%s1884] ss:$2 sm:$0xff]
        %1913 = vst.sshfl [vmem:[#allocation1 + $0x20] sm:$0xff pattern:$0x75643120] %v1872
        %v1914 = vld [vmem:[%s1888] ss:$2 sm:$0xff]
        %1916 = vst.sshfl [vmem:[#allocation1 + $0x30] sm:$0xff pattern:$0x75643120] %v1873
        %v1917 = vld [vmem:[%s1892] ss:$2 sm:$0xff]
        %1919 = vst.sshfl [vmem:[#allocation1] sm:$0xff pattern:$0x75643120] %v1874
        %v1920 = vld [vmem:[%s1880] ss:$2 sm:$0xff]
        %1922 = vst.sshfl [vmem:[#allocation1 + $0x10] sm:$0xff pattern:$0x75643120] %v1875
        %v1923 = vld [vmem:[%s1884] ss:$2 sm:$0xff]
        %1925 = vst.sshfl [vmem:[#allocation1 + $0x20] sm:$0xff pattern:$0x75643120] %v1876
        %v1926 = vld [vmem:[%s1888] ss:$2 sm:$0xff]
        %1928 = vst.sshfl [vmem:[#allocation1 + $0x30] sm:$0xff pattern:$0x75643120] %v1877
        %v1929 = vld [vmem:[%s1892] ss:$2 sm:$0xff]
        %v1930 = vld [vmem:[%s166] sm:$0xff]
        %v1931 = vld [vmem:[%s166 + $0x8] sm:$0xff]
        %v1932 = vld [vmem:[%s166 + $0x10] sm:$0xff]
        %v1933 = vld [vmem:[%s166 + $0x18] sm:$0xff]
        %v1934 = vld [vmem:[%s166 + $0x20] sm:$0xff]
        %v1935 = vld [vmem:[%s166 + $0x28] sm:$0xff]
        %v1936 = vld [vmem:[%s166 + $0x30] sm:$0xff]
        %v1937 = vld [vmem:[%s166 + $0x38] sm:$0xff]
        %s1938 = scalar_lea.vmem %s1, 640
        %v1939 = vld [vmem:[%s1938] sm:$0xf]
        %v1940 = vld [vmem:[%s1938 + $0x4] sm:$0xf]
        %v1941 = vld [vmem:[%s1938 + $0x8] sm:$0xf]
        %v1942 = vld [vmem:[%s1938 + $0xc] sm:$0xf]
        %v1943 = vld [vmem:[%s1938 + $0x10] sm:$0xf]
        %v1944 = vld [vmem:[%s1938 + $0x14] sm:$0xf]
        %v1945 = vld [vmem:[%s1938 + $0x18] sm:$0xf]
        %v1946 = vld [vmem:[%s1938 + $0x1c] sm:$0xf]
        %v1947 = vld [vmem:[%s1938 + $0x20] sm:$0xf]
        %v1948 = vld [vmem:[%s1938 + $0x24] sm:$0xf]
        %v1949 = vld [vmem:[%s1938 + $0x28] sm:$0xf]
        %v1950 = vld [vmem:[%s1938 + $0x2c] sm:$0xf]
        %v1951 = vld [vmem:[%s1938 + $0x30] sm:$0xf]
        %v1952 = vld [vmem:[%s1938 + $0x34] sm:$0xf]
        %v1953 = vld [vmem:[%s1938 + $0x38] sm:$0xf]
        %v1954 = vld [vmem:[%s1938 + $0x3c] sm:$0xf]
        %v1955 = vld [vmem:[%s1938 + $0x40] sm:$0xf]
        %v1956 = vld [vmem:[%s1938 + $0x44] sm:$0xf]
        %v1957 = vld [vmem:[%s1938 + $0x48] sm:$0xf]
        %v1958 = vld [vmem:[%s1938 + $0x4c] sm:$0xf]
        %v1959 = vld [vmem:[%s1938 + $0x50] sm:$0xf]
        %v1960 = vld [vmem:[%s1938 + $0x54] sm:$0xf]
        %v1961 = vld [vmem:[%s1938 + $0x58] sm:$0xf]
        %v1962 = vld [vmem:[%s1938 + $0x5c] sm:$0xf]
        %v1963 = vld [vmem:[%s1938 + $0x60] sm:$0xf]
        %v1964 = vld [vmem:[%s1938 + $0x64] sm:$0xf]
        %v1965 = vld [vmem:[%s1938 + $0x68] sm:$0xf]
        %v1966 = vld [vmem:[%s1938 + $0x6c] sm:$0xf]
        %v1967 = vld [vmem:[%s1938 + $0x70] sm:$0xf]
        %v1968 = vld [vmem:[%s1938 + $0x74] sm:$0xf]
        %v1969 = vld [vmem:[%s1938 + $0x78] sm:$0xf]
        %v1970 = vld [vmem:[%s1938 + $0x7c] sm:$0xf]
        %1971 = vst [vmem:[#allocation1] ss:$4 sm:$0xff] %v1881
        %s1972 = scalar_lea.vmem [#allocation1], 1
        %1973 = vst [vmem:[%s1972] ss:$4 sm:$0xff] %v1885
        %s1974 = scalar_lea.vmem [#allocation1], 2
        %1975 = vst [vmem:[%s1974] ss:$4 sm:$0xff] %v1889
        %s1976 = scalar_lea.vmem [#allocation1], 3
        %1977 = vst [vmem:[%s1976] ss:$4 sm:$0xff] %v1893
        %s1978 = scalar_lea.vmem [#allocation1], 32
        %1979 = vst [vmem:[%s1978] ss:$4 sm:$0xff] %v1896
        %s1980 = scalar_lea.vmem [#allocation1], 33
        %1981 = vst [vmem:[%s1980] ss:$4 sm:$0xff] %v1899
        %s1982 = scalar_lea.vmem [#allocation1], 34
        %1983 = vst [vmem:[%s1982] ss:$4 sm:$0xff] %v1902
        %s1984 = scalar_lea.vmem [#allocation1], 35
        %1985 = vst [vmem:[%s1984] ss:$4 sm:$0xff] %v1905
        %v1986 = vld.sshfl [vmem:[#allocation1] sm:$0xff pattern:$0x73625140]
        %v1987 = vld.sshfl [vmem:[#allocation1 + $0x8] sm:$0xff pattern:$0x73625140]
        %v1988 = vld.sshfl [vmem:[#allocation1 + $0x20] sm:$0xff pattern:$0x73625140]
        %v1989 = vld.sshfl [vmem:[#allocation1 + $0x28] sm:$0xff pattern:$0x73625140]
        %1990 = vst [vmem:[#allocation1] ss:$4 sm:$0xff] %v1908
        %1991 = vst [vmem:[%s1972] ss:$4 sm:$0xff] %v1911
        %1992 = vst [vmem:[%s1974] ss:$4 sm:$0xff] %v1914
        %1993 = vst [vmem:[%s1976] ss:$4 sm:$0xff] %v1917
        %1994 = vst [vmem:[%s1978] ss:$4 sm:$0xff] %v1920
        %1995 = vst [vmem:[%s1980] ss:$4 sm:$0xff] %v1923
        %1996 = vst [vmem:[%s1982] ss:$4 sm:$0xff] %v1926
        %1997 = vst [vmem:[%s1984] ss:$4 sm:$0xff] %v1929
        %v1998 = vld.sshfl [vmem:[#allocation1] sm:$0xff pattern:$0x73625140]
        %v1999 = vld.sshfl [vmem:[#allocation1 + $0x8] sm:$0xff pattern:$0x73625140]
        %v2000 = vld.sshfl [vmem:[#allocation1 + $0x20] sm:$0xff pattern:$0x73625140]
        %v2001 = vld.sshfl [vmem:[#allocation1 + $0x28] sm:$0xff pattern:$0x73625140]
        %v2042 = vunpack.c.l.b16 %v1939
        %v2043 = vunpack.c.l.b16 %v1940
        %v2044 = vunpack.c.l.b16 %v1941
        %v2045 = vunpack.c.l.b16 %v1942
        %v2046 = vunpack.c.l.b16 %v1943
        %v2047 = vunpack.c.l.b16 %v1944
        %v2048 = vunpack.c.l.b16 %v1945
        %v2049 = vunpack.c.l.b16 %v1946
        %v2050 = vunpack.c.l.b16 %v1947
        %v2051 = vunpack.c.l.b16 %v1948
        %v2052 = vunpack.c.l.b16 %v1949
        %v2053 = vunpack.c.l.b16 %v1950
        %v2054 = vunpack.c.l.b16 %v1951
        %v2055 = vunpack.c.l.b16 %v1952
        %v2056 = vunpack.c.l.b16 %v1953
        %v2057 = vunpack.c.l.b16 %v1954
        %v2058 = vunpack.c.l.b16 %v1955
        %v2059 = vunpack.c.l.b16 %v1956
        %v2060 = vunpack.c.l.b16 %v1957
        %v2061 = vunpack.c.l.b16 %v1958
        %v2062 = vunpack.c.l.b16 %v1959
        %v2063 = vunpack.c.l.b16 %v1960
        %v2064 = vunpack.c.l.b16 %v1961
        %v2065 = vunpack.c.l.b16 %v1962
        %v2066 = vunpack.c.l.b16 %v1963
        %v2067 = vunpack.c.l.b16 %v1964
        %v2068 = vunpack.c.l.b16 %v1965
        %v2069 = vunpack.c.l.b16 %v1966
        %v2070 = vunpack.c.l.b16 %v1967
        %v2071 = vunpack.c.l.b16 %v1968
        %v2072 = vunpack.c.l.b16 %v1969
        %v2073 = vunpack.c.l.b16 %v1970
        %v2074 = vpack.c.b16 %v2043, %v2042
        %v2075 = vpack.c.b16 %v2045, %v2044
        %v2076 = vpack.c.b16 %v2047, %v2046
        %v2077 = vpack.c.b16 %v2049, %v2048
        %v2078 = vpack.c.b16 %v2051, %v2050
        %v2079 = vpack.c.b16 %v2053, %v2052
        %v2080 = vpack.c.b16 %v2055, %v2054
        %v2081 = vpack.c.b16 %v2057, %v2056
        %v2082 = vpack.c.b16 %v2059, %v2058
        %v2083 = vpack.c.b16 %v2061, %v2060
        %v2084 = vpack.c.b16 %v2063, %v2062
        %v2085 = vpack.c.b16 %v2065, %v2064
        %v2086 = vpack.c.b16 %v2067, %v2066
        %v2087 = vpack.c.b16 %v2069, %v2068
        %v2088 = vpack.c.b16 %v2071, %v2070
        %v2089 = vpack.c.b16 %v2073, %v2072
        %2106 = vmatpush.bf16.msra.mxu0 %v2081
        %2107 = vmatpush.bf16.msra.mxu0 %v2080
        %2108 = vmatpush.bf16.msra.mxu0 %v2079
        %2109 = vmatpush.bf16.msra.mxu0 %v2078
        %2110 = vmatpush.bf16.msra.mxu0 %v2077
        %2111 = vmatpush.bf16.msra.mxu0 %v2076
        %2112 = vmatpush.bf16.msra.mxu0 %v2075
        %2113 = vmatpush.bf16.msra.mxu0 %v2074
        %2114 = vmatmul.bf16.gmra.mxu0 %v1986
        %v2115 = vpop.f32.mrf.mxu0
        %v2116 = vadd.f32 0.0, %v2115
        %v2117 = vpop.f32.mrf.mxu0
        %v2118 = vadd.f32 0.0, %v2117
        %2119 = vmatmul.bf16.gmra.mxu0 %v1988
        %v2120 = vpop.f32.mrf.mxu0
        %v2121 = vadd.f32 0.0, %v2120
        %v2122 = vpop.f32.mrf.mxu0
        %v2123 = vadd.f32 0.0, %v2122
        %2124 = vmatmul.bf16.gmra.mxu0 %v1998
        %v2125 = vpop.f32.mrf.mxu0
        %v2126 = vadd.f32 0.0, %v2125
        %v2127 = vpop.f32.mrf.mxu0
        %v2128 = vadd.f32 0.0, %v2127
        %2129 = vmatmul.bf16.gmra.mxu0 %v2000
        %v2130 = vpop.f32.mrf.mxu0
        %v2131 = vadd.f32 0.0, %v2130
        %v2132 = vpop.f32.mrf.mxu0
        %v2133 = vadd.f32 0.0, %v2132
        %2134 = vdwg.mxu0
        %2135 = vmatpush.bf16.msra.mxu0 %v2089
        %2136 = vmatpush.bf16.msra.mxu0 %v2088
        %2137 = vmatpush.bf16.msra.mxu0 %v2087
        %2138 = vmatpush.bf16.msra.mxu0 %v2086
        %2139 = vmatpush.bf16.msra.mxu0 %v2085
        %2140 = vmatpush.bf16.msra.mxu0 %v2084
        %2141 = vmatpush.bf16.msra.mxu0 %v2083
        %2142 = vmatpush.bf16.msra.mxu0 %v2082
        %2143 = vmatmul.bf16.gmra.mxu0 %v1987
        %v2144 = vpop.f32.mrf.mxu0
        %v2145 = vadd.f32 %v2116, %v2144
        %v2146 = vpop.f32.mrf.mxu0
        %v2147 = vadd.f32 %v2118, %v2146
        %2148 = vmatmul.bf16.gmra.mxu0 %v1989
        %v2149 = vpop.f32.mrf.mxu0
        %v2150 = vadd.f32 %v2121, %v2149
        %v2151 = vpop.f32.mrf.mxu0
        %v2152 = vadd.f32 %v2123, %v2151
        %2153 = vmatmul.bf16.gmra.mxu0 %v1999
        %v2154 = vpop.f32.mrf.mxu0
        %v2155 = vadd.f32 %v2126, %v2154
        %v2156 = vpop.f32.mrf.mxu0
        %v2157 = vadd.f32 %v2128, %v2156
        %2158 = vmatmul.bf16.gmra.mxu0 %v2001
        %v2159 = vpop.f32.mrf.mxu0
        %v2160 = vadd.f32 %v2131, %v2159
        %v2161 = vpop.f32.mrf.mxu0
        %v2162 = vadd.f32 %v2133, %v2161
        %2163 = vdwg.mxu0
        %v2164 = vadd.f32 %v1930, %v2145
        %v2165 = vadd.f32 %v1931, %v2147
        %v2166 = vadd.f32 %v1932, %v2150
        %v2167 = vadd.f32 %v1933, %v2152
        %v2168 = vadd.f32 %v1934, %v2155
        %v2169 = vadd.f32 %v1935, %v2157
        %v2170 = vadd.f32 %v1936, %v2160
        %v2171 = vadd.f32 %v1937, %v2162
        %2172 = vst [vmem:[%s166] sm:$0xff] %v2164
        %2173 = vst [vmem:[%s166 + $0x8] sm:$0xff] %v2165
        %2174 = vst [vmem:[%s166 + $0x10] sm:$0xff] %v2166
        %2175 = vst [vmem:[%s166 + $0x18] sm:$0xff] %v2167
        %2176 = vst [vmem:[%s166 + $0x20] sm:$0xff] %v2168
        %2177 = vst [vmem:[%s166 + $0x28] sm:$0xff] %v2169
        %2178 = vst [vmem:[%s166 + $0x30] sm:$0xff] %v2170
        %2179 = vst [vmem:[%s166 + $0x38] sm:$0xff] %v2171
        %v2180 = vld [vmem:[%s1515 + $0x8] sm:$0x33]
        %v2181 = vld [vmem:[%s1515 + $0x18] sm:$0x33]
        %v2182 = vld [vmem:[%s1515 + $0x28] sm:$0x33]
        %v2183 = vld [vmem:[%s1515 + $0x38] sm:$0x33]
        %v2184 = vld [vmem:[%s1515 + $0x108] sm:$0x33]
        %v2185 = vld [vmem:[%s1515 + $0x118] sm:$0x33]
        %v2186 = vld [vmem:[%s1515 + $0x128] sm:$0x33]
        %v2187 = vld [vmem:[%s1515 + $0x138] sm:$0x33]
        %v2188 = vld [vmem:[%s1515 + $0x208] sm:$0x33]
        %v2189 = vld [vmem:[%s1515 + $0x218] sm:$0x33]
        %v2190 = vld [vmem:[%s1515 + $0x228] sm:$0x33]
        %v2191 = vld [vmem:[%s1515 + $0x238] sm:$0x33]
        %v2192 = vld [vmem:[%s1515 + $0x308] sm:$0x33]
        %v2193 = vld [vmem:[%s1515 + $0x318] sm:$0x33]
        %v2194 = vld [vmem:[%s1515 + $0x328] sm:$0x33]
        %v2195 = vld [vmem:[%s1515 + $0x338] sm:$0x33]
        %v2212 = vrot.slane %v2180, 2
        %v2213 = vrot.slane %v2181, 2
        %v2214 = vrot.slane %v2182, 2
        %v2215 = vrot.slane %v2183, 2
        %v2216 = vrot.slane %v2184, 2
        %v2217 = vrot.slane %v2185, 2
        %v2218 = vrot.slane %v2186, 2
        %v2219 = vrot.slane %v2187, 2
        %v2220 = vrot.slane %v2188, 2
        %v2221 = vrot.slane %v2189, 2
        %v2222 = vrot.slane %v2190, 2
        %v2223 = vrot.slane %v2191, 2
        %v2224 = vrot.slane %v2192, 2
        %v2225 = vrot.slane %v2193, 2
        %v2226 = vrot.slane %v2194, 2
        %v2227 = vrot.slane %v2195, 2
        %v2230 = vsel %vm235, %v2180, %v2212
        %v2233 = vsel %vm235, %v2181, %v2213
        %v2236 = vsel %vm235, %v2182, %v2214
        %v2239 = vsel %vm235, %v2183, %v2215
        %v2242 = vsel %vm235, %v2184, %v2216
        %v2245 = vsel %vm235, %v2185, %v2217
        %v2248 = vsel %vm235, %v2186, %v2218
        %v2251 = vsel %vm235, %v2187, %v2219
        %v2254 = vsel %vm235, %v2188, %v2220
        %v2257 = vsel %vm235, %v2189, %v2221
        %v2260 = vsel %vm235, %v2190, %v2222
        %v2263 = vsel %vm235, %v2191, %v2223
        %v2266 = vsel %vm235, %v2192, %v2224
        %v2269 = vsel %vm235, %v2193, %v2225
        %v2272 = vsel %vm235, %v2194, %v2226
        %v2275 = vsel %vm235, %v2195, %v2227
        %v2276 = vld [vmem:[%s166] sm:$0xff]
        %v2277 = vld [vmem:[%s166 + $0x8] sm:$0xff]
        %v2278 = vld [vmem:[%s166 + $0x10] sm:$0xff]
        %v2279 = vld [vmem:[%s166 + $0x18] sm:$0xff]
        %v2280 = vld [vmem:[%s166 + $0x20] sm:$0xff]
        %v2281 = vld [vmem:[%s166 + $0x28] sm:$0xff]
        %v2282 = vld [vmem:[%s166 + $0x30] sm:$0xff]
        %v2283 = vld [vmem:[%s166 + $0x38] sm:$0xff]
        %s2284 = scalar_lea.vmem %s1, 768
        %v2285 = vld [vmem:[%s2284] sm:$0xf]
        %v2286 = vld [vmem:[%s2284 + $0x4] sm:$0xf]
        %v2287 = vld [vmem:[%s2284 + $0x8] sm:$0xf]
        %v2288 = vld [vmem:[%s2284 + $0xc] sm:$0xf]
        %v2289 = vld [vmem:[%s2284 + $0x10] sm:$0xf]
        %v2290 = vld [vmem:[%s2284 + $0x14] sm:$0xf]
        %v2291 = vld [vmem:[%s2284 + $0x18] sm:$0xf]
        %v2292 = vld [vmem:[%s2284 + $0x1c] sm:$0xf]
        %v2293 = vld [vmem:[%s2284 + $0x20] sm:$0xf]
        %v2294 = vld [vmem:[%s2284 + $0x24] sm:$0xf]
        %v2295 = vld [vmem:[%s2284 + $0x28] sm:$0xf]
        %v2296 = vld [vmem:[%s2284 + $0x2c] sm:$0xf]
        %v2297 = vld [vmem:[%s2284 + $0x30] sm:$0xf]
        %v2298 = vld [vmem:[%s2284 + $0x34] sm:$0xf]
        %v2299 = vld [vmem:[%s2284 + $0x38] sm:$0xf]
        %v2300 = vld [vmem:[%s2284 + $0x3c] sm:$0xf]
        %v2301 = vld [vmem:[%s2284 + $0x40] sm:$0xf]
        %v2302 = vld [vmem:[%s2284 + $0x44] sm:$0xf]
        %v2303 = vld [vmem:[%s2284 + $0x48] sm:$0xf]
        %v2304 = vld [vmem:[%s2284 + $0x4c] sm:$0xf]
        %v2305 = vld [vmem:[%s2284 + $0x50] sm:$0xf]
        %v2306 = vld [vmem:[%s2284 + $0x54] sm:$0xf]
        %v2307 = vld [vmem:[%s2284 + $0x58] sm:$0xf]
        %v2308 = vld [vmem:[%s2284 + $0x5c] sm:$0xf]
        %v2309 = vld [vmem:[%s2284 + $0x60] sm:$0xf]
        %v2310 = vld [vmem:[%s2284 + $0x64] sm:$0xf]
        %v2311 = vld [vmem:[%s2284 + $0x68] sm:$0xf]
        %v2312 = vld [vmem:[%s2284 + $0x6c] sm:$0xf]
        %v2313 = vld [vmem:[%s2284 + $0x70] sm:$0xf]
        %v2314 = vld [vmem:[%s2284 + $0x74] sm:$0xf]
        %v2315 = vld [vmem:[%s2284 + $0x78] sm:$0xf]
        %v2316 = vld [vmem:[%s2284 + $0x7c] sm:$0xf]
        %2317 = vst [vmem:[#allocation1] ss:$4 sm:$0xff] %v2230
        %s2318 = scalar_lea.vmem [#allocation1], 1
        %2319 = vst [vmem:[%s2318] ss:$4 sm:$0xff] %v2233
        %s2320 = scalar_lea.vmem [#allocation1], 2
        %2321 = vst [vmem:[%s2320] ss:$4 sm:$0xff] %v2236
        %s2322 = scalar_lea.vmem [#allocation1], 3
        %2323 = vst [vmem:[%s2322] ss:$4 sm:$0xff] %v2239
        %s2324 = scalar_lea.vmem [#allocation1], 32
        %2325 = vst [vmem:[%s2324] ss:$4 sm:$0xff] %v2242
        %s2326 = scalar_lea.vmem [#allocation1], 33
        %2327 = vst [vmem:[%s2326] ss:$4 sm:$0xff] %v2245
        %s2328 = scalar_lea.vmem [#allocation1], 34
        %2329 = vst [vmem:[%s2328] ss:$4 sm:$0xff] %v2248
        %s2330 = scalar_lea.vmem [#allocation1], 35
        %2331 = vst [vmem:[%s2330] ss:$4 sm:$0xff] %v2251
        %v2332 = vld.sshfl [vmem:[#allocation1] sm:$0xff pattern:$0x73625140]
        %v2333 = vld.sshfl [vmem:[#allocation1 + $0x8] sm:$0xff pattern:$0x73625140]
        %v2334 = vld.sshfl [vmem:[#allocation1 + $0x20] sm:$0xff pattern:$0x73625140]
        %v2335 = vld.sshfl [vmem:[#allocation1 + $0x28] sm:$0xff pattern:$0x73625140]
        %2336 = vst [vmem:[#allocation1] ss:$4 sm:$0xff] %v2254
        %2337 = vst [vmem:[%s2318] ss:$4 sm:$0xff] %v2257
        %2338 = vst [vmem:[%s2320] ss:$4 sm:$0xff] %v2260
        %2339 = vst [vmem:[%s2322] ss:$4 sm:$0xff] %v2263
        %2340 = vst [vmem:[%s2324] ss:$4 sm:$0xff] %v2266
        %2341 = vst [vmem:[%s2326] ss:$4 sm:$0xff] %v2269
        %2342 = vst [vmem:[%s2328] ss:$4 sm:$0xff] %v2272
        %2343 = vst [vmem:[%s2330] ss:$4 sm:$0xff] %v2275
        %v2344 = vld.sshfl [vmem:[#allocation1] sm:$0xff pattern:$0x73625140]
        %v2345 = vld.sshfl [vmem:[#allocation1 + $0x8] sm:$0xff pattern:$0x73625140]
        %v2346 = vld.sshfl [vmem:[#allocation1 + $0x20] sm:$0xff pattern:$0x73625140]
        %v2347 = vld.sshfl [vmem:[#allocation1 + $0x28] sm:$0xff pattern:$0x73625140]
        %v2388 = vunpack.c.l.b16 %v2285
        %v2389 = vunpack.c.l.b16 %v2286
        %v2390 = vunpack.c.l.b16 %v2287
        %v2391 = vunpack.c.l.b16 %v2288
        %v2392 = vunpack.c.l.b16 %v2289
        %v2393 = vunpack.c.l.b16 %v2290
        %v2394 = vunpack.c.l.b16 %v2291
        %v2395 = vunpack.c.l.b16 %v2292
        %v2396 = vunpack.c.l.b16 %v2293
        %v2397 = vunpack.c.l.b16 %v2294
        %v2398 = vunpack.c.l.b16 %v2295
        %v2399 = vunpack.c.l.b16 %v2296
        %v2400 = vunpack.c.l.b16 %v2297
        %v2401 = vunpack.c.l.b16 %v2298
        %v2402 = vunpack.c.l.b16 %v2299
        %v2403 = vunpack.c.l.b16 %v2300
        %v2404 = vunpack.c.l.b16 %v2301
        %v2405 = vunpack.c.l.b16 %v2302
        %v2406 = vunpack.c.l.b16 %v2303
        %v2407 = vunpack.c.l.b16 %v2304
        %v2408 = vunpack.c.l.b16 %v2305
        %v2409 = vunpack.c.l.b16 %v2306
        %v2410 = vunpack.c.l.b16 %v2307
        %v2411 = vunpack.c.l.b16 %v2308
        %v2412 = vunpack.c.l.b16 %v2309
        %v2413 = vunpack.c.l.b16 %v2310
        %v2414 = vunpack.c.l.b16 %v2311
        %v2415 = vunpack.c.l.b16 %v2312
        %v2416 = vunpack.c.l.b16 %v2313
        %v2417 = vunpack.c.l.b16 %v2314
        %v2418 = vunpack.c.l.b16 %v2315
        %v2419 = vunpack.c.l.b16 %v2316
        %v2420 = vpack.c.b16 %v2389, %v2388
        %v2421 = vpack.c.b16 %v2391, %v2390
        %v2422 = vpack.c.b16 %v2393, %v2392
        %v2423 = vpack.c.b16 %v2395, %v2394
        %v2424 = vpack.c.b16 %v2397, %v2396
        %v2425 = vpack.c.b16 %v2399, %v2398
        %v2426 = vpack.c.b16 %v2401, %v2400
        %v2427 = vpack.c.b16 %v2403, %v2402
        %v2428 = vpack.c.b16 %v2405, %v2404
        %v2429 = vpack.c.b16 %v2407, %v2406
        %v2430 = vpack.c.b16 %v2409, %v2408
        %v2431 = vpack.c.b16 %v2411, %v2410
        %v2432 = vpack.c.b16 %v2413, %v2412
        %v2433 = vpack.c.b16 %v2415, %v2414
        %v2434 = vpack.c.b16 %v2417, %v2416
        %v2435 = vpack.c.b16 %v2419, %v2418
        %2452 = vmatpush.bf16.msra.mxu0 %v2427
        %2453 = vmatpush.bf16.msra.mxu0 %v2426
        %2454 = vmatpush.bf16.msra.mxu0 %v2425
        %2455 = vmatpush.bf16.msra.mxu0 %v2424
        %2456 = vmatpush.bf16.msra.mxu0 %v2423
        %2457 = vmatpush.bf16.msra.mxu0 %v2422
        %2458 = vmatpush.bf16.msra.mxu0 %v2421
        %2459 = vmatpush.bf16.msra.mxu0 %v2420
        %2460 = vmatmul.bf16.gmra.mxu0 %v2332
        %v2461 = vpop.f32.mrf.mxu0
        %v2462 = vadd.f32 0.0, %v2461
        %v2463 = vpop.f32.mrf.mxu0
        %v2464 = vadd.f32 0.0, %v2463
        %2465 = vmatmul.bf16.gmra.mxu0 %v2334
        %v2466 = vpop.f32.mrf.mxu0
        %v2467 = vadd.f32 0.0, %v2466
        %v2468 = vpop.f32.mrf.mxu0
        %v2469 = vadd.f32 0.0, %v2468
        %2470 = vmatmul.bf16.gmra.mxu0 %v2344
        %v2471 = vpop.f32.mrf.mxu0
        %v2472 = vadd.f32 0.0, %v2471
        %v2473 = vpop.f32.mrf.mxu0
        %v2474 = vadd.f32 0.0, %v2473
        %2475 = vmatmul.bf16.gmra.mxu0 %v2346
        %v2476 = vpop.f32.mrf.mxu0
        %v2477 = vadd.f32 0.0, %v2476
        %v2478 = vpop.f32.mrf.mxu0
        %v2479 = vadd.f32 0.0, %v2478
        %2480 = vdwg.mxu0
        %2481 = vmatpush.bf16.msra.mxu0 %v2435
        %2482 = vmatpush.bf16.msra.mxu0 %v2434
        %2483 = vmatpush.bf16.msra.mxu0 %v2433
        %2484 = vmatpush.bf16.msra.mxu0 %v2432
        %2485 = vmatpush.bf16.msra.mxu0 %v2431
        %2486 = vmatpush.bf16.msra.mxu0 %v2430
        %2487 = vmatpush.bf16.msra.mxu0 %v2429
        %2488 = vmatpush.bf16.msra.mxu0 %v2428
        %2489 = vmatmul.bf16.gmra.mxu0 %v2333
        %v2490 = vpop.f32.mrf.mxu0
        %v2491 = vadd.f32 %v2462, %v2490
        %v2492 = vpop.f32.mrf.mxu0
        %v2493 = vadd.f32 %v2464, %v2492
        %2494 = vmatmul.bf16.gmra.mxu0 %v2335
        %v2495 = vpop.f32.mrf.mxu0
        %v2496 = vadd.f32 %v2467, %v2495
        %v2497 = vpop.f32.mrf.mxu0
        %v2498 = vadd.f32 %v2469, %v2497
        %2499 = vmatmul.bf16.gmra.mxu0 %v2345
        %v2500 = vpop.f32.mrf.mxu0
        %v2501 = vadd.f32 %v2472, %v2500
        %v2502 = vpop.f32.mrf.mxu0
        %v2503 = vadd.f32 %v2474, %v2502
        %2504 = vmatmul.bf16.gmra.mxu0 %v2347
        %v2505 = vpop.f32.mrf.mxu0
        %v2506 = vadd.f32 %v2477, %v2505
        %v2507 = vpop.f32.mrf.mxu0
        %v2508 = vadd.f32 %v2479, %v2507
        %2509 = vdwg.mxu0
        %v2510 = vadd.f32 %v2276, %v2491
        %v2511 = vadd.f32 %v2277, %v2493
        %v2512 = vadd.f32 %v2278, %v2496
        %v2513 = vadd.f32 %v2279, %v2498
        %v2514 = vadd.f32 %v2280, %v2501
        %v2515 = vadd.f32 %v2281, %v2503
        %v2516 = vadd.f32 %v2282, %v2506
        %v2517 = vadd.f32 %v2283, %v2508
        %2518 = vst [vmem:[%s166] sm:$0xff] %v2510
        %2519 = vst [vmem:[%s166 + $0x8] sm:$0xff] %v2511
        %2520 = vst [vmem:[%s166 + $0x10] sm:$0xff] %v2512
        %2521 = vst [vmem:[%s166 + $0x18] sm:$0xff] %v2513
        %2522 = vst [vmem:[%s166 + $0x20] sm:$0xff] %v2514
        %2523 = vst [vmem:[%s166 + $0x28] sm:$0xff] %v2515
        %2524 = vst [vmem:[%s166 + $0x30] sm:$0xff] %v2516
        %2525 = vst [vmem:[%s166 + $0x38] sm:$0xff] %v2517
        %v2526 = vld [vmem:[%s1515 + $0x8] sm:$0xcc]
        %v2527 = vld [vmem:[%s1515 + $0x18] sm:$0xcc]
        %v2528 = vld [vmem:[%s1515 + $0x28] sm:$0xcc]
        %v2529 = vld [vmem:[%s1515 + $0x38] sm:$0xcc]
        %v2530 = vld [vmem:[%s1515 + $0x108] sm:$0xcc]
        %v2531 = vld [vmem:[%s1515 + $0x118] sm:$0xcc]
        %v2532 = vld [vmem:[%s1515 + $0x128] sm:$0xcc]
        %v2533 = vld [vmem:[%s1515 + $0x138] sm:$0xcc]
        %v2534 = vld [vmem:[%s1515 + $0x208] sm:$0xcc]
        %v2535 = vld [vmem:[%s1515 + $0x218] sm:$0xcc]
        %v2536 = vld [vmem:[%s1515 + $0x228] sm:$0xcc]
        %v2537 = vld [vmem:[%s1515 + $0x238] sm:$0xcc]
        %v2538 = vld [vmem:[%s1515 + $0x308] sm:$0xcc]
        %v2539 = vld [vmem:[%s1515 + $0x318] sm:$0xcc]
        %v2540 = vld [vmem:[%s1515 + $0x328] sm:$0xcc]
        %v2541 = vld [vmem:[%s1515 + $0x338] sm:$0xcc]
        %2543 = vst.sshfl [vmem:[#allocation1] sm:$0xff pattern:$0x75643120] %v2526
        %s2544 = scalar_lea.vmem [#allocation1], 1
        %v2545 = vld [vmem:[%s2544] ss:$2 sm:$0xff]
        %2547 = vst.sshfl [vmem:[#allocation1 + $0x10] sm:$0xff pattern:$0x75643120] %v2527
        %s2548 = scalar_lea.vmem [#allocation1], 17
        %v2549 = vld [vmem:[%s2548] ss:$2 sm:$0xff]
        %2551 = vst.sshfl [vmem:[#allocation1 + $0x20] sm:$0xff pattern:$0x75643120] %v2528
        %s2552 = scalar_lea.vmem [#allocation1], 33
        %v2553 = vld [vmem:[%s2552] ss:$2 sm:$0xff]
        %2555 = vst.sshfl [vmem:[#allocation1 + $0x30] sm:$0xff pattern:$0x75643120] %v2529
        %s2556 = scalar_lea.vmem [#allocation1], 49
        %v2557 = vld [vmem:[%s2556] ss:$2 sm:$0xff]
        %2559 = vst.sshfl [vmem:[#allocation1] sm:$0xff pattern:$0x75643120] %v2530
        %v2560 = vld [vmem:[%s2544] ss:$2 sm:$0xff]
        %2562 = vst.sshfl [vmem:[#allocation1 + $0x10] sm:$0xff pattern:$0x75643120] %v2531
        %v2563 = vld [vmem:[%s2548] ss:$2 sm:$0xff]
        %2565 = vst.sshfl [vmem:[#allocation1 + $0x20] sm:$0xff pattern:$0x75643120] %v2532
        %v2566 = vld [vmem:[%s2552] ss:$2 sm:$0xff]
        %2568 = vst.sshfl [vmem:[#allocation1 + $0x30] sm:$0xff pattern:$0x75643120] %v2533
        %v2569 = vld [vmem:[%s2556] ss:$2 sm:$0xff]
        %2571 = vst.sshfl [vmem:[#allocation1] sm:$0xff pattern:$0x75643120] %v2534
        %v2572 = vld [vmem:[%s2544] ss:$2 sm:$0xff]
        %2574 = vst.sshfl [vmem:[#allocation1 + $0x10] sm:$0xff pattern:$0x75643120] %v2535
        %v2575 = vld [vmem:[%s2548] ss:$2 sm:$0xff]
        %2577 = vst.sshfl [vmem:[#allocation1 + $0x20] sm:$0xff pattern:$0x75643120] %v2536
        %v2578 = vld [vmem:[%s2552] ss:$2 sm:$0xff]
        %2580 = vst.sshfl [vmem:[#allocation1 + $0x30] sm:$0xff pattern:$0x75643120] %v2537
        %v2581 = vld [vmem:[%s2556] ss:$2 sm:$0xff]
        %2583 = vst.sshfl [vmem:[#allocation1] sm:$0xff pattern:$0x75643120] %v2538
        %v2584 = vld [vmem:[%s2544] ss:$2 sm:$0xff]
        %2586 = vst.sshfl [vmem:[#allocation1 + $0x10] sm:$0xff pattern:$0x75643120] %v2539
        %v2587 = vld [vmem:[%s2548] ss:$2 sm:$0xff]
        %2589 = vst.sshfl [vmem:[#allocation1 + $0x20] sm:$0xff pattern:$0x75643120] %v2540
        %v2590 = vld [vmem:[%s2552] ss:$2 sm:$0xff]
        %2592 = vst.sshfl [vmem:[#allocation1 + $0x30] sm:$0xff pattern:$0x75643120] %v2541
        %v2593 = vld [vmem:[%s2556] ss:$2 sm:$0xff]
        %v2594 = vld [vmem:[%s166] sm:$0xff]
        %v2595 = vld [vmem:[%s166 + $0x8] sm:$0xff]
        %v2596 = vld [vmem:[%s166 + $0x10] sm:$0xff]
        %v2597 = vld [vmem:[%s166 + $0x18] sm:$0xff]
        %v2598 = vld [vmem:[%s166 + $0x20] sm:$0xff]
        %v2599 = vld [vmem:[%s166 + $0x28] sm:$0xff]
        %v2600 = vld [vmem:[%s166 + $0x30] sm:$0xff]
        %v2601 = vld [vmem:[%s166 + $0x38] sm:$0xff]
        %s2602 = scalar_lea.vmem %s1, 896
        %v2603 = vld [vmem:[%s2602] sm:$0xf]
        %v2604 = vld [vmem:[%s2602 + $0x4] sm:$0xf]
        %v2605 = vld [vmem:[%s2602 + $0x8] sm:$0xf]
        %v2606 = vld [vmem:[%s2602 + $0xc] sm:$0xf]
        %v2607 = vld [vmem:[%s2602 + $0x10] sm:$0xf]
        %v2608 = vld [vmem:[%s2602 + $0x14] sm:$0xf]
        %v2609 = vld [vmem:[%s2602 + $0x18] sm:$0xf]
        %v2610 = vld [vmem:[%s2602 + $0x1c] sm:$0xf]
        %v2611 = vld [vmem:[%s2602 + $0x20] sm:$0xf]
        %v2612 = vld [vmem:[%s2602 + $0x24] sm:$0xf]
        %v2613 = vld [vmem:[%s2602 + $0x28] sm:$0xf]
        %v2614 = vld [vmem:[%s2602 + $0x2c] sm:$0xf]
        %v2615 = vld [vmem:[%s2602 + $0x30] sm:$0xf]
        %v2616 = vld [vmem:[%s2602 + $0x34] sm:$0xf]
        %v2617 = vld [vmem:[%s2602 + $0x38] sm:$0xf]
        %v2618 = vld [vmem:[%s2602 + $0x3c] sm:$0xf]
        %v2619 = vld [vmem:[%s2602 + $0x40] sm:$0xf]
        %v2620 = vld [vmem:[%s2602 + $0x44] sm:$0xf]
        %v2621 = vld [vmem:[%s2602 + $0x48] sm:$0xf]
        %v2622 = vld [vmem:[%s2602 + $0x4c] sm:$0xf]
        %v2623 = vld [vmem:[%s2602 + $0x50] sm:$0xf]
        %v2624 = vld [vmem:[%s2602 + $0x54] sm:$0xf]
        %v2625 = vld [vmem:[%s2602 + $0x58] sm:$0xf]
        %v2626 = vld [vmem:[%s2602 + $0x5c] sm:$0xf]
        %v2627 = vld [vmem:[%s2602 + $0x60] sm:$0xf]
        %v2628 = vld [vmem:[%s2602 + $0x64] sm:$0xf]
        %v2629 = vld [vmem:[%s2602 + $0x68] sm:$0xf]
        %v2630 = vld [vmem:[%s2602 + $0x6c] sm:$0xf]
        %v2631 = vld [vmem:[%s2602 + $0x70] sm:$0xf]
        %v2632 = vld [vmem:[%s2602 + $0x74] sm:$0xf]
        %v2633 = vld [vmem:[%s2602 + $0x78] sm:$0xf]
        %v2634 = vld [vmem:[%s2602 + $0x7c] sm:$0xf]
        %2635 = vst [vmem:[#allocation1] ss:$4 sm:$0xff] %v2545
        %s2636 = scalar_lea.vmem [#allocation1], 1
        %2637 = vst [vmem:[%s2636] ss:$4 sm:$0xff] %v2549
        %s2638 = scalar_lea.vmem [#allocation1], 2
        %2639 = vst [vmem:[%s2638] ss:$4 sm:$0xff] %v2553
        %s2640 = scalar_lea.vmem [#allocation1], 3
        %2641 = vst [vmem:[%s2640] ss:$4 sm:$0xff] %v2557
        %s2642 = scalar_lea.vmem [#allocation1], 32
        %2643 = vst [vmem:[%s2642] ss:$4 sm:$0xff] %v2560
        %s2644 = scalar_lea.vmem [#allocation1], 33
        %2645 = vst [vmem:[%s2644] ss:$4 sm:$0xff] %v2563
        %s2646 = scalar_lea.vmem [#allocation1], 34
        %2647 = vst [vmem:[%s2646] ss:$4 sm:$0xff] %v2566
        %s2648 = scalar_lea.vmem [#allocation1], 35
        %2649 = vst [vmem:[%s2648] ss:$4 sm:$0xff] %v2569
        %v2650 = vld.sshfl [vmem:[#allocation1] sm:$0xff pattern:$0x73625140]
        %v2651 = vld.sshfl [vmem:[#allocation1 + $0x8] sm:$0xff pattern:$0x73625140]
        %v2652 = vld.sshfl [vmem:[#allocation1 + $0x20] sm:$0xff pattern:$0x73625140]
        %v2653 = vld.sshfl [vmem:[#allocation1 + $0x28] sm:$0xff pattern:$0x73625140]
        %2654 = vst [vmem:[#allocation1] ss:$4 sm:$0xff] %v2572
        %2655 = vst [vmem:[%s2636] ss:$4 sm:$0xff] %v2575
        %2656 = vst [vmem:[%s2638] ss:$4 sm:$0xff] %v2578
        %2657 = vst [vmem:[%s2640] ss:$4 sm:$0xff] %v2581
        %2658 = vst [vmem:[%s2642] ss:$4 sm:$0xff] %v2584
        %2659 = vst [vmem:[%s2644] ss:$4 sm:$0xff] %v2587
        %2660 = vst [vmem:[%s2646] ss:$4 sm:$0xff] %v2590
        %2661 = vst [vmem:[%s2648] ss:$4 sm:$0xff] %v2593
        %v2662 = vld.sshfl [vmem:[#allocation1] sm:$0xff pattern:$0x73625140]
        %v2663 = vld.sshfl [vmem:[#allocation1 + $0x8] sm:$0xff pattern:$0x73625140]
        %v2664 = vld.sshfl [vmem:[#allocation1 + $0x20] sm:$0xff pattern:$0x73625140]
        %v2665 = vld.sshfl [vmem:[#allocation1 + $0x28] sm:$0xff pattern:$0x73625140]
        %v2706 = vunpack.c.l.b16 %v2603
        %v2707 = vunpack.c.l.b16 %v2604
        %v2708 = vunpack.c.l.b16 %v2605
        %v2709 = vunpack.c.l.b16 %v2606
        %v2710 = vunpack.c.l.b16 %v2607
        %v2711 = vunpack.c.l.b16 %v2608
        %v2712 = vunpack.c.l.b16 %v2609
        %v2713 = vunpack.c.l.b16 %v2610
        %v2714 = vunpack.c.l.b16 %v2611
        %v2715 = vunpack.c.l.b16 %v2612
        %v2716 = vunpack.c.l.b16 %v2613
        %v2717 = vunpack.c.l.b16 %v2614
        %v2718 = vunpack.c.l.b16 %v2615
        %v2719 = vunpack.c.l.b16 %v2616
        %v2720 = vunpack.c.l.b16 %v2617
        %v2721 = vunpack.c.l.b16 %v2618
        %v2722 = vunpack.c.l.b16 %v2619
        %v2723 = vunpack.c.l.b16 %v2620
        %v2724 = vunpack.c.l.b16 %v2621
        %v2725 = vunpack.c.l.b16 %v2622
        %v2726 = vunpack.c.l.b16 %v2623
        %v2727 = vunpack.c.l.b16 %v2624
        %v2728 = vunpack.c.l.b16 %v2625
        %v2729 = vunpack.c.l.b16 %v2626
        %v2730 = vunpack.c.l.b16 %v2627
        %v2731 = vunpack.c.l.b16 %v2628
        %v2732 = vunpack.c.l.b16 %v2629
        %v2733 = vunpack.c.l.b16 %v2630
        %v2734 = vunpack.c.l.b16 %v2631
        %v2735 = vunpack.c.l.b16 %v2632
        %v2736 = vunpack.c.l.b16 %v2633
        %v2737 = vunpack.c.l.b16 %v2634
        %v2738 = vpack.c.b16 %v2707, %v2706
        %v2739 = vpack.c.b16 %v2709, %v2708
        %v2740 = vpack.c.b16 %v2711, %v2710
        %v2741 = vpack.c.b16 %v2713, %v2712
        %v2742 = vpack.c.b16 %v2715, %v2714
        %v2743 = vpack.c.b16 %v2717, %v2716
        %v2744 = vpack.c.b16 %v2719, %v2718
        %v2745 = vpack.c.b16 %v2721, %v2720
        %v2746 = vpack.c.b16 %v2723, %v2722
        %v2747 = vpack.c.b16 %v2725, %v2724
        %v2748 = vpack.c.b16 %v2727, %v2726
        %v2749 = vpack.c.b16 %v2729, %v2728
        %v2750 = vpack.c.b16 %v2731, %v2730
        %v2751 = vpack.c.b16 %v2733, %v2732
        %v2752 = vpack.c.b16 %v2735, %v2734
        %v2753 = vpack.c.b16 %v2737, %v2736
        %2770 = vmatpush.bf16.msra.mxu0 %v2745
        %2771 = vmatpush.bf16.msra.mxu0 %v2744
        %2772 = vmatpush.bf16.msra.mxu0 %v2743
        %2773 = vmatpush.bf16.msra.mxu0 %v2742
        %2774 = vmatpush.bf16.msra.mxu0 %v2741
        %2775 = vmatpush.bf16.msra.mxu0 %v2740
        %2776 = vmatpush.bf16.msra.mxu0 %v2739
        %2777 = vmatpush.bf16.msra.mxu0 %v2738
        %2778 = vmatmul.bf16.gmra.mxu0 %v2650
        %v2779 = vpop.f32.mrf.mxu0
        %v2780 = vadd.f32 0.0, %v2779
        %v2781 = vpop.f32.mrf.mxu0
        %v2782 = vadd.f32 0.0, %v2781
        %2783 = vmatmul.bf16.gmra.mxu0 %v2652
        %v2784 = vpop.f32.mrf.mxu0
        %v2785 = vadd.f32 0.0, %v2784
        %v2786 = vpop.f32.mrf.mxu0
        %v2787 = vadd.f32 0.0, %v2786
        %2788 = vmatmul.bf16.gmra.mxu0 %v2662
        %v2789 = vpop.f32.mrf.mxu0
        %v2790 = vadd.f32 0.0, %v2789
        %v2791 = vpop.f32.mrf.mxu0
        %v2792 = vadd.f32 0.0, %v2791
        %2793 = vmatmul.bf16.gmra.mxu0 %v2664
        %v2794 = vpop.f32.mrf.mxu0
        %v2795 = vadd.f32 0.0, %v2794
        %v2796 = vpop.f32.mrf.mxu0
        %v2797 = vadd.f32 0.0, %v2796
        %2798 = vdwg.mxu0
        %2799 = vmatpush.bf16.msra.mxu0 %v2753
        %2800 = vmatpush.bf16.msra.mxu0 %v2752
        %2801 = vmatpush.bf16.msra.mxu0 %v2751
        %2802 = vmatpush.bf16.msra.mxu0 %v2750
        %2803 = vmatpush.bf16.msra.mxu0 %v2749
        %2804 = vmatpush.bf16.msra.mxu0 %v2748
        %2805 = vmatpush.bf16.msra.mxu0 %v2747
        %2806 = vmatpush.bf16.msra.mxu0 %v2746
        %2807 = vmatmul.bf16.gmra.mxu0 %v2651
        %v2808 = vpop.f32.mrf.mxu0
        %v2809 = vadd.f32 %v2780, %v2808
        %v2810 = vpop.f32.mrf.mxu0
        %v2811 = vadd.f32 %v2782, %v2810
        %2812 = vmatmul.bf16.gmra.mxu0 %v2653
        %v2813 = vpop.f32.mrf.mxu0
        %v2814 = vadd.f32 %v2785, %v2813
        %v2815 = vpop.f32.mrf.mxu0
        %v2816 = vadd.f32 %v2787, %v2815
        %2817 = vmatmul.bf16.gmra.mxu0 %v2663
        %v2818 = vpop.f32.mrf.mxu0
        %v2819 = vadd.f32 %v2790, %v2818
        %v2820 = vpop.f32.mrf.mxu0
        %v2821 = vadd.f32 %v2792, %v2820
        %2822 = vmatmul.bf16.gmra.mxu0 %v2665
        %v2823 = vpop.f32.mrf.mxu0
        %v2824 = vadd.f32 %v2795, %v2823
        %v2825 = vpop.f32.mrf.mxu0
        %v2826 = vadd.f32 %v2797, %v2825
        %2827 = vdwg.mxu0
        %v2828 = vadd.f32 %v2594, %v2809
        %v2829 = vadd.f32 %v2595, %v2811
        %v2830 = vadd.f32 %v2596, %v2814
        %v2831 = vadd.f32 %v2597, %v2816
        %v2832 = vadd.f32 %v2598, %v2819
        %v2833 = vadd.f32 %v2599, %v2821
        %v2834 = vadd.f32 %v2600, %v2824
        %v2835 = vadd.f32 %v2601, %v2826
        %2836 = vst [vmem:[%s166] sm:$0xff] %v2828
        %2837 = vst [vmem:[%s166 + $0x8] sm:$0xff] %v2829
        %2838 = vst [vmem:[%s166 + $0x10] sm:$0xff] %v2830
        %2839 = vst [vmem:[%s166 + $0x18] sm:$0xff] %v2831
        %2840 = vst [vmem:[%s166 + $0x20] sm:$0xff] %v2832
        %2841 = vst [vmem:[%s166 + $0x28] sm:$0xff] %v2833
        %2842 = vst [vmem:[%s166 + $0x30] sm:$0xff] %v2834
        %2843 = vst [vmem:[%s166 + $0x38] sm:$0xff] %v2835
        %s2844 = scalar_lea.vmem %s172, 128
        %v2845 = vld [vmem:[%s2844] sm:$0x33]
        %v2846 = vld [vmem:[%s2844 + $0x10] sm:$0x33]
        %v2847 = vld [vmem:[%s2844 + $0x20] sm:$0x33]
        %v2848 = vld [vmem:[%s2844 + $0x30] sm:$0x33]
        %v2849 = vld [vmem:[%s2844 + $0x100] sm:$0x33]
        %v2850 = vld [vmem:[%s2844 + $0x110] sm:$0x33]
        %v2851 = vld [vmem:[%s2844 + $0x120] sm:$0x33]
        %v2852 = vld [vmem:[%s2844 + $0x130] sm:$0x33]
        %v2853 = vld [vmem:[%s2844 + $0x200] sm:$0x33]
        %v2854 = vld [vmem:[%s2844 + $0x210] sm:$0x33]
        %v2855 = vld [vmem:[%s2844 + $0x220] sm:$0x33]
        %v2856 = vld [vmem:[%s2844 + $0x230] sm:$0x33]
        %v2857 = vld [vmem:[%s2844 + $0x300] sm:$0x33]
        %v2858 = vld [vmem:[%s2844 + $0x310] sm:$0x33]
        %v2859 = vld [vmem:[%s2844 + $0x320] sm:$0x33]
        %v2860 = vld [vmem:[%s2844 + $0x330] sm:$0x33]
        %v2877 = vrot.slane %v2845, 2
        %v2878 = vrot.slane %v2846, 2
        %v2879 = vrot.slane %v2847, 2
        %v2880 = vrot.slane %v2848, 2
        %v2881 = vrot.slane %v2849, 2
        %v2882 = vrot.slane %v2850, 2
        %v2883 = vrot.slane %v2851, 2
        %v2884 = vrot.slane %v2852, 2
        %v2885 = vrot.slane %v2853, 2
        %v2886 = vrot.slane %v2854, 2
        %v2887 = vrot.slane %v2855, 2
        %v2888 = vrot.slane %v2856, 2
        %v2889 = vrot.slane %v2857, 2
        %v2890 = vrot.slane %v2858, 2
        %v2891 = vrot.slane %v2859, 2
        %v2892 = vrot.slane %v2860, 2
        %v2895 = vsel %vm235, %v2845, %v2877
        %v2898 = vsel %vm235, %v2846, %v2878
        %v2901 = vsel %vm235, %v2847, %v2879
        %v2904 = vsel %vm235, %v2848, %v2880
        %v2907 = vsel %vm235, %v2849, %v2881
        %v2910 = vsel %vm235, %v2850, %v2882
        %v2913 = vsel %vm235, %v2851, %v2883
        %v2916 = vsel %vm235, %v2852, %v2884
        %v2919 = vsel %vm235, %v2853, %v2885
        %v2922 = vsel %vm235, %v2854, %v2886
        %v2925 = vsel %vm235, %v2855, %v2887
        %v2928 = vsel %vm235, %v2856, %v2888
        %v2931 = vsel %vm235, %v2857, %v2889
        %v2934 = vsel %vm235, %v2858, %v2890
        %v2937 = vsel %vm235, %v2859, %v2891
        %v2940 = vsel %vm235, %v2860, %v2892
        %v2941 = vld [vmem:[%s166] sm:$0xff]
        %v2942 = vld [vmem:[%s166 + $0x8] sm:$0xff]
        %v2943 = vld [vmem:[%s166 + $0x10] sm:$0xff]
        %v2944 = vld [vmem:[%s166 + $0x18] sm:$0xff]
        %v2945 = vld [vmem:[%s166 + $0x20] sm:$0xff]
        %v2946 = vld [vmem:[%s166 + $0x28] sm:$0xff]
        %v2947 = vld [vmem:[%s166 + $0x30] sm:$0xff]
        %v2948 = vld [vmem:[%s166 + $0x38] sm:$0xff]
        %s2949 = scalar_lea.vmem %s1, 1024
        %v2950 = vld [vmem:[%s2949] sm:$0xf]
        %v2951 = vld [vmem:[%s2949 + $0x4] sm:$0xf]
        %v2952 = vld [vmem:[%s2949 + $0x8] sm:$0xf]
        %v2953 = vld [vmem:[%s2949 + $0xc] sm:$0xf]
        %v2954 = vld [vmem:[%s2949 + $0x10] sm:$0xf]
        %v2955 = vld [vmem:[%s2949 + $0x14] sm:$0xf]
        %v2956 = vld [vmem:[%s2949 + $0x18] sm:$0xf]
        %v2957 = vld [vmem:[%s2949 + $0x1c] sm:$0xf]
        %v2958 = vld [vmem:[%s2949 + $0x20] sm:$0xf]
        %v2959 = vld [vmem:[%s2949 + $0x24] sm:$0xf]
        %v2960 = vld [vmem:[%s2949 + $0x28] sm:$0xf]
        %v2961 = vld [vmem:[%s2949 + $0x2c] sm:$0xf]
        %v2962 = vld [vmem:[%s2949 + $0x30] sm:$0xf]
        %v2963 = vld [vmem:[%s2949 + $0x34] sm:$0xf]
        %v2964 = vld [vmem:[%s2949 + $0x38] sm:$0xf]
        %v2965 = vld [vmem:[%s2949 + $0x3c] sm:$0xf]
        %v2966 = vld [vmem:[%s2949 + $0x40] sm:$0xf]
        %v2967 = vld [vmem:[%s2949 + $0x44] sm:$0xf]
        %v2968 = vld [vmem:[%s2949 + $0x48] sm:$0xf]
        %v2969 = vld [vmem:[%s2949 + $0x4c] sm:$0xf]
        %v2970 = vld [vmem:[%s2949 + $0x50] sm:$0xf]
        %v2971 = vld [vmem:[%s2949 + $0x54] sm:$0xf]
        %v2972 = vld [vmem:[%s2949 + $0x58] sm:$0xf]
        %v2973 = vld [vmem:[%s2949 + $0x5c] sm:$0xf]
        %v2974 = vld [vmem:[%s2949 + $0x60] sm:$0xf]
        %v2975 = vld [vmem:[%s2949 + $0x64] sm:$0xf]
        %v2976 = vld [vmem:[%s2949 + $0x68] sm:$0xf]
        %v2977 = vld [vmem:[%s2949 + $0x6c] sm:$0xf]
        %v2978 = vld [vmem:[%s2949 + $0x70] sm:$0xf]
        %v2979 = vld [vmem:[%s2949 + $0x74] sm:$0xf]
        %v2980 = vld [vmem:[%s2949 + $0x78] sm:$0xf]
        %v2981 = vld [vmem:[%s2949 + $0x7c] sm:$0xf]
        %2982 = vst [vmem:[#allocation1] ss:$4 sm:$0xff] %v2895
        %s2983 = scalar_lea.vmem [#allocation1], 1
        %2984 = vst [vmem:[%s2983] ss:$4 sm:$0xff] %v2898
        %s2985 = scalar_lea.vmem [#allocation1], 2
        %2986 = vst [vmem:[%s2985] ss:$4 sm:$0xff] %v2901
        %s2987 = scalar_lea.vmem [#allocation1], 3
        %2988 = vst [vmem:[%s2987] ss:$4 sm:$0xff] %v2904
        %s2989 = scalar_lea.vmem [#allocation1], 32
        %2990 = vst [vmem:[%s2989] ss:$4 sm:$0xff] %v2907
        %s2991 = scalar_lea.vmem [#allocation1], 33
        %2992 = vst [vmem:[%s2991] ss:$4 sm:$0xff] %v2910
        %s2993 = scalar_lea.vmem [#allocation1], 34
        %2994 = vst [vmem:[%s2993] ss:$4 sm:$0xff] %v2913
        %s2995 = scalar_lea.vmem [#allocation1], 35
        %2996 = vst [vmem:[%s2995] ss:$4 sm:$0xff] %v2916
        %v2997 = vld.sshfl [vmem:[#allocation1] sm:$0xff pattern:$0x73625140]
        %v2998 = vld.sshfl [vmem:[#allocation1 + $0x8] sm:$0xff pattern:$0x73625140]
        %v2999 = vld.sshfl [vmem:[#allocation1 + $0x20] sm:$0xff pattern:$0x73625140]
        %v3000 = vld.sshfl [vmem:[#allocation1 + $0x28] sm:$0xff pattern:$0x73625140]
        %3001 = vst [vmem:[#allocation1] ss:$4 sm:$0xff] %v2919
        %3002 = vst [vmem:[%s2983] ss:$4 sm:$0xff] %v2922
        %3003 = vst [vmem:[%s2985] ss:$4 sm:$0xff] %v2925
        %3004 = vst [vmem:[%s2987] ss:$4 sm:$0xff] %v2928
        %3005 = vst [vmem:[%s2989] ss:$4 sm:$0xff] %v2931
        %3006 = vst [vmem:[%s2991] ss:$4 sm:$0xff] %v2934
        %3007 = vst [vmem:[%s2993] ss:$4 sm:$0xff] %v2937
        %3008 = vst [vmem:[%s2995] ss:$4 sm:$0xff] %v2940
        %v3009 = vld.sshfl [vmem:[#allocation1] sm:$0xff pattern:$0x73625140]
        %v3010 = vld.sshfl [vmem:[#allocation1 + $0x8] sm:$0xff pattern:$0x73625140]
        %v3011 = vld.sshfl [vmem:[#allocation1 + $0x20] sm:$0xff pattern:$0x73625140]
        %v3012 = vld.sshfl [vmem:[#allocation1 + $0x28] sm:$0xff pattern:$0x73625140]
        %v3053 = vunpack.c.l.b16 %v2950
        %v3054 = vunpack.c.l.b16 %v2951
        %v3055 = vunpack.c.l.b16 %v2952
        %v3056 = vunpack.c.l.b16 %v2953
        %v3057 = vunpack.c.l.b16 %v2954
        %v3058 = vunpack.c.l.b16 %v2955
        %v3059 = vunpack.c.l.b16 %v2956
        %v3060 = vunpack.c.l.b16 %v2957
        %v3061 = vunpack.c.l.b16 %v2958
        %v3062 = vunpack.c.l.b16 %v2959
        %v3063 = vunpack.c.l.b16 %v2960
        %v3064 = vunpack.c.l.b16 %v2961
        %v3065 = vunpack.c.l.b16 %v2962
        %v3066 = vunpack.c.l.b16 %v2963
        %v3067 = vunpack.c.l.b16 %v2964
        %v3068 = vunpack.c.l.b16 %v2965
        %v3069 = vunpack.c.l.b16 %v2966
        %v3070 = vunpack.c.l.b16 %v2967
        %v3071 = vunpack.c.l.b16 %v2968
        %v3072 = vunpack.c.l.b16 %v2969
        %v3073 = vunpack.c.l.b16 %v2970
        %v3074 = vunpack.c.l.b16 %v2971
        %v3075 = vunpack.c.l.b16 %v2972
        %v3076 = vunpack.c.l.b16 %v2973
        %v3077 = vunpack.c.l.b16 %v2974
        %v3078 = vunpack.c.l.b16 %v2975
        %v3079 = vunpack.c.l.b16 %v2976
        %v3080 = vunpack.c.l.b16 %v2977
        %v3081 = vunpack.c.l.b16 %v2978
        %v3082 = vunpack.c.l.b16 %v2979
        %v3083 = vunpack.c.l.b16 %v2980
        %v3084 = vunpack.c.l.b16 %v2981
        %v3085 = vpack.c.b16 %v3054, %v3053
        %v3086 = vpack.c.b16 %v3056, %v3055
        %v3087 = vpack.c.b16 %v3058, %v3057
        %v3088 = vpack.c.b16 %v3060, %v3059
        %v3089 = vpack.c.b16 %v3062, %v3061
        %v3090 = vpack.c.b16 %v3064, %v3063
        %v3091 = vpack.c.b16 %v3066, %v3065
        %v3092 = vpack.c.b16 %v3068, %v3067
        %v3093 = vpack.c.b16 %v3070, %v3069
        %v3094 = vpack.c.b16 %v3072, %v3071
        %v3095 = vpack.c.b16 %v3074, %v3073
        %v3096 = vpack.c.b16 %v3076, %v3075
        %v3097 = vpack.c.b16 %v3078, %v3077
        %v3098 = vpack.c.b16 %v3080, %v3079
        %v3099 = vpack.c.b16 %v3082, %v3081
        %v3100 = vpack.c.b16 %v3084, %v3083
        %3117 = vmatpush.bf16.msra.mxu0 %v3092
        %3118 = vmatpush.bf16.msra.mxu0 %v3091
        %3119 = vmatpush.bf16.msra.mxu0 %v3090
        %3120 = vmatpush.bf16.msra.mxu0 %v3089
        %3121 = vmatpush.bf16.msra.mxu0 %v3088
        %3122 = vmatpush.bf16.msra.mxu0 %v3087
        %3123 = vmatpush.bf16.msra.mxu0 %v3086
        %3124 = vmatpush.bf16.msra.mxu0 %v3085
        %3125 = vmatmul.bf16.gmra.mxu0 %v2997
        %v3126 = vpop.f32.mrf.mxu0
        %v3127 = vadd.f32 0.0, %v3126
        %v3128 = vpop.f32.mrf.mxu0
        %v3129 = vadd.f32 0.0, %v3128
        %3130 = vmatmul.bf16.gmra.mxu0 %v2999
        %v3131 = vpop.f32.mrf.mxu0
        %v3132 = vadd.f32 0.0, %v3131
        %v3133 = vpop.f32.mrf.mxu0
        %v3134 = vadd.f32 0.0, %v3133
        %3135 = vmatmul.bf16.gmra.mxu0 %v3009
        %v3136 = vpop.f32.mrf.mxu0
        %v3137 = vadd.f32 0.0, %v3136
        %v3138 = vpop.f32.mrf.mxu0
        %v3139 = vadd.f32 0.0, %v3138
        %3140 = vmatmul.bf16.gmra.mxu0 %v3011
        %v3141 = vpop.f32.mrf.mxu0
        %v3142 = vadd.f32 0.0, %v3141
        %v3143 = vpop.f32.mrf.mxu0
        %v3144 = vadd.f32 0.0, %v3143
        %3145 = vdwg.mxu0
        %3146 = vmatpush.bf16.msra.mxu0 %v3100
        %3147 = vmatpush.bf16.msra.mxu0 %v3099
        %3148 = vmatpush.bf16.msra.mxu0 %v3098
        %3149 = vmatpush.bf16.msra.mxu0 %v3097
        %3150 = vmatpush.bf16.msra.mxu0 %v3096
        %3151 = vmatpush.bf16.msra.mxu0 %v3095
        %3152 = vmatpush.bf16.msra.mxu0 %v3094
        %3153 = vmatpush.bf16.msra.mxu0 %v3093
        %3154 = vmatmul.bf16.gmra.mxu0 %v2998
        %v3155 = vpop.f32.mrf.mxu0
        %v3156 = vadd.f32 %v3127, %v3155
        %v3157 = vpop.f32.mrf.mxu0
        %v3158 = vadd.f32 %v3129, %v3157
        %3159 = vmatmul.bf16.gmra.mxu0 %v3000
        %v3160 = vpop.f32.mrf.mxu0
        %v3161 = vadd.f32 %v3132, %v3160
        %v3162 = vpop.f32.mrf.mxu0
        %v3163 = vadd.f32 %v3134, %v3162
        %3164 = vmatmul.bf16.gmra.mxu0 %v3010
        %v3165 = vpop.f32.mrf.mxu0
        %v3166 = vadd.f32 %v3137, %v3165
        %v3167 = vpop.f32.mrf.mxu0
        %v3168 = vadd.f32 %v3139, %v3167
        %3169 = vmatmul.bf16.gmra.mxu0 %v3012
        %v3170 = vpop.f32.mrf.mxu0
        %v3171 = vadd.f32 %v3142, %v3170
        %v3172 = vpop.f32.mrf.mxu0
        %v3173 = vadd.f32 %v3144, %v3172
        %3174 = vdwg.mxu0
        %v3175 = vadd.f32 %v2941, %v3156
        %v3176 = vadd.f32 %v2942, %v3158
        %v3177 = vadd.f32 %v2943, %v3161
        %v3178 = vadd.f32 %v2944, %v3163
        %v3179 = vadd.f32 %v2945, %v3166
        %v3180 = vadd.f32 %v2946, %v3168
        %v3181 = vadd.f32 %v2947, %v3171
        %v3182 = vadd.f32 %v2948, %v3173
        %3183 = vst [vmem:[%s166] sm:$0xff] %v3175
        %3184 = vst [vmem:[%s166 + $0x8] sm:$0xff] %v3176
        %3185 = vst [vmem:[%s166 + $0x10] sm:$0xff] %v3177
        %3186 = vst [vmem:[%s166 + $0x18] sm:$0xff] %v3178
        %3187 = vst [vmem:[%s166 + $0x20] sm:$0xff] %v3179
        %3188 = vst [vmem:[%s166 + $0x28] sm:$0xff] %v3180
        %3189 = vst [vmem:[%s166 + $0x30] sm:$0xff] %v3181
        %3190 = vst [vmem:[%s166 + $0x38] sm:$0xff] %v3182
        %v3191 = vld [vmem:[%s2844] sm:$0xcc]
        %v3192 = vld [vmem:[%s2844 + $0x10] sm:$0xcc]
        %v3193 = vld [vmem:[%s2844 + $0x20] sm:$0xcc]
        %v3194 = vld [vmem:[%s2844 + $0x30] sm:$0xcc]
        %v3195 = vld [vmem:[%s2844 + $0x100] sm:$0xcc]
        %v3196 = vld [vmem:[%s2844 + $0x110] sm:$0xcc]
        %v3197 = vld [vmem:[%s2844 + $0x120] sm:$0xcc]
        %v3198 = vld [vmem:[%s2844 + $0x130] sm:$0xcc]
        %v3199 = vld [vmem:[%s2844 + $0x200] sm:$0xcc]
        %v3200 = vld [vmem:[%s2844 + $0x210] sm:$0xcc]
        %v3201 = vld [vmem:[%s2844 + $0x220] sm:$0xcc]
        %v3202 = vld [vmem:[%s2844 + $0x230] sm:$0xcc]
        %v3203 = vld [vmem:[%s2844 + $0x300] sm:$0xcc]
        %v3204 = vld [vmem:[%s2844 + $0x310] sm:$0xcc]
        %v3205 = vld [vmem:[%s2844 + $0x320] sm:$0xcc]
        %v3206 = vld [vmem:[%s2844 + $0x330] sm:$0xcc]
        %3208 = vst.sshfl [vmem:[#allocation1] sm:$0xff pattern:$0x75643120] %v3191
        %s3209 = scalar_lea.vmem [#allocation1], 1
        %v3210 = vld [vmem:[%s3209] ss:$2 sm:$0xff]
        %3212 = vst.sshfl [vmem:[#allocation1 + $0x10] sm:$0xff pattern:$0x75643120] %v3192
        %s3213 = scalar_lea.vmem [#allocation1], 17
        %v3214 = vld [vmem:[%s3213] ss:$2 sm:$0xff]
        %3216 = vst.sshfl [vmem:[#allocation1 + $0x20] sm:$0xff pattern:$0x75643120] %v3193
        %s3217 = scalar_lea.vmem [#allocation1], 33
        %v3218 = vld [vmem:[%s3217] ss:$2 sm:$0xff]
        %3220 = vst.sshfl [vmem:[#allocation1 + $0x30] sm:$0xff pattern:$0x75643120] %v3194
        %s3221 = scalar_lea.vmem [#allocation1], 49
        %v3222 = vld [vmem:[%s3221] ss:$2 sm:$0xff]
        %3224 = vst.sshfl [vmem:[#allocation1] sm:$0xff pattern:$0x75643120] %v3195
        %v3225 = vld [vmem:[%s3209] ss:$2 sm:$0xff]
        %3227 = vst.sshfl [vmem:[#allocation1 + $0x10] sm:$0xff pattern:$0x75643120] %v3196
        %v3228 = vld [vmem:[%s3213] ss:$2 sm:$0xff]
        %3230 = vst.sshfl [vmem:[#allocation1 + $0x20] sm:$0xff pattern:$0x75643120] %v3197
        %v3231 = vld [vmem:[%s3217] ss:$2 sm:$0xff]
        %3233 = vst.sshfl [vmem:[#allocation1 + $0x30] sm:$0xff pattern:$0x75643120] %v3198
        %v3234 = vld [vmem:[%s3221] ss:$2 sm:$0xff]
        %3236 = vst.sshfl [vmem:[#allocation1] sm:$0xff pattern:$0x75643120] %v3199
        %v3237 = vld [vmem:[%s3209] ss:$2 sm:$0xff]
        %3239 = vst.sshfl [vmem:[#allocation1 + $0x10] sm:$0xff pattern:$0x75643120] %v3200
        %v3240 = vld [vmem:[%s3213] ss:$2 sm:$0xff]
        %3242 = vst.sshfl [vmem:[#allocation1 + $0x20] sm:$0xff pattern:$0x75643120] %v3201
        %v3243 = vld [vmem:[%s3217] ss:$2 sm:$0xff]
        %3245 = vst.sshfl [vmem:[#allocation1 + $0x30] sm:$0xff pattern:$0x75643120] %v3202
        %v3246 = vld [vmem:[%s3221] ss:$2 sm:$0xff]
        %3248 = vst.sshfl [vmem:[#allocation1] sm:$0xff pattern:$0x75643120] %v3203
        %v3249 = vld [vmem:[%s3209] ss:$2 sm:$0xff]
        %3251 = vst.sshfl [vmem:[#allocation1 + $0x10] sm:$0xff pattern:$0x75643120] %v3204
        %v3252 = vld [vmem:[%s3213] ss:$2 sm:$0xff]
        %3254 = vst.sshfl [vmem:[#allocation1 + $0x20] sm:$0xff pattern:$0x75643120] %v3205
        %v3255 = vld [vmem:[%s3217] ss:$2 sm:$0xff]
        %3257 = vst.sshfl [vmem:[#allocation1 + $0x30] sm:$0xff pattern:$0x75643120] %v3206
        %v3258 = vld [vmem:[%s3221] ss:$2 sm:$0xff]
        %v3259 = vld [vmem:[%s166] sm:$0xff]
        %v3260 = vld [vmem:[%s166 + $0x8] sm:$0xff]
        %v3261 = vld [vmem:[%s166 + $0x10] sm:$0xff]
        %v3262 = vld [vmem:[%s166 + $0x18] sm:$0xff]
        %v3263 = vld [vmem:[%s166 + $0x20] sm:$0xff]
        %v3264 = vld [vmem:[%s166 + $0x28] sm:$0xff]
        %v3265 = vld [vmem:[%s166 + $0x30] sm:$0xff]
        %v3266 = vld [vmem:[%s166 + $0x38] sm:$0xff]
        %s3267 = scalar_lea.vmem %s1, 1152
        %v3268 = vld [vmem:[%s3267] sm:$0xf]
        %v3269 = vld [vmem:[%s3267 + $0x4] sm:$0xf]
        %v3270 = vld [vmem:[%s3267 + $0x8] sm:$0xf]
        %v3271 = vld [vmem:[%s3267 + $0xc] sm:$0xf]
        %v3272 = vld [vmem:[%s3267 + $0x10] sm:$0xf]
        %v3273 = vld [vmem:[%s3267 + $0x14] sm:$0xf]
        %v3274 = vld [vmem:[%s3267 + $0x18] sm:$0xf]
        %v3275 = vld [vmem:[%s3267 + $0x1c] sm:$0xf]
        %v3276 = vld [vmem:[%s3267 + $0x20] sm:$0xf]
        %v3277 = vld [vmem:[%s3267 + $0x24] sm:$0xf]
        %v3278 = vld [vmem:[%s3267 + $0x28] sm:$0xf]
        %v3279 = vld [vmem:[%s3267 + $0x2c] sm:$0xf]
        %v3280 = vld [vmem:[%s3267 + $0x30] sm:$0xf]
        %v3281 = vld [vmem:[%s3267 + $0x34] sm:$0xf]
        %v3282 = vld [vmem:[%s3267 + $0x38] sm:$0xf]
        %v3283 = vld [vmem:[%s3267 + $0x3c] sm:$0xf]
        %v3284 = vld [vmem:[%s3267 + $0x40] sm:$0xf]
        %v3285 = vld [vmem:[%s3267 + $0x44] sm:$0xf]
        %v3286 = vld [vmem:[%s3267 + $0x48] sm:$0xf]
        %v3287 = vld [vmem:[%s3267 + $0x4c] sm:$0xf]
        %v3288 = vld [vmem:[%s3267 + $0x50] sm:$0xf]
        %v3289 = vld [vmem:[%s3267 + $0x54] sm:$0xf]
        %v3290 = vld [vmem:[%s3267 + $0x58] sm:$0xf]
        %v3291 = vld [vmem:[%s3267 + $0x5c] sm:$0xf]
        %v3292 = vld [vmem:[%s3267 + $0x60] sm:$0xf]
        %v3293 = vld [vmem:[%s3267 + $0x64] sm:$0xf]
        %v3294 = vld [vmem:[%s3267 + $0x68] sm:$0xf]
        %v3295 = vld [vmem:[%s3267 + $0x6c] sm:$0xf]
        %v3296 = vld [vmem:[%s3267 + $0x70] sm:$0xf]
        %v3297 = vld [vmem:[%s3267 + $0x74] sm:$0xf]
        %v3298 = vld [vmem:[%s3267 + $0x78] sm:$0xf]
        %v3299 = vld [vmem:[%s3267 + $0x7c] sm:$0xf]
        %3300 = vst [vmem:[#allocation1] ss:$4 sm:$0xff] %v3210
        %s3301 = scalar_lea.vmem [#allocation1], 1
        %3302 = vst [vmem:[%s3301] ss:$4 sm:$0xff] %v3214
        %s3303 = scalar_lea.vmem [#allocation1], 2
        %3304 = vst [vmem:[%s3303] ss:$4 sm:$0xff] %v3218
        %s3305 = scalar_lea.vmem [#allocation1], 3
        %3306 = vst [vmem:[%s3305] ss:$4 sm:$0xff] %v3222
        %s3307 = scalar_lea.vmem [#allocation1], 32
        %3308 = vst [vmem:[%s3307] ss:$4 sm:$0xff] %v3225
        %s3309 = scalar_lea.vmem [#allocation1], 33
        %3310 = vst [vmem:[%s3309] ss:$4 sm:$0xff] %v3228
        %s3311 = scalar_lea.vmem [#allocation1], 34
        %3312 = vst [vmem:[%s3311] ss:$4 sm:$0xff] %v3231
        %s3313 = scalar_lea.vmem [#allocation1], 35
        %3314 = vst [vmem:[%s3313] ss:$4 sm:$0xff] %v3234
        %v3315 = vld.sshfl [vmem:[#allocation1] sm:$0xff pattern:$0x73625140]
        %v3316 = vld.sshfl [vmem:[#allocation1 + $0x8] sm:$0xff pattern:$0x73625140]
        %v3317 = vld.sshfl [vmem:[#allocation1 + $0x20] sm:$0xff pattern:$0x73625140]
        %v3318 = vld.sshfl [vmem:[#allocation1 + $0x28] sm:$0xff pattern:$0x73625140]
        %3319 = vst [vmem:[#allocation1] ss:$4 sm:$0xff] %v3237
        %3320 = vst [vmem:[%s3301] ss:$4 sm:$0xff] %v3240
        %3321 = vst [vmem:[%s3303] ss:$4 sm:$0xff] %v3243
        %3322 = vst [vmem:[%s3305] ss:$4 sm:$0xff] %v3246
        %3323 = vst [vmem:[%s3307] ss:$4 sm:$0xff] %v3249
        %3324 = vst [vmem:[%s3309] ss:$4 sm:$0xff] %v3252
        %3325 = vst [vmem:[%s3311] ss:$4 sm:$0xff] %v3255
        %3326 = vst [vmem:[%s3313] ss:$4 sm:$0xff] %v3258
        %v3327 = vld.sshfl [vmem:[#allocation1] sm:$0xff pattern:$0x73625140]
        %v3328 = vld.sshfl [vmem:[#allocation1 + $0x8] sm:$0xff pattern:$0x73625140]
        %v3329 = vld.sshfl [vmem:[#allocation1 + $0x20] sm:$0xff pattern:$0x73625140]
        %v3330 = vld.sshfl [vmem:[#allocation1 + $0x28] sm:$0xff pattern:$0x73625140]
        %v3371 = vunpack.c.l.b16 %v3268
        %v3372 = vunpack.c.l.b16 %v3269
        %v3373 = vunpack.c.l.b16 %v3270
        %v3374 = vunpack.c.l.b16 %v3271
        %v3375 = vunpack.c.l.b16 %v3272
        %v3376 = vunpack.c.l.b16 %v3273
        %v3377 = vunpack.c.l.b16 %v3274
        %v3378 = vunpack.c.l.b16 %v3275
        %v3379 = vunpack.c.l.b16 %v3276
        %v3380 = vunpack.c.l.b16 %v3277
        %v3381 = vunpack.c.l.b16 %v3278
        %v3382 = vunpack.c.l.b16 %v3279
        %v3383 = vunpack.c.l.b16 %v3280
        %v3384 = vunpack.c.l.b16 %v3281
        %v3385 = vunpack.c.l.b16 %v3282
        %v3386 = vunpack.c.l.b16 %v3283
        %v3387 = vunpack.c.l.b16 %v3284
        %v3388 = vunpack.c.l.b16 %v3285
        %v3389 = vunpack.c.l.b16 %v3286
        %v3390 = vunpack.c.l.b16 %v3287
        %v3391 = vunpack.c.l.b16 %v3288
        %v3392 = vunpack.c.l.b16 %v3289
        %v3393 = vunpack.c.l.b16 %v3290
        %v3394 = vunpack.c.l.b16 %v3291
        %v3395 = vunpack.c.l.b16 %v3292
        %v3396 = vunpack.c.l.b16 %v3293
        %v3397 = vunpack.c.l.b16 %v3294
        %v3398 = vunpack.c.l.b16 %v3295
        %v3399 = vunpack.c.l.b16 %v3296
        %v3400 = vunpack.c.l.b16 %v3297
        %v3401 = vunpack.c.l.b16 %v3298
        %v3402 = vunpack.c.l.b16 %v3299
        %v3403 = vpack.c.b16 %v3372, %v3371
        %v3404 = vpack.c.b16 %v3374, %v3373
        %v3405 = vpack.c.b16 %v3376, %v3375
        %v3406 = vpack.c.b16 %v3378, %v3377
        %v3407 = vpack.c.b16 %v3380, %v3379
        %v3408 = vpack.c.b16 %v3382, %v3381
        %v3409 = vpack.c.b16 %v3384, %v3383
        %v3410 = vpack.c.b16 %v3386, %v3385
        %v3411 = vpack.c.b16 %v3388, %v3387
        %v3412 = vpack.c.b16 %v3390, %v3389
        %v3413 = vpack.c.b16 %v3392, %v3391
        %v3414 = vpack.c.b16 %v3394, %v3393
        %v3415 = vpack.c.b16 %v3396, %v3395
        %v3416 = vpack.c.b16 %v3398, %v3397
        %v3417 = vpack.c.b16 %v3400, %v3399
        %v3418 = vpack.c.b16 %v3402, %v3401
        %3435 = vmatpush.bf16.msra.mxu0 %v3410
        %3436 = vmatpush.bf16.msra.mxu0 %v3409
        %3437 = vmatpush.bf16.msra.mxu0 %v3408
        %3438 = vmatpush.bf16.msra.mxu0 %v3407
        %3439 = vmatpush.bf16.msra.mxu0 %v3406
        %3440 = vmatpush.bf16.msra.mxu0 %v3405
        %3441 = vmatpush.bf16.msra.mxu0 %v3404
        %3442 = vmatpush.bf16.msra.mxu0 %v3403
        %3443 = vmatmul.bf16.gmra.mxu0 %v3315
        %v3444 = vpop.f32.mrf.mxu0
        %v3445 = vadd.f32 0.0, %v3444
        %v3446 = vpop.f32.mrf.mxu0
        %v3447 = vadd.f32 0.0, %v3446
        %3448 = vmatmul.bf16.gmra.mxu0 %v3317
        %v3449 = vpop.f32.mrf.mxu0
        %v3450 = vadd.f32 0.0, %v3449
        %v3451 = vpop.f32.mrf.mxu0
        %v3452 = vadd.f32 0.0, %v3451
        %3453 = vmatmul.bf16.gmra.mxu0 %v3327
        %v3454 = vpop.f32.mrf.mxu0
        %v3455 = vadd.f32 0.0, %v3454
        %v3456 = vpop.f32.mrf.mxu0
        %v3457 = vadd.f32 0.0, %v3456
        %3458 = vmatmul.bf16.gmra.mxu0 %v3329
        %v3459 = vpop.f32.mrf.mxu0
        %v3460 = vadd.f32 0.0, %v3459
        %v3461 = vpop.f32.mrf.mxu0
        %v3462 = vadd.f32 0.0, %v3461
        %3463 = vdwg.mxu0
        %3464 = vmatpush.bf16.msra.mxu0 %v3418
        %3465 = vmatpush.bf16.msra.mxu0 %v3417
        %3466 = vmatpush.bf16.msra.mxu0 %v3416
        %3467 = vmatpush.bf16.msra.mxu0 %v3415
        %3468 = vmatpush.bf16.msra.mxu0 %v3414
        %3469 = vmatpush.bf16.msra.mxu0 %v3413
        %3470 = vmatpush.bf16.msra.mxu0 %v3412
        %3471 = vmatpush.bf16.msra.mxu0 %v3411
        %3472 = vmatmul.bf16.gmra.mxu0 %v3316
        %v3473 = vpop.f32.mrf.mxu0
        %v3474 = vadd.f32 %v3445, %v3473
        %v3475 = vpop.f32.mrf.mxu0
        %v3476 = vadd.f32 %v3447, %v3475
        %3477 = vmatmul.bf16.gmra.mxu0 %v3318
        %v3478 = vpop.f32.mrf.mxu0
        %v3479 = vadd.f32 %v3450, %v3478
        %v3480 = vpop.f32.mrf.mxu0
        %v3481 = vadd.f32 %v3452, %v3480
        %3482 = vmatmul.bf16.gmra.mxu0 %v3328
        %v3483 = vpop.f32.mrf.mxu0
        %v3484 = vadd.f32 %v3455, %v3483
        %v3485 = vpop.f32.mrf.mxu0
        %v3486 = vadd.f32 %v3457, %v3485
        %3487 = vmatmul.bf16.gmra.mxu0 %v3330
        %v3488 = vpop.f32.mrf.mxu0
        %v3489 = vadd.f32 %v3460, %v3488
        %v3490 = vpop.f32.mrf.mxu0
        %v3491 = vadd.f32 %v3462, %v3490
        %3492 = vdwg.mxu0
        %v3493 = vadd.f32 %v3259, %v3474
        %v3494 = vadd.f32 %v3260, %v3476
        %v3495 = vadd.f32 %v3261, %v3479
        %v3496 = vadd.f32 %v3262, %v3481
        %v3497 = vadd.f32 %v3263, %v3484
        %v3498 = vadd.f32 %v3264, %v3486
        %v3499 = vadd.f32 %v3265, %v3489
        %v3500 = vadd.f32 %v3266, %v3491
        %3501 = vst [vmem:[%s166] sm:$0xff] %v3493
        %3502 = vst [vmem:[%s166 + $0x8] sm:$0xff] %v3494
        %3503 = vst [vmem:[%s166 + $0x10] sm:$0xff] %v3495
        %3504 = vst [vmem:[%s166 + $0x18] sm:$0xff] %v3496
        %3505 = vst [vmem:[%s166 + $0x20] sm:$0xff] %v3497
        %3506 = vst [vmem:[%s166 + $0x28] sm:$0xff] %v3498
        %3507 = vst [vmem:[%s166 + $0x30] sm:$0xff] %v3499
        %3508 = vst [vmem:[%s166 + $0x38] sm:$0xff] %v3500
        %v3509 = vld [vmem:[%s2844 + $0x8] sm:$0x33]
        %v3510 = vld [vmem:[%s2844 + $0x18] sm:$0x33]
        %v3511 = vld [vmem:[%s2844 + $0x28] sm:$0x33]
        %v3512 = vld [vmem:[%s2844 + $0x38] sm:$0x33]
        %v3513 = vld [vmem:[%s2844 + $0x108] sm:$0x33]
        %v3514 = vld [vmem:[%s2844 + $0x118] sm:$0x33]
        %v3515 = vld [vmem:[%s2844 + $0x128] sm:$0x33]
        %v3516 = vld [vmem:[%s2844 + $0x138] sm:$0x33]
        %v3517 = vld [vmem:[%s2844 + $0x208] sm:$0x33]
        %v3518 = vld [vmem:[%s2844 + $0x218] sm:$0x33]
        %v3519 = vld [vmem:[%s2844 + $0x228] sm:$0x33]
        %v3520 = vld [vmem:[%s2844 + $0x238] sm:$0x33]
        %v3521 = vld [vmem:[%s2844 + $0x308] sm:$0x33]
        %v3522 = vld [vmem:[%s2844 + $0x318] sm:$0x33]
        %v3523 = vld [vmem:[%s2844 + $0x328] sm:$0x33]
        %v3524 = vld [vmem:[%s2844 + $0x338] sm:$0x33]
        %v3541 = vrot.slane %v3509, 2
        %v3542 = vrot.slane %v3510, 2
        %v3543 = vrot.slane %v3511, 2
        %v3544 = vrot.slane %v3512, 2
        %v3545 = vrot.slane %v3513, 2
        %v3546 = vrot.slane %v3514, 2
        %v3547 = vrot.slane %v3515, 2
        %v3548 = vrot.slane %v3516, 2
        %v3549 = vrot.slane %v3517, 2
        %v3550 = vrot.slane %v3518, 2
        %v3551 = vrot.slane %v3519, 2
        %v3552 = vrot.slane %v3520, 2
        %v3553 = vrot.slane %v3521, 2
        %v3554 = vrot.slane %v3522, 2
        %v3555 = vrot.slane %v3523, 2
        %v3556 = vrot.slane %v3524, 2
        %v3559 = vsel %vm235, %v3509, %v3541
        %v3562 = vsel %vm235, %v3510, %v3542
        %v3565 = vsel %vm235, %v3511, %v3543
        %v3568 = vsel %vm235, %v3512, %v3544
        %v3571 = vsel %vm235, %v3513, %v3545
        %v3574 = vsel %vm235, %v3514, %v3546
        %v3577 = vsel %vm235, %v3515, %v3547
        %v3580 = vsel %vm235, %v3516, %v3548
        %v3583 = vsel %vm235, %v3517, %v3549
        %v3586 = vsel %vm235, %v3518, %v3550
        %v3589 = vsel %vm235, %v3519, %v3551
        %v3592 = vsel %vm235, %v3520, %v3552
        %v3595 = vsel %vm235, %v3521, %v3553
        %v3598 = vsel %vm235, %v3522, %v3554
        %v3601 = vsel %vm235, %v3523, %v3555
        %v3604 = vsel %vm235, %v3524, %v3556
        %v3605 = vld [vmem:[%s166] sm:$0xff]
        %v3606 = vld [vmem:[%s166 + $0x8] sm:$0xff]
        %v3607 = vld [vmem:[%s166 + $0x10] sm:$0xff]
        %v3608 = vld [vmem:[%s166 + $0x18] sm:$0xff]
        %v3609 = vld [vmem:[%s166 + $0x20] sm:$0xff]
        %v3610 = vld [vmem:[%s166 + $0x28] sm:$0xff]
        %v3611 = vld [vmem:[%s166 + $0x30] sm:$0xff]
        %v3612 = vld [vmem:[%s166 + $0x38] sm:$0xff]
        %s3613 = scalar_lea.vmem %s1, 1280
        %v3614 = vld [vmem:[%s3613] sm:$0xf]
        %v3615 = vld [vmem:[%s3613 + $0x4] sm:$0xf]
        %v3616 = vld [vmem:[%s3613 + $0x8] sm:$0xf]
        %v3617 = vld [vmem:[%s3613 + $0xc] sm:$0xf]
        %v3618 = vld [vmem:[%s3613 + $0x10] sm:$0xf]
        %v3619 = vld [vmem:[%s3613 + $0x14] sm:$0xf]
        %v3620 = vld [vmem:[%s3613 + $0x18] sm:$0xf]
        %v3621 = vld [vmem:[%s3613 + $0x1c] sm:$0xf]
        %v3622 = vld [vmem:[%s3613 + $0x20] sm:$0xf]
        %v3623 = vld [vmem:[%s3613 + $0x24] sm:$0xf]
        %v3624 = vld [vmem:[%s3613 + $0x28] sm:$0xf]
        %v3625 = vld [vmem:[%s3613 + $0x2c] sm:$0xf]
        %v3626 = vld [vmem:[%s3613 + $0x30] sm:$0xf]
        %v3627 = vld [vmem:[%s3613 + $0x34] sm:$0xf]
        %v3628 = vld [vmem:[%s3613 + $0x38] sm:$0xf]
        %v3629 = vld [vmem:[%s3613 + $0x3c] sm:$0xf]
        %v3630 = vld [vmem:[%s3613 + $0x40] sm:$0xf]
        %v3631 = vld [vmem:[%s3613 + $0x44] sm:$0xf]
        %v3632 = vld [vmem:[%s3613 + $0x48] sm:$0xf]
        %v3633 = vld [vmem:[%s3613 + $0x4c] sm:$0xf]
        %v3634 = vld [vmem:[%s3613 + $0x50] sm:$0xf]
        %v3635 = vld [vmem:[%s3613 + $0x54] sm:$0xf]
        %v3636 = vld [vmem:[%s3613 + $0x58] sm:$0xf]
        %v3637 = vld [vmem:[%s3613 + $0x5c] sm:$0xf]
        %v3638 = vld [vmem:[%s3613 + $0x60] sm:$0xf]
        %v3639 = vld [vmem:[%s3613 + $0x64] sm:$0xf]
        %v3640 = vld [vmem:[%s3613 + $0x68] sm:$0xf]
        %v3641 = vld [vmem:[%s3613 + $0x6c] sm:$0xf]
        %v3642 = vld [vmem:[%s3613 + $0x70] sm:$0xf]
        %v3643 = vld [vmem:[%s3613 + $0x74] sm:$0xf]
        %v3644 = vld [vmem:[%s3613 + $0x78] sm:$0xf]
        %v3645 = vld [vmem:[%s3613 + $0x7c] sm:$0xf]
        %3646 = vst [vmem:[#allocation1] ss:$4 sm:$0xff] %v3559
        %s3647 = scalar_lea.vmem [#allocation1], 1
        %3648 = vst [vmem:[%s3647] ss:$4 sm:$0xff] %v3562
        %s3649 = scalar_lea.vmem [#allocation1], 2
        %3650 = vst [vmem:[%s3649] ss:$4 sm:$0xff] %v3565
        %s3651 = scalar_lea.vmem [#allocation1], 3
        %3652 = vst [vmem:[%s3651] ss:$4 sm:$0xff] %v3568
        %s3653 = scalar_lea.vmem [#allocation1], 32
        %3654 = vst [vmem:[%s3653] ss:$4 sm:$0xff] %v3571
        %s3655 = scalar_lea.vmem [#allocation1], 33
        %3656 = vst [vmem:[%s3655] ss:$4 sm:$0xff] %v3574
        %s3657 = scalar_lea.vmem [#allocation1], 34
        %3658 = vst [vmem:[%s3657] ss:$4 sm:$0xff] %v3577
        %s3659 = scalar_lea.vmem [#allocation1], 35
        %3660 = vst [vmem:[%s3659] ss:$4 sm:$0xff] %v3580
        %v3661 = vld.sshfl [vmem:[#allocation1] sm:$0xff pattern:$0x73625140]
        %v3662 = vld.sshfl [vmem:[#allocation1 + $0x8] sm:$0xff pattern:$0x73625140]
        %v3663 = vld.sshfl [vmem:[#allocation1 + $0x20] sm:$0xff pattern:$0x73625140]
        %v3664 = vld.sshfl [vmem:[#allocation1 + $0x28] sm:$0xff pattern:$0x73625140]
        %3665 = vst [vmem:[#allocation1] ss:$4 sm:$0xff] %v3583
        %3666 = vst [vmem:[%s3647] ss:$4 sm:$0xff] %v3586
        %3667 = vst [vmem:[%s3649] ss:$4 sm:$0xff] %v3589
        %3668 = vst [vmem:[%s3651] ss:$4 sm:$0xff] %v3592
        %3669 = vst [vmem:[%s3653] ss:$4 sm:$0xff] %v3595
        %3670 = vst [vmem:[%s3655] ss:$4 sm:$0xff] %v3598
        %3671 = vst [vmem:[%s3657] ss:$4 sm:$0xff] %v3601
        %3672 = vst [vmem:[%s3659] ss:$4 sm:$0xff] %v3604
        %v3673 = vld.sshfl [vmem:[#allocation1] sm:$0xff pattern:$0x73625140]
        %v3674 = vld.sshfl [vmem:[#allocation1 + $0x8] sm:$0xff pattern:$0x73625140]
        %v3675 = vld.sshfl [vmem:[#allocation1 + $0x20] sm:$0xff pattern:$0x73625140]
        %v3676 = vld.sshfl [vmem:[#allocation1 + $0x28] sm:$0xff pattern:$0x73625140]
        %v3717 = vunpack.c.l.b16 %v3614
        %v3718 = vunpack.c.l.b16 %v3615
        %v3719 = vunpack.c.l.b16 %v3616
        %v3720 = vunpack.c.l.b16 %v3617
        %v3721 = vunpack.c.l.b16 %v3618
        %v3722 = vunpack.c.l.b16 %v3619
        %v3723 = vunpack.c.l.b16 %v3620
        %v3724 = vunpack.c.l.b16 %v3621
        %v3725 = vunpack.c.l.b16 %v3622
        %v3726 = vunpack.c.l.b16 %v3623
        %v3727 = vunpack.c.l.b16 %v3624
        %v3728 = vunpack.c.l.b16 %v3625
        %v3729 = vunpack.c.l.b16 %v3626
        %v3730 = vunpack.c.l.b16 %v3627
        %v3731 = vunpack.c.l.b16 %v3628
        %v3732 = vunpack.c.l.b16 %v3629
        %v3733 = vunpack.c.l.b16 %v3630
        %v3734 = vunpack.c.l.b16 %v3631
        %v3735 = vunpack.c.l.b16 %v3632
        %v3736 = vunpack.c.l.b16 %v3633
        %v3737 = vunpack.c.l.b16 %v3634
        %v3738 = vunpack.c.l.b16 %v3635
        %v3739 = vunpack.c.l.b16 %v3636
        %v3740 = vunpack.c.l.b16 %v3637
        %v3741 = vunpack.c.l.b16 %v3638
        %v3742 = vunpack.c.l.b16 %v3639
        %v3743 = vunpack.c.l.b16 %v3640
        %v3744 = vunpack.c.l.b16 %v3641
        %v3745 = vunpack.c.l.b16 %v3642
        %v3746 = vunpack.c.l.b16 %v3643
        %v3747 = vunpack.c.l.b16 %v3644
        %v3748 = vunpack.c.l.b16 %v3645
        %v3749 = vpack.c.b16 %v3718, %v3717
        %v3750 = vpack.c.b16 %v3720, %v3719
        %v3751 = vpack.c.b16 %v3722, %v3721
        %v3752 = vpack.c.b16 %v3724, %v3723
        %v3753 = vpack.c.b16 %v3726, %v3725
        %v3754 = vpack.c.b16 %v3728, %v3727
        %v3755 = vpack.c.b16 %v3730, %v3729
        %v3756 = vpack.c.b16 %v3732, %v3731
        %v3757 = vpack.c.b16 %v3734, %v3733
        %v3758 = vpack.c.b16 %v3736, %v3735
        %v3759 = vpack.c.b16 %v3738, %v3737
        %v3760 = vpack.c.b16 %v3740, %v3739
        %v3761 = vpack.c.b16 %v3742, %v3741
        %v3762 = vpack.c.b16 %v3744, %v3743
        %v3763 = vpack.c.b16 %v3746, %v3745
        %v3764 = vpack.c.b16 %v3748, %v3747
        %3781 = vmatpush.bf16.msra.mxu0 %v3756
        %3782 = vmatpush.bf16.msra.mxu0 %v3755
        %3783 = vmatpush.bf16.msra.mxu0 %v3754
        %3784 = vmatpush.bf16.msra.mxu0 %v3753
        %3785 = vmatpush.bf16.msra.mxu0 %v3752
        %3786 = vmatpush.bf16.msra.mxu0 %v3751
        %3787 = vmatpush.bf16.msra.mxu0 %v3750
        %3788 = vmatpush.bf16.msra.mxu0 %v3749
        %3789 = vmatmul.bf16.gmra.mxu0 %v3661
        %v3790 = vpop.f32.mrf.mxu0
        %v3791 = vadd.f32 0.0, %v3790
        %v3792 = vpop.f32.mrf.mxu0
        %v3793 = vadd.f32 0.0, %v3792
        %3794 = vmatmul.bf16.gmra.mxu0 %v3663
        %v3795 = vpop.f32.mrf.mxu0
        %v3796 = vadd.f32 0.0, %v3795
        %v3797 = vpop.f32.mrf.mxu0
        %v3798 = vadd.f32 0.0, %v3797
        %3799 = vmatmul.bf16.gmra.mxu0 %v3673
        %v3800 = vpop.f32.mrf.mxu0
        %v3801 = vadd.f32 0.0, %v3800
        %v3802 = vpop.f32.mrf.mxu0
        %v3803 = vadd.f32 0.0, %v3802
        %3804 = vmatmul.bf16.gmra.mxu0 %v3675
        %v3805 = vpop.f32.mrf.mxu0
        %v3806 = vadd.f32 0.0, %v3805
        %v3807 = vpop.f32.mrf.mxu0
        %v3808 = vadd.f32 0.0, %v3807
        %3809 = vdwg.mxu0
        %3810 = vmatpush.bf16.msra.mxu0 %v3764
        %3811 = vmatpush.bf16.msra.mxu0 %v3763
        %3812 = vmatpush.bf16.msra.mxu0 %v3762
        %3813 = vmatpush.bf16.msra.mxu0 %v3761
        %3814 = vmatpush.bf16.msra.mxu0 %v3760
        %3815 = vmatpush.bf16.msra.mxu0 %v3759
        %3816 = vmatpush.bf16.msra.mxu0 %v3758
        %3817 = vmatpush.bf16.msra.mxu0 %v3757
        %3818 = vmatmul.bf16.gmra.mxu0 %v3662
        %v3819 = vpop.f32.mrf.mxu0
        %v3820 = vadd.f32 %v3791, %v3819
        %v3821 = vpop.f32.mrf.mxu0
        %v3822 = vadd.f32 %v3793, %v3821
        %3823 = vmatmul.bf16.gmra.mxu0 %v3664
        %v3824 = vpop.f32.mrf.mxu0
        %v3825 = vadd.f32 %v3796, %v3824
        %v3826 = vpop.f32.mrf.mxu0
        %v3827 = vadd.f32 %v3798, %v3826
        %3828 = vmatmul.bf16.gmra.mxu0 %v3674
        %v3829 = vpop.f32.mrf.mxu0
        %v3830 = vadd.f32 %v3801, %v3829
        %v3831 = vpop.f32.mrf.mxu0
        %v3832 = vadd.f32 %v3803, %v3831
        %3833 = vmatmul.bf16.gmra.mxu0 %v3676
        %v3834 = vpop.f32.mrf.mxu0
        %v3835 = vadd.f32 %v3806, %v3834
        %v3836 = vpop.f32.mrf.mxu0
        %v3837 = vadd.f32 %v3808, %v3836
        %3838 = vdwg.mxu0
        %v3839 = vadd.f32 %v3605, %v3820
        %v3840 = vadd.f32 %v3606, %v3822
        %v3841 = vadd.f32 %v3607, %v3825
        %v3842 = vadd.f32 %v3608, %v3827
        %v3843 = vadd.f32 %v3609, %v3830
        %v3844 = vadd.f32 %v3610, %v3832
        %v3845 = vadd.f32 %v3611, %v3835
        %v3846 = vadd.f32 %v3612, %v3837
        %3847 = vst [vmem:[%s166] sm:$0xff] %v3839
        %3848 = vst [vmem:[%s166 + $0x8] sm:$0xff] %v3840
        %3849 = vst [vmem:[%s166 + $0x10] sm:$0xff] %v3841
        %3850 = vst [vmem:[%s166 + $0x18] sm:$0xff] %v3842
        %3851 = vst [vmem:[%s166 + $0x20] sm:$0xff] %v3843
        %3852 = vst [vmem:[%s166 + $0x28] sm:$0xff] %v3844
        %3853 = vst [vmem:[%s166 + $0x30] sm:$0xff] %v3845
        %3854 = vst [vmem:[%s166 + $0x38] sm:$0xff] %v3846
        %v3855 = vld [vmem:[%s2844 + $0x8] sm:$0xcc]
        %v3856 = vld [vmem:[%s2844 + $0x18] sm:$0xcc]
        %v3857 = vld [vmem:[%s2844 + $0x28] sm:$0xcc]
        %v3858 = vld [vmem:[%s2844 + $0x38] sm:$0xcc]
        %v3859 = vld [vmem:[%s2844 + $0x108] sm:$0xcc]
        %v3860 = vld [vmem:[%s2844 + $0x118] sm:$0xcc]
        %v3861 = vld [vmem:[%s2844 + $0x128] sm:$0xcc]
        %v3862 = vld [vmem:[%s2844 + $0x138] sm:$0xcc]
        %v3863 = vld [vmem:[%s2844 + $0x208] sm:$0xcc]
        %v3864 = vld [vmem:[%s2844 + $0x218] sm:$0xcc]
        %v3865 = vld [vmem:[%s2844 + $0x228] sm:$0xcc]
        %v3866 = vld [vmem:[%s2844 + $0x238] sm:$0xcc]
        %v3867 = vld [vmem:[%s2844 + $0x308] sm:$0xcc]
        %v3868 = vld [vmem:[%s2844 + $0x318] sm:$0xcc]
        %v3869 = vld [vmem:[%s2844 + $0x328] sm:$0xcc]
        %v3870 = vld [vmem:[%s2844 + $0x338] sm:$0xcc]
        %3872 = vst.sshfl [vmem:[#allocation1] sm:$0xff pattern:$0x75643120] %v3855
        %s3873 = scalar_lea.vmem [#allocation1], 1
        %v3874 = vld [vmem:[%s3873] ss:$2 sm:$0xff]
        %3876 = vst.sshfl [vmem:[#allocation1 + $0x10] sm:$0xff pattern:$0x75643120] %v3856
        %s3877 = scalar_lea.vmem [#allocation1], 17
        %v3878 = vld [vmem:[%s3877] ss:$2 sm:$0xff]
        %3880 = vst.sshfl [vmem:[#allocation1 + $0x20] sm:$0xff pattern:$0x75643120] %v3857
        %s3881 = scalar_lea.vmem [#allocation1], 33
        %v3882 = vld [vmem:[%s3881] ss:$2 sm:$0xff]
        %3884 = vst.sshfl [vmem:[#allocation1 + $0x30] sm:$0xff pattern:$0x75643120] %v3858
        %s3885 = scalar_lea.vmem [#allocation1], 49
        %v3886 = vld [vmem:[%s3885] ss:$2 sm:$0xff]
        %3888 = vst.sshfl [vmem:[#allocation1] sm:$0xff pattern:$0x75643120] %v3859
        %v3889 = vld [vmem:[%s3873] ss:$2 sm:$0xff]
        %3891 = vst.sshfl [vmem:[#allocation1 + $0x10] sm:$0xff pattern:$0x75643120] %v3860
        %v3892 = vld [vmem:[%s3877] ss:$2 sm:$0xff]
        %3894 = vst.sshfl [vmem:[#allocation1 + $0x20] sm:$0xff pattern:$0x75643120] %v3861
        %v3895 = vld [vmem:[%s3881] ss:$2 sm:$0xff]
        %3897 = vst.sshfl [vmem:[#allocation1 + $0x30] sm:$0xff pattern:$0x75643120] %v3862
        %v3898 = vld [vmem:[%s3885] ss:$2 sm:$0xff]
        %3900 = vst.sshfl [vmem:[#allocation1] sm:$0xff pattern:$0x75643120] %v3863
        %v3901 = vld [vmem:[%s3873] ss:$2 sm:$0xff]
        %3903 = vst.sshfl [vmem:[#allocation1 + $0x10] sm:$0xff pattern:$0x75643120] %v3864
        %v3904 = vld [vmem:[%s3877] ss:$2 sm:$0xff]
        %3906 = vst.sshfl [vmem:[#allocation1 + $0x20] sm:$0xff pattern:$0x75643120] %v3865
        %v3907 = vld [vmem:[%s3881] ss:$2 sm:$0xff]
        %3909 = vst.sshfl [vmem:[#allocation1 + $0x30] sm:$0xff pattern:$0x75643120] %v3866
        %v3910 = vld [vmem:[%s3885] ss:$2 sm:$0xff]
        %3912 = vst.sshfl [vmem:[#allocation1] sm:$0xff pattern:$0x75643120] %v3867
        %v3913 = vld [vmem:[%s3873] ss:$2 sm:$0xff]
        %3915 = vst.sshfl [vmem:[#allocation1 + $0x10] sm:$0xff pattern:$0x75643120] %v3868
        %v3916 = vld [vmem:[%s3877] ss:$2 sm:$0xff]
        %3918 = vst.sshfl [vmem:[#allocation1 + $0x20] sm:$0xff pattern:$0x75643120] %v3869
        %v3919 = vld [vmem:[%s3881] ss:$2 sm:$0xff]
        %3921 = vst.sshfl [vmem:[#allocation1 + $0x30] sm:$0xff pattern:$0x75643120] %v3870
        %v3922 = vld [vmem:[%s3885] ss:$2 sm:$0xff]
        %v3923 = vld [vmem:[%s166] sm:$0xff]
        %v3924 = vld [vmem:[%s166 + $0x8] sm:$0xff]
        %v3925 = vld [vmem:[%s166 + $0x10] sm:$0xff]
        %v3926 = vld [vmem:[%s166 + $0x18] sm:$0xff]
        %v3927 = vld [vmem:[%s166 + $0x20] sm:$0xff]
        %v3928 = vld [vmem:[%s166 + $0x28] sm:$0xff]
        %v3929 = vld [vmem:[%s166 + $0x30] sm:$0xff]
        %v3930 = vld [vmem:[%s166 + $0x38] sm:$0xff]
        %s3931 = scalar_lea.vmem %s1, 1408
        %v3932 = vld [vmem:[%s3931] sm:$0xf]
        %v3933 = vld [vmem:[%s3931 + $0x4] sm:$0xf]
        %v3934 = vld [vmem:[%s3931 + $0x8] sm:$0xf]
        %v3935 = vld [vmem:[%s3931 + $0xc] sm:$0xf]
        %v3936 = vld [vmem:[%s3931 + $0x10] sm:$0xf]
        %v3937 = vld [vmem:[%s3931 + $0x14] sm:$0xf]
        %v3938 = vld [vmem:[%s3931 + $0x18] sm:$0xf]
        %v3939 = vld [vmem:[%s3931 + $0x1c] sm:$0xf]
        %v3940 = vld [vmem:[%s3931 + $0x20] sm:$0xf]
        %v3941 = vld [vmem:[%s3931 + $0x24] sm:$0xf]
        %v3942 = vld [vmem:[%s3931 + $0x28] sm:$0xf]
        %v3943 = vld [vmem:[%s3931 + $0x2c] sm:$0xf]
        %v3944 = vld [vmem:[%s3931 + $0x30] sm:$0xf]
        %v3945 = vld [vmem:[%s3931 + $0x34] sm:$0xf]
        %v3946 = vld [vmem:[%s3931 + $0x38] sm:$0xf]
        %v3947 = vld [vmem:[%s3931 + $0x3c] sm:$0xf]
        %v3948 = vld [vmem:[%s3931 + $0x40] sm:$0xf]
        %v3949 = vld [vmem:[%s3931 + $0x44] sm:$0xf]
        %v3950 = vld [vmem:[%s3931 + $0x48] sm:$0xf]
        %v3951 = vld [vmem:[%s3931 + $0x4c] sm:$0xf]
        %v3952 = vld [vmem:[%s3931 + $0x50] sm:$0xf]
        %v3953 = vld [vmem:[%s3931 + $0x54] sm:$0xf]
        %v3954 = vld [vmem:[%s3931 + $0x58] sm:$0xf]
        %v3955 = vld [vmem:[%s3931 + $0x5c] sm:$0xf]
        %v3956 = vld [vmem:[%s3931 + $0x60] sm:$0xf]
        %v3957 = vld [vmem:[%s3931 + $0x64] sm:$0xf]
        %v3958 = vld [vmem:[%s3931 + $0x68] sm:$0xf]
        %v3959 = vld [vmem:[%s3931 + $0x6c] sm:$0xf]
        %v3960 = vld [vmem:[%s3931 + $0x70] sm:$0xf]
        %v3961 = vld [vmem:[%s3931 + $0x74] sm:$0xf]
        %v3962 = vld [vmem:[%s3931 + $0x78] sm:$0xf]
        %v3963 = vld [vmem:[%s3931 + $0x7c] sm:$0xf]
        %3964 = vst [vmem:[#allocation1] ss:$4 sm:$0xff] %v3874
        %s3965 = scalar_lea.vmem [#allocation1], 1
        %3966 = vst [vmem:[%s3965] ss:$4 sm:$0xff] %v3878
        %s3967 = scalar_lea.vmem [#allocation1], 2
        %3968 = vst [vmem:[%s3967] ss:$4 sm:$0xff] %v3882
        %s3969 = scalar_lea.vmem [#allocation1], 3
        %3970 = vst [vmem:[%s3969] ss:$4 sm:$0xff] %v3886
        %s3971 = scalar_lea.vmem [#allocation1], 32
        %3972 = vst [vmem:[%s3971] ss:$4 sm:$0xff] %v3889
        %s3973 = scalar_lea.vmem [#allocation1], 33
        %3974 = vst [vmem:[%s3973] ss:$4 sm:$0xff] %v3892
        %s3975 = scalar_lea.vmem [#allocation1], 34
        %3976 = vst [vmem:[%s3975] ss:$4 sm:$0xff] %v3895
        %s3977 = scalar_lea.vmem [#allocation1], 35
        %3978 = vst [vmem:[%s3977] ss:$4 sm:$0xff] %v3898
        %v3979 = vld.sshfl [vmem:[#allocation1] sm:$0xff pattern:$0x73625140]
        %v3980 = vld.sshfl [vmem:[#allocation1 + $0x8] sm:$0xff pattern:$0x73625140]
        %v3981 = vld.sshfl [vmem:[#allocation1 + $0x20] sm:$0xff pattern:$0x73625140]
        %v3982 = vld.sshfl [vmem:[#allocation1 + $0x28] sm:$0xff pattern:$0x73625140]
        %3983 = vst [vmem:[#allocation1] ss:$4 sm:$0xff] %v3901
        %3984 = vst [vmem:[%s3965] ss:$4 sm:$0xff] %v3904
        %3985 = vst [vmem:[%s3967] ss:$4 sm:$0xff] %v3907
        %3986 = vst [vmem:[%s3969] ss:$4 sm:$0xff] %v3910
        %3987 = vst [vmem:[%s3971] ss:$4 sm:$0xff] %v3913
        %3988 = vst [vmem:[%s3973] ss:$4 sm:$0xff] %v3916
        %3989 = vst [vmem:[%s3975] ss:$4 sm:$0xff] %v3919
        %3990 = vst [vmem:[%s3977] ss:$4 sm:$0xff] %v3922
        %v3991 = vld.sshfl [vmem:[#allocation1] sm:$0xff pattern:$0x73625140]
        %v3992 = vld.sshfl [vmem:[#allocation1 + $0x8] sm:$0xff pattern:$0x73625140]
        %v3993 = vld.sshfl [vmem:[#allocation1 + $0x20] sm:$0xff pattern:$0x73625140]
        %v3994 = vld.sshfl [vmem:[#allocation1 + $0x28] sm:$0xff pattern:$0x73625140]
        %v4035 = vunpack.c.l.b16 %v3932
        %v4036 = vunpack.c.l.b16 %v3933
        %v4037 = vunpack.c.l.b16 %v3934
        %v4038 = vunpack.c.l.b16 %v3935
        %v4039 = vunpack.c.l.b16 %v3936
        %v4040 = vunpack.c.l.b16 %v3937
        %v4041 = vunpack.c.l.b16 %v3938
        %v4042 = vunpack.c.l.b16 %v3939
        %v4043 = vunpack.c.l.b16 %v3940
        %v4044 = vunpack.c.l.b16 %v3941
        %v4045 = vunpack.c.l.b16 %v3942
        %v4046 = vunpack.c.l.b16 %v3943
        %v4047 = vunpack.c.l.b16 %v3944
        %v4048 = vunpack.c.l.b16 %v3945
        %v4049 = vunpack.c.l.b16 %v3946
        %v4050 = vunpack.c.l.b16 %v3947
        %v4051 = vunpack.c.l.b16 %v3948
        %v4052 = vunpack.c.l.b16 %v3949
        %v4053 = vunpack.c.l.b16 %v3950
        %v4054 = vunpack.c.l.b16 %v3951
        %v4055 = vunpack.c.l.b16 %v3952
        %v4056 = vunpack.c.l.b16 %v3953
        %v4057 = vunpack.c.l.b16 %v3954
        %v4058 = vunpack.c.l.b16 %v3955
        %v4059 = vunpack.c.l.b16 %v3956
        %v4060 = vunpack.c.l.b16 %v3957
        %v4061 = vunpack.c.l.b16 %v3958
        %v4062 = vunpack.c.l.b16 %v3959
        %v4063 = vunpack.c.l.b16 %v3960
        %v4064 = vunpack.c.l.b16 %v3961
        %v4065 = vunpack.c.l.b16 %v3962
        %v4066 = vunpack.c.l.b16 %v3963
        %v4067 = vpack.c.b16 %v4036, %v4035
        %v4068 = vpack.c.b16 %v4038, %v4037
        %v4069 = vpack.c.b16 %v4040, %v4039
        %v4070 = vpack.c.b16 %v4042, %v4041
        %v4071 = vpack.c.b16 %v4044, %v4043
        %v4072 = vpack.c.b16 %v4046, %v4045
        %v4073 = vpack.c.b16 %v4048, %v4047
        %v4074 = vpack.c.b16 %v4050, %v4049
        %v4075 = vpack.c.b16 %v4052, %v4051
        %v4076 = vpack.c.b16 %v4054, %v4053
        %v4077 = vpack.c.b16 %v4056, %v4055
        %v4078 = vpack.c.b16 %v4058, %v4057
        %v4079 = vpack.c.b16 %v4060, %v4059
        %v4080 = vpack.c.b16 %v4062, %v4061
        %v4081 = vpack.c.b16 %v4064, %v4063
        %v4082 = vpack.c.b16 %v4066, %v4065
        %4099 = vmatpush.bf16.msra.mxu0 %v4074
        %4100 = vmatpush.bf16.msra.mxu0 %v4073
        %4101 = vmatpush.bf16.msra.mxu0 %v4072
        %4102 = vmatpush.bf16.msra.mxu0 %v4071
        %4103 = vmatpush.bf16.msra.mxu0 %v4070
        %4104 = vmatpush.bf16.msra.mxu0 %v4069
        %4105 = vmatpush.bf16.msra.mxu0 %v4068
        %4106 = vmatpush.bf16.msra.mxu0 %v4067
        %4107 = vmatmul.bf16.gmra.mxu0 %v3979
        %v4108 = vpop.f32.mrf.mxu0
        %v4109 = vadd.f32 0.0, %v4108
        %v4110 = vpop.f32.mrf.mxu0
        %v4111 = vadd.f32 0.0, %v4110
        %4112 = vmatmul.bf16.gmra.mxu0 %v3981
        %v4113 = vpop.f32.mrf.mxu0
        %v4114 = vadd.f32 0.0, %v4113
        %v4115 = vpop.f32.mrf.mxu0
        %v4116 = vadd.f32 0.0, %v4115
        %4117 = vmatmul.bf16.gmra.mxu0 %v3991
        %v4118 = vpop.f32.mrf.mxu0
        %v4119 = vadd.f32 0.0, %v4118
        %v4120 = vpop.f32.mrf.mxu0
        %v4121 = vadd.f32 0.0, %v4120
        %4122 = vmatmul.bf16.gmra.mxu0 %v3993
        %v4123 = vpop.f32.mrf.mxu0
        %v4124 = vadd.f32 0.0, %v4123
        %v4125 = vpop.f32.mrf.mxu0
        %v4126 = vadd.f32 0.0, %v4125
        %4127 = vdwg.mxu0
        %4128 = vmatpush.bf16.msra.mxu0 %v4082
        %4129 = vmatpush.bf16.msra.mxu0 %v4081
        %4130 = vmatpush.bf16.msra.mxu0 %v4080
        %4131 = vmatpush.bf16.msra.mxu0 %v4079
        %4132 = vmatpush.bf16.msra.mxu0 %v4078
        %4133 = vmatpush.bf16.msra.mxu0 %v4077
        %4134 = vmatpush.bf16.msra.mxu0 %v4076
        %4135 = vmatpush.bf16.msra.mxu0 %v4075
        %4136 = vmatmul.bf16.gmra.mxu0 %v3980
        %v4137 = vpop.f32.mrf.mxu0
        %v4138 = vadd.f32 %v4109, %v4137
        %v4139 = vpop.f32.mrf.mxu0
        %v4140 = vadd.f32 %v4111, %v4139
        %4141 = vmatmul.bf16.gmra.mxu0 %v3982
        %v4142 = vpop.f32.mrf.mxu0
        %v4143 = vadd.f32 %v4114, %v4142
        %v4144 = vpop.f32.mrf.mxu0
        %v4145 = vadd.f32 %v4116, %v4144
        %4146 = vmatmul.bf16.gmra.mxu0 %v3992
        %v4147 = vpop.f32.mrf.mxu0
        %v4148 = vadd.f32 %v4119, %v4147
        %v4149 = vpop.f32.mrf.mxu0
        %v4150 = vadd.f32 %v4121, %v4149
        %4151 = vmatmul.bf16.gmra.mxu0 %v3994
        %v4152 = vpop.f32.mrf.mxu0
        %v4153 = vadd.f32 %v4124, %v4152
        %v4154 = vpop.f32.mrf.mxu0
        %v4155 = vadd.f32 %v4126, %v4154
        %4156 = vdwg.mxu0
        %v4157 = vadd.f32 %v3923, %v4138
        %v4158 = vadd.f32 %v3924, %v4140
        %v4159 = vadd.f32 %v3925, %v4143
        %v4160 = vadd.f32 %v3926, %v4145
        %v4161 = vadd.f32 %v3927, %v4148
        %v4162 = vadd.f32 %v3928, %v4150
        %v4163 = vadd.f32 %v3929, %v4153
        %v4164 = vadd.f32 %v3930, %v4155
        %4165 = vst [vmem:[%s166] sm:$0xff] %v4157
        %4166 = vst [vmem:[%s166 + $0x8] sm:$0xff] %v4158
        %4167 = vst [vmem:[%s166 + $0x10] sm:$0xff] %v4159
        %4168 = vst [vmem:[%s166 + $0x18] sm:$0xff] %v4160
        %4169 = vst [vmem:[%s166 + $0x20] sm:$0xff] %v4161
        %4170 = vst [vmem:[%s166 + $0x28] sm:$0xff] %v4162
        %4171 = vst [vmem:[%s166 + $0x30] sm:$0xff] %v4163
        %4172 = vst [vmem:[%s166 + $0x38] sm:$0xff] %v4164
        %s4173 = scalar_lea.vmem %s172, 192
        %v4174 = vld [vmem:[%s4173] sm:$0x33]
        %v4175 = vld [vmem:[%s4173 + $0x10] sm:$0x33]
        %v4176 = vld [vmem:[%s4173 + $0x20] sm:$0x33]
        %v4177 = vld [vmem:[%s4173 + $0x30] sm:$0x33]
        %v4178 = vld [vmem:[%s4173 + $0x100] sm:$0x33]
        %v4179 = vld [vmem:[%s4173 + $0x110] sm:$0x33]
        %v4180 = vld [vmem:[%s4173 + $0x120] sm:$0x33]
        %v4181 = vld [vmem:[%s4173 + $0x130] sm:$0x33]
        %v4182 = vld [vmem:[%s4173 + $0x200] sm:$0x33]
        %v4183 = vld [vmem:[%s4173 + $0x210] sm:$0x33]
        %v4184 = vld [vmem:[%s4173 + $0x220] sm:$0x33]
        %v4185 = vld [vmem:[%s4173 + $0x230] sm:$0x33]
        %v4186 = vld [vmem:[%s4173 + $0x300] sm:$0x33]
        %v4187 = vld [vmem:[%s4173 + $0x310] sm:$0x33]
        %v4188 = vld [vmem:[%s4173 + $0x320] sm:$0x33]
        %v4189 = vld [vmem:[%s4173 + $0x330] sm:$0x33]
        %v4206 = vrot.slane %v4174, 2
        %v4207 = vrot.slane %v4175, 2
        %v4208 = vrot.slane %v4176, 2
        %v4209 = vrot.slane %v4177, 2
        %v4210 = vrot.slane %v4178, 2
        %v4211 = vrot.slane %v4179, 2
        %v4212 = vrot.slane %v4180, 2
        %v4213 = vrot.slane %v4181, 2
        %v4214 = vrot.slane %v4182, 2
        %v4215 = vrot.slane %v4183, 2
        %v4216 = vrot.slane %v4184, 2
        %v4217 = vrot.slane %v4185, 2
        %v4218 = vrot.slane %v4186, 2
        %v4219 = vrot.slane %v4187, 2
        %v4220 = vrot.slane %v4188, 2
        %v4221 = vrot.slane %v4189, 2
        %v4224 = vsel %vm235, %v4174, %v4206
        %v4227 = vsel %vm235, %v4175, %v4207
        %v4230 = vsel %vm235, %v4176, %v4208
        %v4233 = vsel %vm235, %v4177, %v4209
        %v4236 = vsel %vm235, %v4178, %v4210
        %v4239 = vsel %vm235, %v4179, %v4211
        %v4242 = vsel %vm235, %v4180, %v4212
        %v4245 = vsel %vm235, %v4181, %v4213
        %v4248 = vsel %vm235, %v4182, %v4214
        %v4251 = vsel %vm235, %v4183, %v4215
        %v4254 = vsel %vm235, %v4184, %v4216
        %v4257 = vsel %vm235, %v4185, %v4217
        %v4260 = vsel %vm235, %v4186, %v4218
        %v4263 = vsel %vm235, %v4187, %v4219
        %v4266 = vsel %vm235, %v4188, %v4220
        %v4269 = vsel %vm235, %v4189, %v4221
        %v4270 = vld [vmem:[%s166] sm:$0xff]
        %v4271 = vld [vmem:[%s166 + $0x8] sm:$0xff]
        %v4272 = vld [vmem:[%s166 + $0x10] sm:$0xff]
        %v4273 = vld [vmem:[%s166 + $0x18] sm:$0xff]
        %v4274 = vld [vmem:[%s166 + $0x20] sm:$0xff]
        %v4275 = vld [vmem:[%s166 + $0x28] sm:$0xff]
        %v4276 = vld [vmem:[%s166 + $0x30] sm:$0xff]
        %v4277 = vld [vmem:[%s166 + $0x38] sm:$0xff]
        %s4278 = scalar_lea.vmem %s1, 1536
        %v4279 = vld [vmem:[%s4278] sm:$0xf]
        %v4280 = vld [vmem:[%s4278 + $0x4] sm:$0xf]
        %v4281 = vld [vmem:[%s4278 + $0x8] sm:$0xf]
        %v4282 = vld [vmem:[%s4278 + $0xc] sm:$0xf]
        %v4283 = vld [vmem:[%s4278 + $0x10] sm:$0xf]
        %v4284 = vld [vmem:[%s4278 + $0x14] sm:$0xf]
        %v4285 = vld [vmem:[%s4278 + $0x18] sm:$0xf]
        %v4286 = vld [vmem:[%s4278 + $0x1c] sm:$0xf]
        %v4287 = vld [vmem:[%s4278 + $0x20] sm:$0xf]
        %v4288 = vld [vmem:[%s4278 + $0x24] sm:$0xf]
        %v4289 = vld [vmem:[%s4278 + $0x28] sm:$0xf]
        %v4290 = vld [vmem:[%s4278 + $0x2c] sm:$0xf]
        %v4291 = vld [vmem:[%s4278 + $0x30] sm:$0xf]
        %v4292 = vld [vmem:[%s4278 + $0x34] sm:$0xf]
        %v4293 = vld [vmem:[%s4278 + $0x38] sm:$0xf]
        %v4294 = vld [vmem:[%s4278 + $0x3c] sm:$0xf]
        %v4295 = vld [vmem:[%s4278 + $0x40] sm:$0xf]
        %v4296 = vld [vmem:[%s4278 + $0x44] sm:$0xf]
        %v4297 = vld [vmem:[%s4278 + $0x48] sm:$0xf]
        %v4298 = vld [vmem:[%s4278 + $0x4c] sm:$0xf]
        %v4299 = vld [vmem:[%s4278 + $0x50] sm:$0xf]
        %v4300 = vld [vmem:[%s4278 + $0x54] sm:$0xf]
        %v4301 = vld [vmem:[%s4278 + $0x58] sm:$0xf]
        %v4302 = vld [vmem:[%s4278 + $0x5c] sm:$0xf]
        %v4303 = vld [vmem:[%s4278 + $0x60] sm:$0xf]
        %v4304 = vld [vmem:[%s4278 + $0x64] sm:$0xf]
        %v4305 = vld [vmem:[%s4278 + $0x68] sm:$0xf]
        %v4306 = vld [vmem:[%s4278 + $0x6c] sm:$0xf]
        %v4307 = vld [vmem:[%s4278 + $0x70] sm:$0xf]
        %v4308 = vld [vmem:[%s4278 + $0x74] sm:$0xf]
        %v4309 = vld [vmem:[%s4278 + $0x78] sm:$0xf]
        %v4310 = vld [vmem:[%s4278 + $0x7c] sm:$0xf]
        %4311 = vst [vmem:[#allocation1] ss:$4 sm:$0xff] %v4224
        %s4312 = scalar_lea.vmem [#allocation1], 1
        %4313 = vst [vmem:[%s4312] ss:$4 sm:$0xff] %v4227
        %s4314 = scalar_lea.vmem [#allocation1], 2
        %4315 = vst [vmem:[%s4314] ss:$4 sm:$0xff] %v4230
        %s4316 = scalar_lea.vmem [#allocation1], 3
        %4317 = vst [vmem:[%s4316] ss:$4 sm:$0xff] %v4233
        %s4318 = scalar_lea.vmem [#allocation1], 32
        %4319 = vst [vmem:[%s4318] ss:$4 sm:$0xff] %v4236
        %s4320 = scalar_lea.vmem [#allocation1], 33
        %4321 = vst [vmem:[%s4320] ss:$4 sm:$0xff] %v4239
        %s4322 = scalar_lea.vmem [#allocation1], 34
        %4323 = vst [vmem:[%s4322] ss:$4 sm:$0xff] %v4242
        %s4324 = scalar_lea.vmem [#allocation1], 35
        %4325 = vst [vmem:[%s4324] ss:$4 sm:$0xff] %v4245
        %v4326 = vld.sshfl [vmem:[#allocation1] sm:$0xff pattern:$0x73625140]
        %v4327 = vld.sshfl [vmem:[#allocation1 + $0x8] sm:$0xff pattern:$0x73625140]
        %v4328 = vld.sshfl [vmem:[#allocation1 + $0x20] sm:$0xff pattern:$0x73625140]
        %v4329 = vld.sshfl [vmem:[#allocation1 + $0x28] sm:$0xff pattern:$0x73625140]
        %4330 = vst [vmem:[#allocation1] ss:$4 sm:$0xff] %v4248
        %4331 = vst [vmem:[%s4312] ss:$4 sm:$0xff] %v4251
        %4332 = vst [vmem:[%s4314] ss:$4 sm:$0xff] %v4254
        %4333 = vst [vmem:[%s4316] ss:$4 sm:$0xff] %v4257
        %4334 = vst [vmem:[%s4318] ss:$4 sm:$0xff] %v4260
        %4335 = vst [vmem:[%s4320] ss:$4 sm:$0xff] %v4263
        %4336 = vst [vmem:[%s4322] ss:$4 sm:$0xff] %v4266
        %4337 = vst [vmem:[%s4324] ss:$4 sm:$0xff] %v4269
        %v4338 = vld.sshfl [vmem:[#allocation1] sm:$0xff pattern:$0x73625140]
        %v4339 = vld.sshfl [vmem:[#allocation1 + $0x8] sm:$0xff pattern:$0x73625140]
        %v4340 = vld.sshfl [vmem:[#allocation1 + $0x20] sm:$0xff pattern:$0x73625140]
        %v4341 = vld.sshfl [vmem:[#allocation1 + $0x28] sm:$0xff pattern:$0x73625140]
        %v4382 = vunpack.c.l.b16 %v4279
        %v4383 = vunpack.c.l.b16 %v4280
        %v4384 = vunpack.c.l.b16 %v4281
        %v4385 = vunpack.c.l.b16 %v4282
        %v4386 = vunpack.c.l.b16 %v4283
        %v4387 = vunpack.c.l.b16 %v4284
        %v4388 = vunpack.c.l.b16 %v4285
        %v4389 = vunpack.c.l.b16 %v4286
        %v4390 = vunpack.c.l.b16 %v4287
        %v4391 = vunpack.c.l.b16 %v4288
        %v4392 = vunpack.c.l.b16 %v4289
        %v4393 = vunpack.c.l.b16 %v4290
        %v4394 = vunpack.c.l.b16 %v4291
        %v4395 = vunpack.c.l.b16 %v4292
        %v4396 = vunpack.c.l.b16 %v4293
        %v4397 = vunpack.c.l.b16 %v4294
        %v4398 = vunpack.c.l.b16 %v4295
        %v4399 = vunpack.c.l.b16 %v4296
        %v4400 = vunpack.c.l.b16 %v4297
        %v4401 = vunpack.c.l.b16 %v4298
        %v4402 = vunpack.c.l.b16 %v4299
        %v4403 = vunpack.c.l.b16 %v4300
        %v4404 = vunpack.c.l.b16 %v4301
        %v4405 = vunpack.c.l.b16 %v4302
        %v4406 = vunpack.c.l.b16 %v4303
        %v4407 = vunpack.c.l.b16 %v4304
        %v4408 = vunpack.c.l.b16 %v4305
        %v4409 = vunpack.c.l.b16 %v4306
        %v4410 = vunpack.c.l.b16 %v4307
        %v4411 = vunpack.c.l.b16 %v4308
        %v4412 = vunpack.c.l.b16 %v4309
        %v4413 = vunpack.c.l.b16 %v4310
        %v4414 = vpack.c.b16 %v4383, %v4382
        %v4415 = vpack.c.b16 %v4385, %v4384
        %v4416 = vpack.c.b16 %v4387, %v4386
        %v4417 = vpack.c.b16 %v4389, %v4388
        %v4418 = vpack.c.b16 %v4391, %v4390
        %v4419 = vpack.c.b16 %v4393, %v4392
        %v4420 = vpack.c.b16 %v4395, %v4394
        %v4421 = vpack.c.b16 %v4397, %v4396
        %v4422 = vpack.c.b16 %v4399, %v4398
        %v4423 = vpack.c.b16 %v4401, %v4400
        %v4424 = vpack.c.b16 %v4403, %v4402
        %v4425 = vpack.c.b16 %v4405, %v4404
        %v4426 = vpack.c.b16 %v4407, %v4406
        %v4427 = vpack.c.b16 %v4409, %v4408
        %v4428 = vpack.c.b16 %v4411, %v4410
        %v4429 = vpack.c.b16 %v4413, %v4412
        %4446 = vmatpush.bf16.msra.mxu0 %v4421
        %4447 = vmatpush.bf16.msra.mxu0 %v4420
        %4448 = vmatpush.bf16.msra.mxu0 %v4419
        %4449 = vmatpush.bf16.msra.mxu0 %v4418
        %4450 = vmatpush.bf16.msra.mxu0 %v4417
        %4451 = vmatpush.bf16.msra.mxu0 %v4416
        %4452 = vmatpush.bf16.msra.mxu0 %v4415
        %4453 = vmatpush.bf16.msra.mxu0 %v4414
        %4454 = vmatmul.bf16.gmra.mxu0 %v4326
        %v4455 = vpop.f32.mrf.mxu0
        %v4456 = vadd.f32 0.0, %v4455
        %v4457 = vpop.f32.mrf.mxu0
        %v4458 = vadd.f32 0.0, %v4457
        %4459 = vmatmul.bf16.gmra.mxu0 %v4328
        %v4460 = vpop.f32.mrf.mxu0
        %v4461 = vadd.f32 0.0, %v4460
        %v4462 = vpop.f32.mrf.mxu0
        %v4463 = vadd.f32 0.0, %v4462
        %4464 = vmatmul.bf16.gmra.mxu0 %v4338
        %v4465 = vpop.f32.mrf.mxu0
        %v4466 = vadd.f32 0.0, %v4465
        %v4467 = vpop.f32.mrf.mxu0
        %v4468 = vadd.f32 0.0, %v4467
        %4469 = vmatmul.bf16.gmra.mxu0 %v4340
        %v4470 = vpop.f32.mrf.mxu0
        %v4471 = vadd.f32 0.0, %v4470
        %v4472 = vpop.f32.mrf.mxu0
        %v4473 = vadd.f32 0.0, %v4472
        %4474 = vdwg.mxu0
        %4475 = vmatpush.bf16.msra.mxu0 %v4429
        %4476 = vmatpush.bf16.msra.mxu0 %v4428
        %4477 = vmatpush.bf16.msra.mxu0 %v4427
        %4478 = vmatpush.bf16.msra.mxu0 %v4426
        %4479 = vmatpush.bf16.msra.mxu0 %v4425
        %4480 = vmatpush.bf16.msra.mxu0 %v4424
        %4481 = vmatpush.bf16.msra.mxu0 %v4423
        %4482 = vmatpush.bf16.msra.mxu0 %v4422
        %4483 = vmatmul.bf16.gmra.mxu0 %v4327
        %v4484 = vpop.f32.mrf.mxu0
        %v4485 = vadd.f32 %v4456, %v4484
        %v4486 = vpop.f32.mrf.mxu0
        %v4487 = vadd.f32 %v4458, %v4486
        %4488 = vmatmul.bf16.gmra.mxu0 %v4329
        %v4489 = vpop.f32.mrf.mxu0
        %v4490 = vadd.f32 %v4461, %v4489
        %v4491 = vpop.f32.mrf.mxu0
        %v4492 = vadd.f32 %v4463, %v4491
        %4493 = vmatmul.bf16.gmra.mxu0 %v4339
        %v4494 = vpop.f32.mrf.mxu0
        %v4495 = vadd.f32 %v4466, %v4494
        %v4496 = vpop.f32.mrf.mxu0
        %v4497 = vadd.f32 %v4468, %v4496
        %4498 = vmatmul.bf16.gmra.mxu0 %v4341
        %v4499 = vpop.f32.mrf.mxu0
        %v4500 = vadd.f32 %v4471, %v4499
        %v4501 = vpop.f32.mrf.mxu0
        %v4502 = vadd.f32 %v4473, %v4501
        %4503 = vdwg.mxu0
        %v4504 = vadd.f32 %v4270, %v4485
        %v4505 = vadd.f32 %v4271, %v4487
        %v4506 = vadd.f32 %v4272, %v4490
        %v4507 = vadd.f32 %v4273, %v4492
        %v4508 = vadd.f32 %v4274, %v4495
        %v4509 = vadd.f32 %v4275, %v4497
        %v4510 = vadd.f32 %v4276, %v4500
        %v4511 = vadd.f32 %v4277, %v4502
        %4512 = vst [vmem:[%s166] sm:$0xff] %v4504
        %4513 = vst [vmem:[%s166 + $0x8] sm:$0xff] %v4505
        %4514 = vst [vmem:[%s166 + $0x10] sm:$0xff] %v4506
        %4515 = vst [vmem:[%s166 + $0x18] sm:$0xff] %v4507
        %4516 = vst [vmem:[%s166 + $0x20] sm:$0xff] %v4508
        %4517 = vst [vmem:[%s166 + $0x28] sm:$0xff] %v4509
        %4518 = vst [vmem:[%s166 + $0x30] sm:$0xff] %v4510
        %4519 = vst [vmem:[%s166 + $0x38] sm:$0xff] %v4511
        %v4520 = vld [vmem:[%s4173] sm:$0xcc]
        %v4521 = vld [vmem:[%s4173 + $0x10] sm:$0xcc]
        %v4522 = vld [vmem:[%s4173 + $0x20] sm:$0xcc]
        %v4523 = vld [vmem:[%s4173 + $0x30] sm:$0xcc]
        %v4524 = vld [vmem:[%s4173 + $0x100] sm:$0xcc]
        %v4525 = vld [vmem:[%s4173 + $0x110] sm:$0xcc]
        %v4526 = vld [vmem:[%s4173 + $0x120] sm:$0xcc]
        %v4527 = vld [vmem:[%s4173 + $0x130] sm:$0xcc]
        %v4528 = vld [vmem:[%s4173 + $0x200] sm:$0xcc]
        %v4529 = vld [vmem:[%s4173 + $0x210] sm:$0xcc]
        %v4530 = vld [vmem:[%s4173 + $0x220] sm:$0xcc]
        %v4531 = vld [vmem:[%s4173 + $0x230] sm:$0xcc]
        %v4532 = vld [vmem:[%s4173 + $0x300] sm:$0xcc]
        %v4533 = vld [vmem:[%s4173 + $0x310] sm:$0xcc]
        %v4534 = vld [vmem:[%s4173 + $0x320] sm:$0xcc]
        %v4535 = vld [vmem:[%s4173 + $0x330] sm:$0xcc]
        %4537 = vst.sshfl [vmem:[#allocation1] sm:$0xff pattern:$0x75643120] %v4520
        %s4538 = scalar_lea.vmem [#allocation1], 1
        %v4539 = vld [vmem:[%s4538] ss:$2 sm:$0xff]
        %4541 = vst.sshfl [vmem:[#allocation1 + $0x10] sm:$0xff pattern:$0x75643120] %v4521
        %s4542 = scalar_lea.vmem [#allocation1], 17
        %v4543 = vld [vmem:[%s4542] ss:$2 sm:$0xff]
        %4545 = vst.sshfl [vmem:[#allocation1 + $0x20] sm:$0xff pattern:$0x75643120] %v4522
        %s4546 = scalar_lea.vmem [#allocation1], 33
        %v4547 = vld [vmem:[%s4546] ss:$2 sm:$0xff]
        %4549 = vst.sshfl [vmem:[#allocation1 + $0x30] sm:$0xff pattern:$0x75643120] %v4523
        %s4550 = scalar_lea.vmem [#allocation1], 49
        %v4551 = vld [vmem:[%s4550] ss:$2 sm:$0xff]
        %4553 = vst.sshfl [vmem:[#allocation1] sm:$0xff pattern:$0x75643120] %v4524
        %v4554 = vld [vmem:[%s4538] ss:$2 sm:$0xff]
        %4556 = vst.sshfl [vmem:[#allocation1 + $0x10] sm:$0xff pattern:$0x75643120] %v4525
        %v4557 = vld [vmem:[%s4542] ss:$2 sm:$0xff]
        %4559 = vst.sshfl [vmem:[#allocation1 + $0x20] sm:$0xff pattern:$0x75643120] %v4526
        %v4560 = vld [vmem:[%s4546] ss:$2 sm:$0xff]
        %4562 = vst.sshfl [vmem:[#allocation1 + $0x30] sm:$0xff pattern:$0x75643120] %v4527
        %v4563 = vld [vmem:[%s4550] ss:$2 sm:$0xff]
        %4565 = vst.sshfl [vmem:[#allocation1] sm:$0xff pattern:$0x75643120] %v4528
        %v4566 = vld [vmem:[%s4538] ss:$2 sm:$0xff]
        %4568 = vst.sshfl [vmem:[#allocation1 + $0x10] sm:$0xff pattern:$0x75643120] %v4529
        %v4569 = vld [vmem:[%s4542] ss:$2 sm:$0xff]
        %4571 = vst.sshfl [vmem:[#allocation1 + $0x20] sm:$0xff pattern:$0x75643120] %v4530
        %v4572 = vld [vmem:[%s4546] ss:$2 sm:$0xff]
        %4574 = vst.sshfl [vmem:[#allocation1 + $0x30] sm:$0xff pattern:$0x75643120] %v4531
        %v4575 = vld [vmem:[%s4550] ss:$2 sm:$0xff]
        %4577 = vst.sshfl [vmem:[#allocation1] sm:$0xff pattern:$0x75643120] %v4532
        %v4578 = vld [vmem:[%s4538] ss:$2 sm:$0xff]
        %4580 = vst.sshfl [vmem:[#allocation1 + $0x10] sm:$0xff pattern:$0x75643120] %v4533
        %v4581 = vld [vmem:[%s4542] ss:$2 sm:$0xff]
        %4583 = vst.sshfl [vmem:[#allocation1 + $0x20] sm:$0xff pattern:$0x75643120] %v4534
        %v4584 = vld [vmem:[%s4546] ss:$2 sm:$0xff]
        %4586 = vst.sshfl [vmem:[#allocation1 + $0x30] sm:$0xff pattern:$0x75643120] %v4535
        %v4587 = vld [vmem:[%s4550] ss:$2 sm:$0xff]
        %v4588 = vld [vmem:[%s166] sm:$0xff]
        %v4589 = vld [vmem:[%s166 + $0x8] sm:$0xff]
        %v4590 = vld [vmem:[%s166 + $0x10] sm:$0xff]
        %v4591 = vld [vmem:[%s166 + $0x18] sm:$0xff]
        %v4592 = vld [vmem:[%s166 + $0x20] sm:$0xff]
        %v4593 = vld [vmem:[%s166 + $0x28] sm:$0xff]
        %v4594 = vld [vmem:[%s166 + $0x30] sm:$0xff]
        %v4595 = vld [vmem:[%s166 + $0x38] sm:$0xff]
        %s4596 = scalar_lea.vmem %s1, 1664
        %v4597 = vld [vmem:[%s4596] sm:$0xf]
        %v4598 = vld [vmem:[%s4596 + $0x4] sm:$0xf]
        %v4599 = vld [vmem:[%s4596 + $0x8] sm:$0xf]
        %v4600 = vld [vmem:[%s4596 + $0xc] sm:$0xf]
        %v4601 = vld [vmem:[%s4596 + $0x10] sm:$0xf]
        %v4602 = vld [vmem:[%s4596 + $0x14] sm:$0xf]
        %v4603 = vld [vmem:[%s4596 + $0x18] sm:$0xf]
        %v4604 = vld [vmem:[%s4596 + $0x1c] sm:$0xf]
        %v4605 = vld [vmem:[%s4596 + $0x20] sm:$0xf]
        %v4606 = vld [vmem:[%s4596 + $0x24] sm:$0xf]
        %v4607 = vld [vmem:[%s4596 + $0x28] sm:$0xf]
        %v4608 = vld [vmem:[%s4596 + $0x2c] sm:$0xf]
        %v4609 = vld [vmem:[%s4596 + $0x30] sm:$0xf]
        %v4610 = vld [vmem:[%s4596 + $0x34] sm:$0xf]
        %v4611 = vld [vmem:[%s4596 + $0x38] sm:$0xf]
        %v4612 = vld [vmem:[%s4596 + $0x3c] sm:$0xf]
        %v4613 = vld [vmem:[%s4596 + $0x40] sm:$0xf]
        %v4614 = vld [vmem:[%s4596 + $0x44] sm:$0xf]
        %v4615 = vld [vmem:[%s4596 + $0x48] sm:$0xf]
        %v4616 = vld [vmem:[%s4596 + $0x4c] sm:$0xf]
        %v4617 = vld [vmem:[%s4596 + $0x50] sm:$0xf]
        %v4618 = vld [vmem:[%s4596 + $0x54] sm:$0xf]
        %v4619 = vld [vmem:[%s4596 + $0x58] sm:$0xf]
        %v4620 = vld [vmem:[%s4596 + $0x5c] sm:$0xf]
        %v4621 = vld [vmem:[%s4596 + $0x60] sm:$0xf]
        %v4622 = vld [vmem:[%s4596 + $0x64] sm:$0xf]
        %v4623 = vld [vmem:[%s4596 + $0x68] sm:$0xf]
        %v4624 = vld [vmem:[%s4596 + $0x6c] sm:$0xf]
        %v4625 = vld [vmem:[%s4596 + $0x70] sm:$0xf]
        %v4626 = vld [vmem:[%s4596 + $0x74] sm:$0xf]
        %v4627 = vld [vmem:[%s4596 + $0x78] sm:$0xf]
        %v4628 = vld [vmem:[%s4596 + $0x7c] sm:$0xf]
        %4629 = vst [vmem:[#allocation1] ss:$4 sm:$0xff] %v4539
        %s4630 = scalar_lea.vmem [#allocation1], 1
        %4631 = vst [vmem:[%s4630] ss:$4 sm:$0xff] %v4543
        %s4632 = scalar_lea.vmem [#allocation1], 2
        %4633 = vst [vmem:[%s4632] ss:$4 sm:$0xff] %v4547
        %s4634 = scalar_lea.vmem [#allocation1], 3
        %4635 = vst [vmem:[%s4634] ss:$4 sm:$0xff] %v4551
        %s4636 = scalar_lea.vmem [#allocation1], 32
        %4637 = vst [vmem:[%s4636] ss:$4 sm:$0xff] %v4554
        %s4638 = scalar_lea.vmem [#allocation1], 33
        %4639 = vst [vmem:[%s4638] ss:$4 sm:$0xff] %v4557
        %s4640 = scalar_lea.vmem [#allocation1], 34
        %4641 = vst [vmem:[%s4640] ss:$4 sm:$0xff] %v4560
        %s4642 = scalar_lea.vmem [#allocation1], 35
        %4643 = vst [vmem:[%s4642] ss:$4 sm:$0xff] %v4563
        %v4644 = vld.sshfl [vmem:[#allocation1] sm:$0xff pattern:$0x73625140]
        %v4645 = vld.sshfl [vmem:[#allocation1 + $0x8] sm:$0xff pattern:$0x73625140]
        %v4646 = vld.sshfl [vmem:[#allocation1 + $0x20] sm:$0xff pattern:$0x73625140]
        %v4647 = vld.sshfl [vmem:[#allocation1 + $0x28] sm:$0xff pattern:$0x73625140]
        %4648 = vst [vmem:[#allocation1] ss:$4 sm:$0xff] %v4566
        %4649 = vst [vmem:[%s4630] ss:$4 sm:$0xff] %v4569
        %4650 = vst [vmem:[%s4632] ss:$4 sm:$0xff] %v4572
        %4651 = vst [vmem:[%s4634] ss:$4 sm:$0xff] %v4575
        %4652 = vst [vmem:[%s4636] ss:$4 sm:$0xff] %v4578
        %4653 = vst [vmem:[%s4638] ss:$4 sm:$0xff] %v4581
        %4654 = vst [vmem:[%s4640] ss:$4 sm:$0xff] %v4584
        %4655 = vst [vmem:[%s4642] ss:$4 sm:$0xff] %v4587
        %v4656 = vld.sshfl [vmem:[#allocation1] sm:$0xff pattern:$0x73625140]
        %v4657 = vld.sshfl [vmem:[#allocation1 + $0x8] sm:$0xff pattern:$0x73625140]
        %v4658 = vld.sshfl [vmem:[#allocation1 + $0x20] sm:$0xff pattern:$0x73625140]
        %v4659 = vld.sshfl [vmem:[#allocation1 + $0x28] sm:$0xff pattern:$0x73625140]
        %v4700 = vunpack.c.l.b16 %v4597
        %v4701 = vunpack.c.l.b16 %v4598
        %v4702 = vunpack.c.l.b16 %v4599
        %v4703 = vunpack.c.l.b16 %v4600
        %v4704 = vunpack.c.l.b16 %v4601
        %v4705 = vunpack.c.l.b16 %v4602
        %v4706 = vunpack.c.l.b16 %v4603
        %v4707 = vunpack.c.l.b16 %v4604
        %v4708 = vunpack.c.l.b16 %v4605
        %v4709 = vunpack.c.l.b16 %v4606
        %v4710 = vunpack.c.l.b16 %v4607
        %v4711 = vunpack.c.l.b16 %v4608
        %v4712 = vunpack.c.l.b16 %v4609
        %v4713 = vunpack.c.l.b16 %v4610
        %v4714 = vunpack.c.l.b16 %v4611
        %v4715 = vunpack.c.l.b16 %v4612
        %v4716 = vunpack.c.l.b16 %v4613
        %v4717 = vunpack.c.l.b16 %v4614
        %v4718 = vunpack.c.l.b16 %v4615
        %v4719 = vunpack.c.l.b16 %v4616
        %v4720 = vunpack.c.l.b16 %v4617
        %v4721 = vunpack.c.l.b16 %v4618
        %v4722 = vunpack.c.l.b16 %v4619
        %v4723 = vunpack.c.l.b16 %v4620
        %v4724 = vunpack.c.l.b16 %v4621
        %v4725 = vunpack.c.l.b16 %v4622
        %v4726 = vunpack.c.l.b16 %v4623
        %v4727 = vunpack.c.l.b16 %v4624
        %v4728 = vunpack.c.l.b16 %v4625
        %v4729 = vunpack.c.l.b16 %v4626
        %v4730 = vunpack.c.l.b16 %v4627
        %v4731 = vunpack.c.l.b16 %v4628
        %v4732 = vpack.c.b16 %v4701, %v4700
        %v4733 = vpack.c.b16 %v4703, %v4702
        %v4734 = vpack.c.b16 %v4705, %v4704
        %v4735 = vpack.c.b16 %v4707, %v4706
        %v4736 = vpack.c.b16 %v4709, %v4708
        %v4737 = vpack.c.b16 %v4711, %v4710
        %v4738 = vpack.c.b16 %v4713, %v4712
        %v4739 = vpack.c.b16 %v4715, %v4714
        %v4740 = vpack.c.b16 %v4717, %v4716
        %v4741 = vpack.c.b16 %v4719, %v4718
        %v4742 = vpack.c.b16 %v4721, %v4720
        %v4743 = vpack.c.b16 %v4723, %v4722
        %v4744 = vpack.c.b16 %v4725, %v4724
        %v4745 = vpack.c.b16 %v4727, %v4726
        %v4746 = vpack.c.b16 %v4729, %v4728
        %v4747 = vpack.c.b16 %v4731, %v4730
        %4764 = vmatpush.bf16.msra.mxu0 %v4739
        %4765 = vmatpush.bf16.msra.mxu0 %v4738
        %4766 = vmatpush.bf16.msra.mxu0 %v4737
        %4767 = vmatpush.bf16.msra.mxu0 %v4736
        %4768 = vmatpush.bf16.msra.mxu0 %v4735
        %4769 = vmatpush.bf16.msra.mxu0 %v4734
        %4770 = vmatpush.bf16.msra.mxu0 %v4733
        %4771 = vmatpush.bf16.msra.mxu0 %v4732
        %4772 = vmatmul.bf16.gmra.mxu0 %v4644
        %v4773 = vpop.f32.mrf.mxu0
        %v4774 = vadd.f32 0.0, %v4773
        %v4775 = vpop.f32.mrf.mxu0
        %v4776 = vadd.f32 0.0, %v4775
        %4777 = vmatmul.bf16.gmra.mxu0 %v4646
        %v4778 = vpop.f32.mrf.mxu0
        %v4779 = vadd.f32 0.0, %v4778
        %v4780 = vpop.f32.mrf.mxu0
        %v4781 = vadd.f32 0.0, %v4780
        %4782 = vmatmul.bf16.gmra.mxu0 %v4656
        %v4783 = vpop.f32.mrf.mxu0
        %v4784 = vadd.f32 0.0, %v4783
        %v4785 = vpop.f32.mrf.mxu0
        %v4786 = vadd.f32 0.0, %v4785
        %4787 = vmatmul.bf16.gmra.mxu0 %v4658
        %v4788 = vpop.f32.mrf.mxu0
        %v4789 = vadd.f32 0.0, %v4788
        %v4790 = vpop.f32.mrf.mxu0
        %v4791 = vadd.f32 0.0, %v4790
        %4792 = vdwg.mxu0
        %4793 = vmatpush.bf16.msra.mxu0 %v4747
        %4794 = vmatpush.bf16.msra.mxu0 %v4746
        %4795 = vmatpush.bf16.msra.mxu0 %v4745
        %4796 = vmatpush.bf16.msra.mxu0 %v4744
        %4797 = vmatpush.bf16.msra.mxu0 %v4743
        %4798 = vmatpush.bf16.msra.mxu0 %v4742
        %4799 = vmatpush.bf16.msra.mxu0 %v4741
        %4800 = vmatpush.bf16.msra.mxu0 %v4740
        %4801 = vmatmul.bf16.gmra.mxu0 %v4645
        %v4802 = vpop.f32.mrf.mxu0
        %v4803 = vadd.f32 %v4774, %v4802
        %v4804 = vpop.f32.mrf.mxu0
        %v4805 = vadd.f32 %v4776, %v4804
        %4806 = vmatmul.bf16.gmra.mxu0 %v4647
        %v4807 = vpop.f32.mrf.mxu0
        %v4808 = vadd.f32 %v4779, %v4807
        %v4809 = vpop.f32.mrf.mxu0
        %v4810 = vadd.f32 %v4781, %v4809
        %4811 = vmatmul.bf16.gmra.mxu0 %v4657
        %v4812 = vpop.f32.mrf.mxu0
        %v4813 = vadd.f32 %v4784, %v4812
        %v4814 = vpop.f32.mrf.mxu0
        %v4815 = vadd.f32 %v4786, %v4814
        %4816 = vmatmul.bf16.gmra.mxu0 %v4659
        %v4817 = vpop.f32.mrf.mxu0
        %v4818 = vadd.f32 %v4789, %v4817
        %v4819 = vpop.f32.mrf.mxu0
        %v4820 = vadd.f32 %v4791, %v4819
        %4821 = vdwg.mxu0
        %v4822 = vadd.f32 %v4588, %v4803
        %v4823 = vadd.f32 %v4589, %v4805
        %v4824 = vadd.f32 %v4590, %v4808
        %v4825 = vadd.f32 %v4591, %v4810
        %v4826 = vadd.f32 %v4592, %v4813
        %v4827 = vadd.f32 %v4593, %v4815
        %v4828 = vadd.f32 %v4594, %v4818
        %v4829 = vadd.f32 %v4595, %v4820
        %4830 = vst [vmem:[%s166] sm:$0xff] %v4822
        %4831 = vst [vmem:[%s166 + $0x8] sm:$0xff] %v4823
        %4832 = vst [vmem:[%s166 + $0x10] sm:$0xff] %v4824
        %4833 = vst [vmem:[%s166 + $0x18] sm:$0xff] %v4825
        %4834 = vst [vmem:[%s166 + $0x20] sm:$0xff] %v4826
        %4835 = vst [vmem:[%s166 + $0x28] sm:$0xff] %v4827
        %4836 = vst [vmem:[%s166 + $0x30] sm:$0xff] %v4828
        %4837 = vst [vmem:[%s166 + $0x38] sm:$0xff] %v4829
        %v4838 = vld [vmem:[%s4173 + $0x8] sm:$0x33]
        %v4839 = vld [vmem:[%s4173 + $0x18] sm:$0x33]
        %v4840 = vld [vmem:[%s4173 + $0x28] sm:$0x33]
        %v4841 = vld [vmem:[%s4173 + $0x38] sm:$0x33]
        %v4842 = vld [vmem:[%s4173 + $0x108] sm:$0x33]
        %v4843 = vld [vmem:[%s4173 + $0x118] sm:$0x33]
        %v4844 = vld [vmem:[%s4173 + $0x128] sm:$0x33]
        %v4845 = vld [vmem:[%s4173 + $0x138] sm:$0x33]
        %v4846 = vld [vmem:[%s4173 + $0x208] sm:$0x33]
        %v4847 = vld [vmem:[%s4173 + $0x218] sm:$0x33]
        %v4848 = vld [vmem:[%s4173 + $0x228] sm:$0x33]
        %v4849 = vld [vmem:[%s4173 + $0x238] sm:$0x33]
        %v4850 = vld [vmem:[%s4173 + $0x308] sm:$0x33]
        %v4851 = vld [vmem:[%s4173 + $0x318] sm:$0x33]
        %v4852 = vld [vmem:[%s4173 + $0x328] sm:$0x33]
        %v4853 = vld [vmem:[%s4173 + $0x338] sm:$0x33]
        %v4870 = vrot.slane %v4838, 2
        %v4871 = vrot.slane %v4839, 2
        %v4872 = vrot.slane %v4840, 2
        %v4873 = vrot.slane %v4841, 2
        %v4874 = vrot.slane %v4842, 2
        %v4875 = vrot.slane %v4843, 2
        %v4876 = vrot.slane %v4844, 2
        %v4877 = vrot.slane %v4845, 2
        %v4878 = vrot.slane %v4846, 2
        %v4879 = vrot.slane %v4847, 2
        %v4880 = vrot.slane %v4848, 2
        %v4881 = vrot.slane %v4849, 2
        %v4882 = vrot.slane %v4850, 2
        %v4883 = vrot.slane %v4851, 2
        %v4884 = vrot.slane %v4852, 2
        %v4885 = vrot.slane %v4853, 2
        %v4888 = vsel %vm235, %v4838, %v4870
        %v4891 = vsel %vm235, %v4839, %v4871
        %v4894 = vsel %vm235, %v4840, %v4872
        %v4897 = vsel %vm235, %v4841, %v4873
        %v4900 = vsel %vm235, %v4842, %v4874
        %v4903 = vsel %vm235, %v4843, %v4875
        %v4906 = vsel %vm235, %v4844, %v4876
        %v4909 = vsel %vm235, %v4845, %v4877
        %v4912 = vsel %vm235, %v4846, %v4878
        %v4915 = vsel %vm235, %v4847, %v4879
        %v4918 = vsel %vm235, %v4848, %v4880
        %v4921 = vsel %vm235, %v4849, %v4881
        %v4924 = vsel %vm235, %v4850, %v4882
        %v4927 = vsel %vm235, %v4851, %v4883
        %v4930 = vsel %vm235, %v4852, %v4884
        %v4933 = vsel %vm235, %v4853, %v4885
        %v4934 = vld [vmem:[%s166] sm:$0xff]
        %v4935 = vld [vmem:[%s166 + $0x8] sm:$0xff]
        %v4936 = vld [vmem:[%s166 + $0x10] sm:$0xff]
        %v4937 = vld [vmem:[%s166 + $0x18] sm:$0xff]
        %v4938 = vld [vmem:[%s166 + $0x20] sm:$0xff]
        %v4939 = vld [vmem:[%s166 + $0x28] sm:$0xff]
        %v4940 = vld [vmem:[%s166 + $0x30] sm:$0xff]
        %v4941 = vld [vmem:[%s166 + $0x38] sm:$0xff]
        %s4942 = scalar_lea.vmem %s1, 1792
        %v4943 = vld [vmem:[%s4942] sm:$0xf]
        %v4944 = vld [vmem:[%s4942 + $0x4] sm:$0xf]
        %v4945 = vld [vmem:[%s4942 + $0x8] sm:$0xf]
        %v4946 = vld [vmem:[%s4942 + $0xc] sm:$0xf]
        %v4947 = vld [vmem:[%s4942 + $0x10] sm:$0xf]
        %v4948 = vld [vmem:[%s4942 + $0x14] sm:$0xf]
        %v4949 = vld [vmem:[%s4942 + $0x18] sm:$0xf]
        %v4950 = vld [vmem:[%s4942 + $0x1c] sm:$0xf]
        %v4951 = vld [vmem:[%s4942 + $0x20] sm:$0xf]
        %v4952 = vld [vmem:[%s4942 + $0x24] sm:$0xf]
        %v4953 = vld [vmem:[%s4942 + $0x28] sm:$0xf]
        %v4954 = vld [vmem:[%s4942 + $0x2c] sm:$0xf]
        %v4955 = vld [vmem:[%s4942 + $0x30] sm:$0xf]
        %v4956 = vld [vmem:[%s4942 + $0x34] sm:$0xf]
        %v4957 = vld [vmem:[%s4942 + $0x38] sm:$0xf]
        %v4958 = vld [vmem:[%s4942 + $0x3c] sm:$0xf]
        %v4959 = vld [vmem:[%s4942 + $0x40] sm:$0xf]
        %v4960 = vld [vmem:[%s4942 + $0x44] sm:$0xf]
        %v4961 = vld [vmem:[%s4942 + $0x48] sm:$0xf]
        %v4962 = vld [vmem:[%s4942 + $0x4c] sm:$0xf]
        %v4963 = vld [vmem:[%s4942 + $0x50] sm:$0xf]
        %v4964 = vld [vmem:[%s4942 + $0x54] sm:$0xf]
        %v4965 = vld [vmem:[%s4942 + $0x58] sm:$0xf]
        %v4966 = vld [vmem:[%s4942 + $0x5c] sm:$0xf]
        %v4967 = vld [vmem:[%s4942 + $0x60] sm:$0xf]
        %v4968 = vld [vmem:[%s4942 + $0x64] sm:$0xf]
        %v4969 = vld [vmem:[%s4942 + $0x68] sm:$0xf]
        %v4970 = vld [vmem:[%s4942 + $0x6c] sm:$0xf]
        %v4971 = vld [vmem:[%s4942 + $0x70] sm:$0xf]
        %v4972 = vld [vmem:[%s4942 + $0x74] sm:$0xf]
        %v4973 = vld [vmem:[%s4942 + $0x78] sm:$0xf]
        %v4974 = vld [vmem:[%s4942 + $0x7c] sm:$0xf]
        %4975 = vst [vmem:[#allocation1] ss:$4 sm:$0xff] %v4888
        %s4976 = scalar_lea.vmem [#allocation1], 1
        %4977 = vst [vmem:[%s4976] ss:$4 sm:$0xff] %v4891
        %s4978 = scalar_lea.vmem [#allocation1], 2
        %4979 = vst [vmem:[%s4978] ss:$4 sm:$0xff] %v4894
        %s4980 = scalar_lea.vmem [#allocation1], 3
        %4981 = vst [vmem:[%s4980] ss:$4 sm:$0xff] %v4897
        %s4982 = scalar_lea.vmem [#allocation1], 32
        %4983 = vst [vmem:[%s4982] ss:$4 sm:$0xff] %v4900
        %s4984 = scalar_lea.vmem [#allocation1], 33
        %4985 = vst [vmem:[%s4984] ss:$4 sm:$0xff] %v4903
        %s4986 = scalar_lea.vmem [#allocation1], 34
        %4987 = vst [vmem:[%s4986] ss:$4 sm:$0xff] %v4906
        %s4988 = scalar_lea.vmem [#allocation1], 35
        %4989 = vst [vmem:[%s4988] ss:$4 sm:$0xff] %v4909
        %v4990 = vld.sshfl [vmem:[#allocation1] sm:$0xff pattern:$0x73625140]
        %v4991 = vld.sshfl [vmem:[#allocation1 + $0x8] sm:$0xff pattern:$0x73625140]
        %v4992 = vld.sshfl [vmem:[#allocation1 + $0x20] sm:$0xff pattern:$0x73625140]
        %v4993 = vld.sshfl [vmem:[#allocation1 + $0x28] sm:$0xff pattern:$0x73625140]
        %4994 = vst [vmem:[#allocation1] ss:$4 sm:$0xff] %v4912
        %4995 = vst [vmem:[%s4976] ss:$4 sm:$0xff] %v4915
        %4996 = vst [vmem:[%s4978] ss:$4 sm:$0xff] %v4918
        %4997 = vst [vmem:[%s4980] ss:$4 sm:$0xff] %v4921
        %4998 = vst [vmem:[%s4982] ss:$4 sm:$0xff] %v4924
        %4999 = vst [vmem:[%s4984] ss:$4 sm:$0xff] %v4927
        %5000 = vst [vmem:[%s4986] ss:$4 sm:$0xff] %v4930
        %5001 = vst [vmem:[%s4988] ss:$4 sm:$0xff] %v4933
        %v5002 = vld.sshfl [vmem:[#allocation1] sm:$0xff pattern:$0x73625140]
        %v5003 = vld.sshfl [vmem:[#allocation1 + $0x8] sm:$0xff pattern:$0x73625140]
        %v5004 = vld.sshfl [vmem:[#allocation1 + $0x20] sm:$0xff pattern:$0x73625140]
        %v5005 = vld.sshfl [vmem:[#allocation1 + $0x28] sm:$0xff pattern:$0x73625140]
        %v5046 = vunpack.c.l.b16 %v4943
        %v5047 = vunpack.c.l.b16 %v4944
        %v5048 = vunpack.c.l.b16 %v4945
        %v5049 = vunpack.c.l.b16 %v4946
        %v5050 = vunpack.c.l.b16 %v4947
        %v5051 = vunpack.c.l.b16 %v4948
        %v5052 = vunpack.c.l.b16 %v4949
        %v5053 = vunpack.c.l.b16 %v4950
        %v5054 = vunpack.c.l.b16 %v4951
        %v5055 = vunpack.c.l.b16 %v4952
        %v5056 = vunpack.c.l.b16 %v4953
        %v5057 = vunpack.c.l.b16 %v4954
        %v5058 = vunpack.c.l.b16 %v4955
        %v5059 = vunpack.c.l.b16 %v4956
        %v5060 = vunpack.c.l.b16 %v4957
        %v5061 = vunpack.c.l.b16 %v4958
        %v5062 = vunpack.c.l.b16 %v4959
        %v5063 = vunpack.c.l.b16 %v4960
        %v5064 = vunpack.c.l.b16 %v4961
        %v5065 = vunpack.c.l.b16 %v4962
        %v5066 = vunpack.c.l.b16 %v4963
        %v5067 = vunpack.c.l.b16 %v4964
        %v5068 = vunpack.c.l.b16 %v4965
        %v5069 = vunpack.c.l.b16 %v4966
        %v5070 = vunpack.c.l.b16 %v4967
        %v5071 = vunpack.c.l.b16 %v4968
        %v5072 = vunpack.c.l.b16 %v4969
        %v5073 = vunpack.c.l.b16 %v4970
        %v5074 = vunpack.c.l.b16 %v4971
        %v5075 = vunpack.c.l.b16 %v4972
        %v5076 = vunpack.c.l.b16 %v4973
        %v5077 = vunpack.c.l.b16 %v4974
        %v5078 = vpack.c.b16 %v5047, %v5046
        %v5079 = vpack.c.b16 %v5049, %v5048
        %v5080 = vpack.c.b16 %v5051, %v5050
        %v5081 = vpack.c.b16 %v5053, %v5052
        %v5082 = vpack.c.b16 %v5055, %v5054
        %v5083 = vpack.c.b16 %v5057, %v5056
        %v5084 = vpack.c.b16 %v5059, %v5058
        %v5085 = vpack.c.b16 %v5061, %v5060
        %v5086 = vpack.c.b16 %v5063, %v5062
        %v5087 = vpack.c.b16 %v5065, %v5064
        %v5088 = vpack.c.b16 %v5067, %v5066
        %v5089 = vpack.c.b16 %v5069, %v5068
        %v5090 = vpack.c.b16 %v5071, %v5070
        %v5091 = vpack.c.b16 %v5073, %v5072
        %v5092 = vpack.c.b16 %v5075, %v5074
        %v5093 = vpack.c.b16 %v5077, %v5076
        %5110 = vmatpush.bf16.msra.mxu0 %v5085
        %5111 = vmatpush.bf16.msra.mxu0 %v5084
        %5112 = vmatpush.bf16.msra.mxu0 %v5083
        %5113 = vmatpush.bf16.msra.mxu0 %v5082
        %5114 = vmatpush.bf16.msra.mxu0 %v5081
        %5115 = vmatpush.bf16.msra.mxu0 %v5080
        %5116 = vmatpush.bf16.msra.mxu0 %v5079
        %5117 = vmatpush.bf16.msra.mxu0 %v5078
        %5118 = vmatmul.bf16.gmra.mxu0 %v4990
        %v5119 = vpop.f32.mrf.mxu0
        %v5120 = vadd.f32 0.0, %v5119
        %v5121 = vpop.f32.mrf.mxu0
        %v5122 = vadd.f32 0.0, %v5121
        %5123 = vmatmul.bf16.gmra.mxu0 %v4992
        %v5124 = vpop.f32.mrf.mxu0
        %v5125 = vadd.f32 0.0, %v5124
        %v5126 = vpop.f32.mrf.mxu0
        %v5127 = vadd.f32 0.0, %v5126
        %5128 = vmatmul.bf16.gmra.mxu0 %v5002
        %v5129 = vpop.f32.mrf.mxu0
        %v5130 = vadd.f32 0.0, %v5129
        %v5131 = vpop.f32.mrf.mxu0
        %v5132 = vadd.f32 0.0, %v5131
        %5133 = vmatmul.bf16.gmra.mxu0 %v5004
        %v5134 = vpop.f32.mrf.mxu0
        %v5135 = vadd.f32 0.0, %v5134
        %v5136 = vpop.f32.mrf.mxu0
        %v5137 = vadd.f32 0.0, %v5136
        %5138 = vdwg.mxu0
        %5139 = vmatpush.bf16.msra.mxu0 %v5093
        %5140 = vmatpush.bf16.msra.mxu0 %v5092
        %5141 = vmatpush.bf16.msra.mxu0 %v5091
        %5142 = vmatpush.bf16.msra.mxu0 %v5090
        %5143 = vmatpush.bf16.msra.mxu0 %v5089
        %5144 = vmatpush.bf16.msra.mxu0 %v5088
        %5145 = vmatpush.bf16.msra.mxu0 %v5087
        %5146 = vmatpush.bf16.msra.mxu0 %v5086
        %5147 = vmatmul.bf16.gmra.mxu0 %v4991
        %v5148 = vpop.f32.mrf.mxu0
        %v5149 = vadd.f32 %v5120, %v5148
        %v5150 = vpop.f32.mrf.mxu0
        %v5151 = vadd.f32 %v5122, %v5150
        %5152 = vmatmul.bf16.gmra.mxu0 %v4993
        %v5153 = vpop.f32.mrf.mxu0
        %v5154 = vadd.f32 %v5125, %v5153
        %v5155 = vpop.f32.mrf.mxu0
        %v5156 = vadd.f32 %v5127, %v5155
        %5157 = vmatmul.bf16.gmra.mxu0 %v5003
        %v5158 = vpop.f32.mrf.mxu0
        %v5159 = vadd.f32 %v5130, %v5158
        %v5160 = vpop.f32.mrf.mxu0
        %v5161 = vadd.f32 %v5132, %v5160
        %5162 = vmatmul.bf16.gmra.mxu0 %v5005
        %v5163 = vpop.f32.mrf.mxu0
        %v5164 = vadd.f32 %v5135, %v5163
        %v5165 = vpop.f32.mrf.mxu0
        %v5166 = vadd.f32 %v5137, %v5165
        %5167 = vdwg.mxu0
        %v5168 = vadd.f32 %v4934, %v5149
        %v5169 = vadd.f32 %v4935, %v5151
        %v5170 = vadd.f32 %v4936, %v5154
        %v5171 = vadd.f32 %v4937, %v5156
        %v5172 = vadd.f32 %v4938, %v5159
        %v5173 = vadd.f32 %v4939, %v5161
        %v5174 = vadd.f32 %v4940, %v5164
        %v5175 = vadd.f32 %v4941, %v5166
        %5176 = vst [vmem:[%s166] sm:$0xff] %v5168
        %5177 = vst [vmem:[%s166 + $0x8] sm:$0xff] %v5169
        %5178 = vst [vmem:[%s166 + $0x10] sm:$0xff] %v5170
        %5179 = vst [vmem:[%s166 + $0x18] sm:$0xff] %v5171
        %5180 = vst [vmem:[%s166 + $0x20] sm:$0xff] %v5172
        %5181 = vst [vmem:[%s166 + $0x28] sm:$0xff] %v5173
        %5182 = vst [vmem:[%s166 + $0x30] sm:$0xff] %v5174
        %5183 = vst [vmem:[%s166 + $0x38] sm:$0xff] %v5175
        %v5184 = vld [vmem:[%s4173 + $0x8] sm:$0xcc]
        %v5185 = vld [vmem:[%s4173 + $0x18] sm:$0xcc]
        %v5186 = vld [vmem:[%s4173 + $0x28] sm:$0xcc]
        %v5187 = vld [vmem:[%s4173 + $0x38] sm:$0xcc]
        %v5188 = vld [vmem:[%s4173 + $0x108] sm:$0xcc]
        %v5189 = vld [vmem:[%s4173 + $0x118] sm:$0xcc]
        %v5190 = vld [vmem:[%s4173 + $0x128] sm:$0xcc]
        %v5191 = vld [vmem:[%s4173 + $0x138] sm:$0xcc]
        %v5192 = vld [vmem:[%s4173 + $0x208] sm:$0xcc]
        %v5193 = vld [vmem:[%s4173 + $0x218] sm:$0xcc]
        %v5194 = vld [vmem:[%s4173 + $0x228] sm:$0xcc]
        %v5195 = vld [vmem:[%s4173 + $0x238] sm:$0xcc]
        %v5196 = vld [vmem:[%s4173 + $0x308] sm:$0xcc]
        %v5197 = vld [vmem:[%s4173 + $0x318] sm:$0xcc]
        %v5198 = vld [vmem:[%s4173 + $0x328] sm:$0xcc]
        %v5199 = vld [vmem:[%s4173 + $0x338] sm:$0xcc]
        %5201 = vst.sshfl [vmem:[#allocation1] sm:$0xff pattern:$0x75643120] %v5184
        %s5202 = scalar_lea.vmem [#allocation1], 1
        %v5203 = vld [vmem:[%s5202] ss:$2 sm:$0xff]
        %5205 = vst.sshfl [vmem:[#allocation1 + $0x10] sm:$0xff pattern:$0x75643120] %v5185
        %s5206 = scalar_lea.vmem [#allocation1], 17
        %v5207 = vld [vmem:[%s5206] ss:$2 sm:$0xff]
        %5209 = vst.sshfl [vmem:[#allocation1 + $0x20] sm:$0xff pattern:$0x75643120] %v5186
        %s5210 = scalar_lea.vmem [#allocation1], 33
        %v5211 = vld [vmem:[%s5210] ss:$2 sm:$0xff]
        %5213 = vst.sshfl [vmem:[#allocation1 + $0x30] sm:$0xff pattern:$0x75643120] %v5187
        %s5214 = scalar_lea.vmem [#allocation1], 49
        %v5215 = vld [vmem:[%s5214] ss:$2 sm:$0xff]
        %5217 = vst.sshfl [vmem:[#allocation1] sm:$0xff pattern:$0x75643120] %v5188
        %v5218 = vld [vmem:[%s5202] ss:$2 sm:$0xff]
        %5220 = vst.sshfl [vmem:[#allocation1 + $0x10] sm:$0xff pattern:$0x75643120] %v5189
        %v5221 = vld [vmem:[%s5206] ss:$2 sm:$0xff]
        %5223 = vst.sshfl [vmem:[#allocation1 + $0x20] sm:$0xff pattern:$0x75643120] %v5190
        %v5224 = vld [vmem:[%s5210] ss:$2 sm:$0xff]
        %5226 = vst.sshfl [vmem:[#allocation1 + $0x30] sm:$0xff pattern:$0x75643120] %v5191
        %v5227 = vld [vmem:[%s5214] ss:$2 sm:$0xff]
        %5229 = vst.sshfl [vmem:[#allocation1] sm:$0xff pattern:$0x75643120] %v5192
        %v5230 = vld [vmem:[%s5202] ss:$2 sm:$0xff]
        %5232 = vst.sshfl [vmem:[#allocation1 + $0x10] sm:$0xff pattern:$0x75643120] %v5193
        %v5233 = vld [vmem:[%s5206] ss:$2 sm:$0xff]
        %5235 = vst.sshfl [vmem:[#allocation1 + $0x20] sm:$0xff pattern:$0x75643120] %v5194
        %v5236 = vld [vmem:[%s5210] ss:$2 sm:$0xff]
        %5238 = vst.sshfl [vmem:[#allocation1 + $0x30] sm:$0xff pattern:$0x75643120] %v5195
        %v5239 = vld [vmem:[%s5214] ss:$2 sm:$0xff]
        %5241 = vst.sshfl [vmem:[#allocation1] sm:$0xff pattern:$0x75643120] %v5196
        %v5242 = vld [vmem:[%s5202] ss:$2 sm:$0xff]
        %5244 = vst.sshfl [vmem:[#allocation1 + $0x10] sm:$0xff pattern:$0x75643120] %v5197
        %v5245 = vld [vmem:[%s5206] ss:$2 sm:$0xff]
        %5247 = vst.sshfl [vmem:[#allocation1 + $0x20] sm:$0xff pattern:$0x75643120] %v5198
        %v5248 = vld [vmem:[%s5210] ss:$2 sm:$0xff]
        %5250 = vst.sshfl [vmem:[#allocation1 + $0x30] sm:$0xff pattern:$0x75643120] %v5199
        %v5251 = vld [vmem:[%s5214] ss:$2 sm:$0xff]
        %v5252 = vld [vmem:[%s166] sm:$0xff]
        %v5253 = vld [vmem:[%s166 + $0x8] sm:$0xff]
        %v5254 = vld [vmem:[%s166 + $0x10] sm:$0xff]
        %v5255 = vld [vmem:[%s166 + $0x18] sm:$0xff]
        %v5256 = vld [vmem:[%s166 + $0x20] sm:$0xff]
        %v5257 = vld [vmem:[%s166 + $0x28] sm:$0xff]
        %v5258 = vld [vmem:[%s166 + $0x30] sm:$0xff]
        %v5259 = vld [vmem:[%s166 + $0x38] sm:$0xff]
        %s5260 = scalar_lea.vmem %s1, 1920
        %v5261 = vld [vmem:[%s5260] sm:$0xf]
        %v5262 = vld [vmem:[%s5260 + $0x4] sm:$0xf]
        %v5263 = vld [vmem:[%s5260 + $0x8] sm:$0xf]
        %v5264 = vld [vmem:[%s5260 + $0xc] sm:$0xf]
        %v5265 = vld [vmem:[%s5260 + $0x10] sm:$0xf]
        %v5266 = vld [vmem:[%s5260 + $0x14] sm:$0xf]
        %v5267 = vld [vmem:[%s5260 + $0x18] sm:$0xf]
        %v5268 = vld [vmem:[%s5260 + $0x1c] sm:$0xf]
        %v5269 = vld [vmem:[%s5260 + $0x20] sm:$0xf]
        %v5270 = vld [vmem:[%s5260 + $0x24] sm:$0xf]
        %v5271 = vld [vmem:[%s5260 + $0x28] sm:$0xf]
        %v5272 = vld [vmem:[%s5260 + $0x2c] sm:$0xf]
        %v5273 = vld [vmem:[%s5260 + $0x30] sm:$0xf]
        %v5274 = vld [vmem:[%s5260 + $0x34] sm:$0xf]
        %v5275 = vld [vmem:[%s5260 + $0x38] sm:$0xf]
        %v5276 = vld [vmem:[%s5260 + $0x3c] sm:$0xf]
        %v5277 = vld [vmem:[%s5260 + $0x40] sm:$0xf]
        %v5278 = vld [vmem:[%s5260 + $0x44] sm:$0xf]
        %v5279 = vld [vmem:[%s5260 + $0x48] sm:$0xf]
        %v5280 = vld [vmem:[%s5260 + $0x4c] sm:$0xf]
        %v5281 = vld [vmem:[%s5260 + $0x50] sm:$0xf]
        %v5282 = vld [vmem:[%s5260 + $0x54] sm:$0xf]
        %v5283 = vld [vmem:[%s5260 + $0x58] sm:$0xf]
        %v5284 = vld [vmem:[%s5260 + $0x5c] sm:$0xf]
        %v5285 = vld [vmem:[%s5260 + $0x60] sm:$0xf]
        %v5286 = vld [vmem:[%s5260 + $0x64] sm:$0xf]
        %v5287 = vld [vmem:[%s5260 + $0x68] sm:$0xf]
        %v5288 = vld [vmem:[%s5260 + $0x6c] sm:$0xf]
        %v5289 = vld [vmem:[%s5260 + $0x70] sm:$0xf]
        %v5290 = vld [vmem:[%s5260 + $0x74] sm:$0xf]
        %v5291 = vld [vmem:[%s5260 + $0x78] sm:$0xf]
        %v5292 = vld [vmem:[%s5260 + $0x7c] sm:$0xf]
        %5293 = vst [vmem:[#allocation1] ss:$4 sm:$0xff] %v5203
        %s5294 = scalar_lea.vmem [#allocation1], 1
        %5295 = vst [vmem:[%s5294] ss:$4 sm:$0xff] %v5207
        %s5296 = scalar_lea.vmem [#allocation1], 2
        %5297 = vst [vmem:[%s5296] ss:$4 sm:$0xff] %v5211
        %s5298 = scalar_lea.vmem [#allocation1], 3
        %5299 = vst [vmem:[%s5298] ss:$4 sm:$0xff] %v5215
        %s5300 = scalar_lea.vmem [#allocation1], 32
        %5301 = vst [vmem:[%s5300] ss:$4 sm:$0xff] %v5218
        %s5302 = scalar_lea.vmem [#allocation1], 33
        %5303 = vst [vmem:[%s5302] ss:$4 sm:$0xff] %v5221
        %s5304 = scalar_lea.vmem [#allocation1], 34
        %5305 = vst [vmem:[%s5304] ss:$4 sm:$0xff] %v5224
        %s5306 = scalar_lea.vmem [#allocation1], 35
        %5307 = vst [vmem:[%s5306] ss:$4 sm:$0xff] %v5227
        %v5308 = vld.sshfl [vmem:[#allocation1] sm:$0xff pattern:$0x73625140]
        %v5309 = vld.sshfl [vmem:[#allocation1 + $0x8] sm:$0xff pattern:$0x73625140]
        %v5310 = vld.sshfl [vmem:[#allocation1 + $0x20] sm:$0xff pattern:$0x73625140]
        %v5311 = vld.sshfl [vmem:[#allocation1 + $0x28] sm:$0xff pattern:$0x73625140]
        %5312 = vst [vmem:[#allocation1] ss:$4 sm:$0xff] %v5230
        %5313 = vst [vmem:[%s5294] ss:$4 sm:$0xff] %v5233
        %5314 = vst [vmem:[%s5296] ss:$4 sm:$0xff] %v5236
        %5315 = vst [vmem:[%s5298] ss:$4 sm:$0xff] %v5239
        %5316 = vst [vmem:[%s5300] ss:$4 sm:$0xff] %v5242
        %5317 = vst [vmem:[%s5302] ss:$4 sm:$0xff] %v5245
        %5318 = vst [vmem:[%s5304] ss:$4 sm:$0xff] %v5248
        %5319 = vst [vmem:[%s5306] ss:$4 sm:$0xff] %v5251
        %v5320 = vld.sshfl [vmem:[#allocation1] sm:$0xff pattern:$0x73625140]
        %v5321 = vld.sshfl [vmem:[#allocation1 + $0x8] sm:$0xff pattern:$0x73625140]
        %v5322 = vld.sshfl [vmem:[#allocation1 + $0x20] sm:$0xff pattern:$0x73625140]
        %v5323 = vld.sshfl [vmem:[#allocation1 + $0x28] sm:$0xff pattern:$0x73625140]
        %v5364 = vunpack.c.l.b16 %v5261
        %v5365 = vunpack.c.l.b16 %v5262
        %v5366 = vunpack.c.l.b16 %v5263
        %v5367 = vunpack.c.l.b16 %v5264
        %v5368 = vunpack.c.l.b16 %v5265
        %v5369 = vunpack.c.l.b16 %v5266
        %v5370 = vunpack.c.l.b16 %v5267
        %v5371 = vunpack.c.l.b16 %v5268
        %v5372 = vunpack.c.l.b16 %v5269
        %v5373 = vunpack.c.l.b16 %v5270
        %v5374 = vunpack.c.l.b16 %v5271
        %v5375 = vunpack.c.l.b16 %v5272
        %v5376 = vunpack.c.l.b16 %v5273
        %v5377 = vunpack.c.l.b16 %v5274
        %v5378 = vunpack.c.l.b16 %v5275
        %v5379 = vunpack.c.l.b16 %v5276
        %v5380 = vunpack.c.l.b16 %v5277
        %v5381 = vunpack.c.l.b16 %v5278
        %v5382 = vunpack.c.l.b16 %v5279
        %v5383 = vunpack.c.l.b16 %v5280
        %v5384 = vunpack.c.l.b16 %v5281
        %v5385 = vunpack.c.l.b16 %v5282
        %v5386 = vunpack.c.l.b16 %v5283
        %v5387 = vunpack.c.l.b16 %v5284
        %v5388 = vunpack.c.l.b16 %v5285
        %v5389 = vunpack.c.l.b16 %v5286
        %v5390 = vunpack.c.l.b16 %v5287
        %v5391 = vunpack.c.l.b16 %v5288
        %v5392 = vunpack.c.l.b16 %v5289
        %v5393 = vunpack.c.l.b16 %v5290
        %v5394 = vunpack.c.l.b16 %v5291
        %v5395 = vunpack.c.l.b16 %v5292
        %v5396 = vpack.c.b16 %v5365, %v5364
        %v5397 = vpack.c.b16 %v5367, %v5366
        %v5398 = vpack.c.b16 %v5369, %v5368
        %v5399 = vpack.c.b16 %v5371, %v5370
        %v5400 = vpack.c.b16 %v5373, %v5372
        %v5401 = vpack.c.b16 %v5375, %v5374
        %v5402 = vpack.c.b16 %v5377, %v5376
        %v5403 = vpack.c.b16 %v5379, %v5378
        %v5404 = vpack.c.b16 %v5381, %v5380
        %v5405 = vpack.c.b16 %v5383, %v5382
        %v5406 = vpack.c.b16 %v5385, %v5384
        %v5407 = vpack.c.b16 %v5387, %v5386
        %v5408 = vpack.c.b16 %v5389, %v5388
        %v5409 = vpack.c.b16 %v5391, %v5390
        %v5410 = vpack.c.b16 %v5393, %v5392
        %v5411 = vpack.c.b16 %v5395, %v5394
        %5428 = vmatpush.bf16.msra.mxu0 %v5403
        %5429 = vmatpush.bf16.msra.mxu0 %v5402
        %5430 = vmatpush.bf16.msra.mxu0 %v5401
        %5431 = vmatpush.bf16.msra.mxu0 %v5400
        %5432 = vmatpush.bf16.msra.mxu0 %v5399
        %5433 = vmatpush.bf16.msra.mxu0 %v5398
        %5434 = vmatpush.bf16.msra.mxu0 %v5397
        %5435 = vmatpush.bf16.msra.mxu0 %v5396
        %5436 = vmatmul.bf16.gmra.mxu0 %v5308
        %v5437 = vpop.f32.mrf.mxu0
        %v5438 = vadd.f32 0.0, %v5437
        %v5439 = vpop.f32.mrf.mxu0
        %v5440 = vadd.f32 0.0, %v5439
        %5441 = vmatmul.bf16.gmra.mxu0 %v5310
        %v5442 = vpop.f32.mrf.mxu0
        %v5443 = vadd.f32 0.0, %v5442
        %v5444 = vpop.f32.mrf.mxu0
        %v5445 = vadd.f32 0.0, %v5444
        %5446 = vmatmul.bf16.gmra.mxu0 %v5320
        %v5447 = vpop.f32.mrf.mxu0
        %v5448 = vadd.f32 0.0, %v5447
        %v5449 = vpop.f32.mrf.mxu0
        %v5450 = vadd.f32 0.0, %v5449
        %5451 = vmatmul.bf16.gmra.mxu0 %v5322
        %v5452 = vpop.f32.mrf.mxu0
        %v5453 = vadd.f32 0.0, %v5452
        %v5454 = vpop.f32.mrf.mxu0
        %v5455 = vadd.f32 0.0, %v5454
        %5456 = vdwg.mxu0
        %5457 = vmatpush.bf16.msra.mxu0 %v5411
        %5458 = vmatpush.bf16.msra.mxu0 %v5410
        %5459 = vmatpush.bf16.msra.mxu0 %v5409
        %5460 = vmatpush.bf16.msra.mxu0 %v5408
        %5461 = vmatpush.bf16.msra.mxu0 %v5407
        %5462 = vmatpush.bf16.msra.mxu0 %v5406
        %5463 = vmatpush.bf16.msra.mxu0 %v5405
        %5464 = vmatpush.bf16.msra.mxu0 %v5404
        %5465 = vmatmul.bf16.gmra.mxu0 %v5309
        %v5466 = vpop.f32.mrf.mxu0
        %v5467 = vadd.f32 %v5438, %v5466
        %v5468 = vpop.f32.mrf.mxu0
        %v5469 = vadd.f32 %v5440, %v5468
        %5470 = vmatmul.bf16.gmra.mxu0 %v5311
        %v5471 = vpop.f32.mrf.mxu0
        %v5472 = vadd.f32 %v5443, %v5471
        %v5473 = vpop.f32.mrf.mxu0
        %v5474 = vadd.f32 %v5445, %v5473
        %5475 = vmatmul.bf16.gmra.mxu0 %v5321
        %v5476 = vpop.f32.mrf.mxu0
        %v5477 = vadd.f32 %v5448, %v5476
        %v5478 = vpop.f32.mrf.mxu0
        %v5479 = vadd.f32 %v5450, %v5478
        %5480 = vmatmul.bf16.gmra.mxu0 %v5323
        %v5481 = vpop.f32.mrf.mxu0
        %v5482 = vadd.f32 %v5453, %v5481
        %v5483 = vpop.f32.mrf.mxu0
        %v5484 = vadd.f32 %v5455, %v5483
        %5485 = vdwg.mxu0
        %v5486 = vadd.f32 %v5252, %v5467
        %v5487 = vadd.f32 %v5253, %v5469
        %v5488 = vadd.f32 %v5254, %v5472
        %v5489 = vadd.f32 %v5255, %v5474
        %v5490 = vadd.f32 %v5256, %v5477
        %v5491 = vadd.f32 %v5257, %v5479
        %v5492 = vadd.f32 %v5258, %v5482
        %v5493 = vadd.f32 %v5259, %v5484
        %5494 = vst [vmem:[%s166] sm:$0xff] %v5486
        %5495 = vst [vmem:[%s166 + $0x8] sm:$0xff] %v5487
        %5496 = vst [vmem:[%s166 + $0x10] sm:$0xff] %v5488
        %5497 = vst [vmem:[%s166 + $0x18] sm:$0xff] %v5489
        %5498 = vst [vmem:[%s166 + $0x20] sm:$0xff] %v5490
        %5499 = vst [vmem:[%s166 + $0x28] sm:$0xff] %v5491
        %5500 = vst [vmem:[%s166 + $0x30] sm:$0xff] %v5492
        %5501 = vst [vmem:[%s166 + $0x38] sm:$0xff] %v5493
        %v5502 = vld [vmem:[%s166] sm:$0xff]
        %v5503 = vld [vmem:[%s166 + $0x8] sm:$0xff]
        %v5504 = vld [vmem:[%s166 + $0x10] sm:$0xff]
        %v5505 = vld [vmem:[%s166 + $0x18] sm:$0xff]
        %v5506 = vld [vmem:[%s166 + $0x20] sm:$0xff]
        %v5507 = vld [vmem:[%s166 + $0x28] sm:$0xff]
        %v5508 = vld [vmem:[%s166 + $0x30] sm:$0xff]
        %v5509 = vld [vmem:[%s166 + $0x38] sm:$0xff]
        %v5510 = vmax.f32 %v5502, 0.0
        %v5511 = vmax.f32 %v5503, 0.0
        %v5512 = vmax.f32 %v5504, 0.0
        %v5513 = vmax.f32 %v5505, 0.0
        %v5514 = vmax.f32 %v5506, 0.0
        %v5515 = vmax.f32 %v5507, 0.0
        %v5516 = vmax.f32 %v5508, 0.0
        %v5517 = vmax.f32 %v5509, 0.0
        %5518 = vst [vmem:[%s166] sm:$0xff] %v5510
        %5519 = vst [vmem:[%s166 + $0x8] sm:$0xff] %v5511
        %5520 = vst [vmem:[%s166 + $0x10] sm:$0xff] %v5512
        %5521 = vst [vmem:[%s166 + $0x18] sm:$0xff] %v5513
        %5522 = vst [vmem:[%s166 + $0x20] sm:$0xff] %v5514
        %5523 = vst [vmem:[%s166 + $0x28] sm:$0xff] %v5515
        %5524 = vst [vmem:[%s166 + $0x30] sm:$0xff] %v5516
        %5525 = vst [vmem:[%s166 + $0x38] sm:$0xff] %v5517
        %s5526 = sand.u32 %s93, 1
        %s5527 = scalar_lea.sflag [#allocation3], %s5526
        %s5528 = sand.u32 %s93, 1
        %s5529 = smul.addr %s5528, 64
        %s5530 = scalar_lea.vmem [#allocation2], %s5529
        // Predicated region
        $region33: #{td_layer.1} parent=31 // pred_check
          %p5531 = pneg %p103
        $region34: #{td_layer.1} parent=31 // pred_check_branch
          %5533 = sbr.rel (%p5531) target = $region36
        $region35: #{td_layer.1} parent=31 // pred_region
          %s5534 = smul.u32 8, %s17
          %5536 = vsyncadd %s5527, 0
          %s5537 = smul.addr %s5534, 8
          %s5538 = scalar_lea.hbm %s3, %s5537
          %s5539 = sshll.u32 %s5530, 4
          %s5540 = int_to_ptr.vmem [resolvable:$true] %s5539
          %s5541 = sshll.u32 %s5538, 4
          %s5542 = int_to_ptr.hbm [resolvable:$true] %s5541
          %5547 = dma.vmem_to_hbm [thread:$0]  %s5540, 1024, %s5542, %s5527, 128, 128, 8
        $region36: #{td_layer.1} parent=31 // pred_fallthru
          _
      $region32: #{td_layer.1} parent=5 // pred_fallthru
        _
      %p5548 = scmp.le.s32.totalorder 2, %s12
      // Predicated region
      $region37: #{td_layer.1} parent=5 // pred_check
        %p5549 = pneg %p5548
      $region38: #{td_layer.1} parent=5 // pred_check_branch
        %5551 = sbr.rel (%p5549) target = $region40
      $region39: #{td_layer.1} parent=5 // pred_region
        %s5552 = ssub.s32 %s12, 2
        // Predicated region
        $region41: #{td_layer.1} parent=39 // pred_check
          %p5553 = pneg %p109
        $region42: #{td_layer.1} parent=39 // pred_check_branch
          %5555 = sbr.rel (%p5553) target = $region44
        $region43: #{td_layer.1} parent=39 // pred_region
          %s5556 = sand.u32 %s94, 1
          %s5557 = scalar_lea.sflag [#allocation3], %s5556
          %s5558 = sand.u32 %s94, 1
          %s5559 = smul.addr %s5558, 64
          %s5560 = scalar_lea.vmem [#allocation2], %s5559
          %5562 = dma.done %s5557, 1024
        $region44: #{td_layer.1} parent=39 // pred_fallthru
          _
      $region40: #{td_layer.1} parent=5 // pred_fallthru
        _
    $region6: #{td_layer.1} parent=1 // loop_footer
      %s16 = sadd.s32 1, %s12
    $region7: #{td_layer.1} parent=1 // loop_footer_branch
      %11 = sbr.rel target = $region3
    $region8: #{td_layer.1} parent=1 // loop_exit
      _
    %5563 = vsyncpa [#allocation3], 1
    %s5564 = scalar_lea.sflag [#allocation3], 1
    %5565 = vsyncpa %s5564, 1

</llo_original>
